<compile_context>
chip_gen: v5e
topology: v5e:2x2
jax: 0.10.0
libtpu: 0.0.40
codegen_flags: <defaults>
</compile_context>

<pallas_src>
import functools

import jax
import jax.numpy as jnp
from jax import lax
from jax.experimental import pallas as pl
from jax.experimental.pallas import tpu as pltpu

_MAX_TILE_ROWS = 256          # row tile for row-parallel kernels (multiple of 8)
_MAX_T_CHUNK = 64             # timesteps per GRU grid step
_VMEM_LIMIT = 48 * 1024 * 1024   # <= physical on v5e/v6e (128M) and v7x (64M)
_LN_EPS = 1e-5


def _round_up(x, m):
    return ((x + m - 1) // m) * m


def _full_spec(shape):
    """Whole-array block, same tile for every grid step (weights / biases)."""
    nd = len(shape)
    return pl.BlockSpec(shape, lambda *_, _nd=nd: (0,) * _nd)


def _pad_axis0(x, n):
    if x.shape[0] == n:
        return x
    pad = [(0, n - x.shape[0])] + [(0, 0)] * (x.ndim - 1)
    return jnp.pad(x, pad)


# ----------------------------------------------------------------------------
# In-kernel helpers
# ----------------------------------------------------------------------------
def _linear_rows(h, w_ref, b_ref):
    w = w_ref[...]
    if w.shape[0] == 1:   # in_size == 1: broadcast instead of a K=1 MXU matmul
        y = h.astype(jnp.float32) * w.astype(jnp.float32)
    else:                 # bf16 operands, f32 accumulation on the MXU
        y = jnp.dot(h.astype(jnp.bfloat16), w, preferred_element_type=jnp.float32)
    return y + b_ref[...]


def _layernorm_relu(y, g_ref, be_ref):
    # One-pass statistics: E[x], E[x^2]  (halves the XLU reductions per layer)
    mu = jnp.mean(y, axis=-1, keepdims=True)
    var = jnp.maximum(jnp.mean(y * y, axis=-1, keepdims=True) - mu * mu, 0.0)
    y = (y - mu) * lax.rsqrt(var + _LN_EPS)
    y = y * g_ref[...] + be_ref[...]
    return jnp.maximum(y, 0.0)


def _mlp3(h, prefs):
    """3 x [Linear -> LayerNorm -> ReLU]; prefs is a flat tuple of 12 refs."""
    for i in range(3):
        w, b, g, be = prefs[4 * i: 4 * i + 4]
        h = _layernorm_relu(_linear_rows(h, w, b), g, be)
    return h


# ----------------------------------------------------------------------------
# Kernel 1: fused input MLPs + GRU input projection (row-parallel)
# ----------------------------------------------------------------------------
def _front_kernel(*refs):
    # ref layout:
    #   [0] f0 (tile,1)  [1] loudness (tile,1)  [2] z (tile,Z)
    #   [3:15] f0_mlp    [15:27] loudness_mlp   [27:39] z_mlp
    #   [39] wih (3 gates, 3 sources, H, H) bf16   [40] bih (3,1,H) f32
    #   outputs: [41] gi_r  [42] gi_z  [43] gi_n  (each (tile,H) f32)
    #            [44] skip (2, tile, H) bf16 = [y_f0, y_loudness]
    f0_ref, ld_ref, z_ref = refs[0:3]
    mlp_f0 = refs[3:15]
    mlp_ld = refs[15:27]
    mlp_z = refs[27:39]
    wih_ref, bih_ref = refs[39:41]
    gi_refs = refs[41:44]
    skip_ref = refs[44]

    y_f0 = _mlp3(f0_ref[...], mlp_f0)
    y_ld = _mlp3(ld_ref[...], mlp_ld)
    y_z = _mlp3(z_ref[...], mlp_z)

    srcs = (y_f0.astype(jnp.bfloat16),
            y_ld.astype(jnp.bfloat16),
            y_z.astype(jnp.bfloat16))
    skip_ref[0] = srcs[0]
    skip_ref[1] = srcs[1]

    for g in range(3):                     # gates r, z, n (gate-major, lane-aligned)
        gi = bih_ref[g]                    # (1, H) broadcasts over rows
        for s in range(3):                 # sources y_f0, y_loudness, y_z
            gi = gi + jnp.dot(srcs[s], wih_ref[g, s],
                              preferred_element_type=jnp.float32)
        gi_refs[g][...] = gi


def front_pallas(f0_rows, ld_rows, z_rows, p, tile):
    n_pad = f0_rows.shape[0]
    z_dim = z_rows.shape[1]
    hidden = p["hidden"]
    weights = (list(p["f0_mlp"]) + list(p["ld_mlp"]) + list(p["z_mlp"])
               + [p["wih"], p["bih"]])

    def row_spec(f):
        return pl.BlockSpec((tile, f), lambda r: (r, 0))

    in_specs = ([row_spec(1), row_spec(1), row_spec(z_dim)]
                + [_full_spec(a.shape) for a in weights])
    gi_shape = jax.ShapeDtypeStruct((n_pad, hidden), jnp.float32)
    out_shape = (gi_shape, gi_shape, gi_shape,
                 jax.ShapeDtypeStruct((2, n_pad, hidden), jnp.bfloat16))
    gi_spec = pl.BlockSpec((tile, hidden), lambda r: (r, 0))
    out_specs = (gi_spec, gi_spec, gi_spec,
                 pl.BlockSpec((2, tile, hidden), lambda r: (0, r, 0)))
    return pl.pallas_call(
        _front_kernel,
        out_shape=out_shape,
        grid=(n_pad // tile,),
        in_specs=in_specs,
        out_specs=out_specs,
        compiler_params=pltpu.CompilerParams(
            dimension_semantics=("parallel",),
            vmem_limit_bytes=_VMEM_LIMIT),
    )(f0_rows, ld_rows, z_rows, *weights)


# ----------------------------------------------------------------------------
# Kernel 2: GRU recurrence, time-chunked grid, only hh-matmuls in the loop
# ----------------------------------------------------------------------------
def _gru_kernel(gi_r_ref, gi_z_ref, gi_n_ref, whh_ref, bhh_n_ref,
                y_ref, h_scratch):
    c = pl.program_id(0)
    t_chunk = y_ref.shape[0]

    @pl.when(c == 0)
    def _():
        h_scratch[...] = jnp.zeros_like(h_scratch)

    whh_r = whh_ref[0]
    whh_z = whh_ref[1]
    whh_n = whh_ref[2]
    bhh_n = bhh_n_ref[...]

    def step(t, h):
        hb = h.astype(jnp.bfloat16)
        # b_hr / b_hz are pre-folded into gi_r / gi_z by pack_params.
        gh_r = jnp.dot(hb, whh_r, preferred_element_type=jnp.float32)
        gh_z = jnp.dot(hb, whh_z, preferred_element_type=jnp.float32)
        gh_n = jnp.dot(hb, whh_n, preferred_element_type=jnp.float32) + bhh_n
        r = jax.nn.sigmoid(gi_r_ref[t] + gh_r)
        zg = jax.nn.sigmoid(gi_z_ref[t] + gh_z)
        n = jnp.tanh(gi_n_ref[t] + r * gh_n)
        h_new = n + zg * (h - n)           # == (1-z)*n + z*h, one fewer VALU op
        y_ref[t] = h_new
        return h_new

    h_scratch[...] = lax.fori_loop(0, t_chunk, step, h_scratch[...])


def gru_pallas(gi_r, gi_z, gi_n, whh, bhh_n, t_chunk):
    t_pad, batch, hidden = gi_r.shape
    gi_spec = pl.BlockSpec((t_chunk, batch, hidden), lambda c: (c, 0, 0))
    return pl.pallas_call(
        _gru_kernel,
        out_shape=jax.ShapeDtypeStruct((t_pad, batch, hidden), jnp.float32),
        grid=(t_pad // t_chunk,),
        in_specs=[gi_spec, gi_spec, gi_spec,
                  _full_spec(whh.shape), _full_spec(bhh_n.shape)],
        out_specs=pl.BlockSpec((t_chunk, batch, hidden), lambda c: (c, 0, 0)),
        scratch_shapes=[pltpu.VMEM((batch, hidden), jnp.float32)],
        compiler_params=pltpu.CompilerParams(
            dimension_semantics=("arbitrary",),
            vmem_limit_bytes=_VMEM_LIMIT),
    )(gi_r, gi_z, gi_n, whh, bhh_n)


# ----------------------------------------------------------------------------
# Kernel 3: final_mlp (source-split first layer) + fused sigmoid output heads
# ----------------------------------------------------------------------------
def _tail_kernel(gru_ref, skip_ref,
                 w1_ref, b1_ref, g1_ref, be1_ref,
                 w2_ref, b2_ref, g2_ref, be2_ref,
                 w3_ref, b3_ref, g3_ref, be3_ref,
                 wh_ref, bh_ref, o_ref):
    g_in = gru_ref[...].astype(jnp.bfloat16)
    f_in = skip_ref[0]                      # already bf16
    l_in = skip_ref[1]
    # final_mlp layer 1 on [gru_out | y_f0 | y_ld] without materializing the concat
    y = (jnp.dot(g_in, w1_ref[0], preferred_element_type=jnp.float32)
         + jnp.dot(f_in, w1_ref[1], preferred_element_type=jnp.float32)
         + jnp.dot(l_in, w1_ref[2], preferred_element_type=jnp.float32)
         + b1_ref[...])
    y = _layernorm_relu(y, g1_ref, be1_ref)
    y = _layernorm_relu(_linear_rows(y, w2_ref, b2_ref), g2_ref, be2_ref)
    y = _layernorm_relu(_linear_rows(y, w3_ref, b3_ref), g3_ref, be3_ref)
    # fused output heads (H_out | amp_out), lane-padded to a multiple of 128
    z = jnp.dot(y.astype(jnp.bfloat16), wh_ref[...],
                preferred_element_type=jnp.float32) + bh_ref[...]
    o_ref[...] = jax.nn.sigmoid(z)


def tail_pallas(gru_rows, skip, p, tile):
    n_pad, hidden = gru_rows.shape
    out_pad = p["w_head"].shape[1]
    weights = list(p["final_mlp"]) + [p["w_head"], p["b_head"]]
    in_specs = ([pl.BlockSpec((tile, hidden), lambda r: (r, 0)),
                 pl.BlockSpec((2, tile, hidden), lambda r: (0, r, 0))]
                + [_full_spec(a.shape) for a in weights])
    return pl.pallas_call(
        _tail_kernel,
        out_shape=jax.ShapeDtypeStruct((n_pad, out_pad), jnp.float32),
        grid=(n_pad // tile,),
        in_specs=in_specs,
        out_specs=pl.BlockSpec((tile, out_pad), lambda r: (r, 0)),
        compiler_params=pltpu.CompilerParams(
            dimension_semantics=("parallel",),
            vmem_limit_bytes=_VMEM_LIMIT),
    )(gru_rows, skip, *weights)


# ----------------------------------------------------------------------------
# Parameter init (deterministic, synthetic) + packing into kernel layout
# ----------------------------------------------------------------------------
def _init_linear(key, in_dim, out_dim, scale=0.08):
    kw, kb = jax.random.split(key)
    w = jax.random.normal(kw, (in_dim, out_dim), jnp.float32) * scale
    b = jax.random.normal(kb, (1, out_dim), jnp.float32) * 0.01
    return w, b


def _init_mlp(key, in_dim, hidden):
    layers = []
    d_in = in_dim
    for _ in range(3):
        key, sub = jax.random.split(key)
        w, b = _init_linear(sub, d_in, hidden)
        g = jnp.ones((1, hidden), jnp.float32)
        be = jnp.zeros((1, hidden), jnp.float32)
        layers.append((w, b, g, be))
        d_in = hidden
    return layers


def _init_gru(key, in_dim, hidden):
    k1, k2, k3, k4 = jax.random.split(key, 4)
    wih = jax.random.normal(k1, (in_dim, 3 * hidden), jnp.float32) * 0.08
    whh = jax.random.normal(k2, (hidden, 3 * hidden), jnp.float32) * 0.08
    bih = jax.random.normal(k3, (1, 3 * hidden), jnp.float32) * 0.01
    bhh = jax.random.normal(k4, (1, 3 * hidden), jnp.float32) * 0.01
    return (wih, whh, bih, bhh)


def init_params(key, rnn_channels, z_size, n_oscillators, filter_size):
    ks = jax.random.split(key, 7)
    return {
        "f0_mlp": _init_mlp(ks[0], 1, rnn_channels),
        "loudness_mlp": _init_mlp(ks[1], 1, rnn_channels),
        "z_mlp": _init_mlp(ks[2], z_size, rnn_channels),
        "gru": _init_gru(ks[3], rnn_channels * 3, rnn_channels),
        "final_mlp": _init_mlp(ks[4], rnn_channels * 3, rnn_channels),
        "H_out": _init_linear(ks[5], rnn_channels, filter_size // 2 + 1),
        "amp_out": _init_linear(ks[6], rnn_channels, n_oscillators),
    }


def pack_params(params):
    """Repack f32 params into the kernel layout: bf16 matmul weights,
    gate-major GRU weights (b_hr/b_hz folded into b_ih), source-split
    final_mlp W1, fused & 128-padded output heads."""
    def pack_mlp(layers):
        flat = []
        for (w, b, g, be) in layers:
            flat += [w.astype(jnp.bfloat16), b, g, be]
        return flat

    wih, whh, bih, bhh = params["gru"]
    hidden = whh.shape[0]
    # gate order (r, z, n) along 3H; source order (f0, loudness, z) along 3H_in
    wih_p = wih.reshape(3, hidden, 3, hidden).transpose(2, 0, 1, 3).astype(jnp.bfloat16)
    whh_p = whh.reshape(hidden, 3, hidden).transpose(1, 0, 2).astype(jnp.bfloat16)
    bih_p = bih.reshape(3, 1, hidden)
    bhh_p = bhh.reshape(3, 1, hidden)
    # fold b_hr, b_hz into the input-projection bias (legal: they never meet r*)
    bih_fold = jnp.concatenate([bih_p[:2] + bhh_p[:2], bih_p[2:]], axis=0)
    bhh_n = bhh_p[2]                                   # (1, H) stays in the loop

    (w1, b1, g1, be1), l2, l3 = params["final_mlp"]
    w1_split = w1.reshape(3, hidden, hidden).astype(jnp.bfloat16)   # (gru|f0|ld, H, H)
    final_flat = [w1_split, b1, g1, be1] + pack_mlp([l2, l3])

    hw, hb = params["H_out"]
    aw, ab = params["amp_out"]
    n_filter = hw.shape[1]
    n_osc = aw.shape[1]
    w_head = jnp.concatenate([hw, aw], axis=1)
    b_head = jnp.concatenate([hb, ab], axis=1)
    out_pad = _round_up(w_head.shape[1], 128)
    pad = out_pad - w_head.shape[1]
    w_head = jnp.pad(w_head, ((0, 0), (0, pad))).astype(jnp.bfloat16)
    b_head = jnp.pad(b_head, ((0, 0), (0, pad)))

    return {
        "hidden": hidden,
        "n_filter": n_filter,
        "n_osc": n_osc,
        "f0_mlp": pack_mlp(params["f0_mlp"]),
        "ld_mlp": pack_mlp(params["loudness_mlp"]),
        "z_mlp": pack_mlp(params["z_mlp"]),
        "wih": wih_p, "bih": bih_fold,
        "whh": whh_p, "bhh_n": bhh_n,
        "final_mlp": final_flat,
        "w_head": w_head, "b_head": b_head,
    }


# ----------------------------------------------------------------------------
# Full DDSPDecoder forward
# ----------------------------------------------------------------------------
def ddsp_decoder_forward(f0, loudness, z, packed):
    # f0, loudness: (B, T, 1) -> permuted to (T, B, 1); z: (T, B, z_size)
    batch, t_len, _ = f0.shape
    hidden = packed["hidden"]
    n_rows = t_len * batch

    f0_rows = jnp.transpose(f0, (1, 0, 2)).reshape(n_rows, 1)
    ld_rows = jnp.transpose(loudness, (1, 0, 2)).reshape(n_rows, 1)
    z_rows = z.reshape(n_rows, -1)

    tile = min(_MAX_TILE_ROWS, _round_up(n_rows, 8))
    n_pad = _round_up(n_rows, tile)
    f0_rows = _pad_axis0(f0_rows, n_pad)
    ld_rows = _pad_axis0(ld_rows, n_pad)
    z_rows = _pad_axis0(z_rows, n_pad)

    gi_r, gi_z, gi_n, skip = front_pallas(f0_rows, ld_rows, z_rows, packed, tile)

    # GRU recurrence over time chunks
    t_chunk = min(_MAX_T_CHUNK, t_len)
    t_pad = _round_up(t_len, t_chunk)

    def to_time(a):
        a = a[:n_rows].reshape(t_len, batch, hidden)
        return _pad_axis0(a, t_pad)

    gru_out = gru_pallas(to_time(gi_r), to_time(gi_z), to_time(gi_n),
                         packed["whh"], packed["bhh_n"], t_chunk)
    gru_rows = _pad_axis0(gru_out[:t_len].reshape(n_rows, hidden), n_pad)

    head = tail_pallas(gru_rows, skip, packed, tile)[:n_rows]

    n_filter = packed["n_filter"]
    n_osc = packed["n_osc"]
    h_frames = head[:, :n_filter].reshape(t_len, batch, n_filter)
    amp_frames = head[:, n_filter:n_filter + n_osc].reshape(t_len, batch, n_osc)

    # .permute(1, 2, 0): (T, B, C) -> (B, C, T)
    amp = jnp.transpose(amp_frames, (1, 2, 0))
    h_tf = jnp.transpose(h_frames, (1, 2, 0))
    return amp, h_tf


# ----------------------------------------------------------------------------
# Pure-JAX reference (mirrors the PyTorch module) for a sanity check
# ----------------------------------------------------------------------------
def reference_forward(f0, loudness, z, params):
    def mlp(x, layers):
        for (w, b, g, be) in layers:
            y = x @ w + b
            mu = jnp.mean(y, -1, keepdims=True)
            var = jnp.mean((y - mu) ** 2, -1, keepdims=True)
            y = (y - mu) * lax.rsqrt(var + _LN_EPS) * g + be
            x = jnp.maximum(y, 0.0)
        return x

    y_f0 = mlp(jnp.transpose(f0, (1, 0, 2)), params["f0_mlp"])
    y_ld = mlp(jnp.transpose(loudness, (1, 0, 2)), params["loudness_mlp"])
    y_z = mlp(z, params["z_mlp"])
    x = jnp.concatenate([y_f0, y_ld, y_z], -1)

    wih, whh, bih, bhh = params["gru"]
    hdim = whh.shape[0]
    gi = x @ wih + bih

    def step(h, gi_t):
        gh = h @ whh + bhh
        r = jax.nn.sigmoid(gi_t[:, :hdim] + gh[:, :hdim])
        zg = jax.nn.sigmoid(gi_t[:, hdim:2 * hdim] + gh[:, hdim:2 * hdim])
        n = jnp.tanh(gi_t[:, 2 * hdim:] + r * gh[:, 2 * hdim:])
        h = (1.0 - zg) * n + zg * h
        return h, h

    h0 = jnp.zeros((x.shape[1], hdim), jnp.float32)
    _, ys = lax.scan(step, h0, gi)

    y = jnp.concatenate([ys, y_f0, y_ld], -1)
    y = mlp(y, params["final_mlp"])
    hw, hb = params["H_out"]
    aw, ab = params["amp_out"]
    h_tf = jax.nn.sigmoid(y @ hw + hb)
    amp = jax.nn.sigmoid(y @ aw + ab)
    return jnp.transpose(amp, (1, 2, 0)), jnp.transpose(h_tf, (1, 2, 0))


if __name__ == "__main__":
    # Small shapes consistent with the module (scaled down from 512/101/256).
    B, T = 2, 8
    RNN_CHANNELS = 32
    Z_SIZE = 16
    N_OSCILLATORS = 16
    FILTER_SIZE = 32          # -> H output dim = FILTER_SIZE // 2 + 1 = 17

    key = jax.random.PRNGKey(0)
    kf, kl, kz = jax.random.split(key, 3)
    f0 = jax.random.uniform(kf, (B, T, 1), jnp.float32, 50.0, 500.0)
    loudness = jax.random.normal(kl, (B, T, 1), jnp.float32)
    z = jax.random.normal(kz, (T, B, Z_SIZE), jnp.float32)

    params = init_params(jax.random.PRNGKey(42),
                         RNN_CHANNELS, Z_SIZE, N_OSCILLATORS, FILTER_SIZE)
    packed = pack_params(params)

    fwd = jax.jit(functools.partial(ddsp_decoder_forward, packed=packed))
    amp, H_tf = fwd(f0, loudness, z)
    jax.block_until_ready((amp, H_tf))

    assert amp.shape == (B, N_OSCILLATORS, T), amp.shape
    assert H_tf.shape == (B, FILTER_SIZE // 2 + 1, T), H_tf.shape
    assert bool(jnp.all(jnp.isfinite(amp))) and bool(jnp.all(jnp.isfinite(H_tf)))
    assert bool(jnp.all((amp >= 0) & (amp <= 1)))
    assert bool(jnp.all((H_tf >= 0) & (H_tf <= 1)))

    # Numerical sanity check vs a pure-JAX reference (bf16 matmuls in the
    # kernels -> generous tolerance).
    amp_ref, H_ref = jax.jit(functools.partial(reference_forward,
                                               params=params))(f0, loudness, z)
    assert bool(jnp.allclose(amp, amp_ref, atol=5e-2, rtol=0.0))
    assert bool(jnp.allclose(H_tf, H_ref, atol=5e-2, rtol=0.0))

    print("KERNEL_OK")
</pallas_src>

<mosaic_0001>
module attributes {stable_mosaic.version = 11 : i64} {
  func.func @_gru_kernel(%arg0: i32, %arg1: memref<8x2x32xf32, #tpu.memory_space<vmem>>, %arg2: memref<8x2x32xf32, #tpu.memory_space<vmem>>, %arg3: memref<8x2x32xf32, #tpu.memory_space<vmem>>, %arg4: memref<3x32x32xbf16, #tpu.memory_space<vmem>>, %arg5: memref<1x32xf32, #tpu.memory_space<vmem>>, %arg6: memref<8x2x32xf32, #tpu.memory_space<vmem>>, %arg7: memref<2x32xf32, #tpu.memory_space<vmem>>) attributes {dimension_semantics = [#tpu.dimension_semantics<arbitrary>], iteration_bounds = array<i64: 1>, scalar_prefetch = 0 : i64, scratch_operands = 1 : i64, tpu.core_type = #tpu.core_type<tc>, window_params = [{transform_indices = @transform_0, window_bounds = array<i64: 8, 2, 32>}, {transform_indices = @transform_1, window_bounds = array<i64: 8, 2, 32>}, {transform_indices = @transform_2, window_bounds = array<i64: 8, 2, 32>}, {pipeline_mode = #tpu.pipeline_mode<synchronous>, transform_indices = @transform_3, window_bounds = array<i64: 3, 32, 32>}, {pipeline_mode = #tpu.pipeline_mode<synchronous>, transform_indices = @transform_4, window_bounds = array<i64: 1, 32>}, {transform_indices = @transform_5, window_bounds = array<i64: 8, 2, 32>}]} {
    %c0_i32 = arith.constant 0 : i32
    %0 = arith.cmpi eq, %arg0, %c0_i32 : i32
    %1 = arith.extui %0 : i1 to i32
    %c0_i32_0 = arith.constant 0 : i32
    %2 = arith.cmpi ne, %1, %c0_i32_0 : i32
    scf.if %2 {
      %cst = arith.constant 0.000000e+00 : f32
      %14 = vector.broadcast %cst : f32 to vector<2x32xf32>
      %c0_15 = arith.constant 0 : index
      %c0_16 = arith.constant 0 : index
      %15 = vector.load %arg7[%c0_15, %c0_16] : memref<2x32xf32, #tpu.memory_space<vmem>>, vector<2x32xf32>
      tpu.vector_store %arg7[%c0_15, %c0_16], %14 {strides = array<i32>} : memref<2x32xf32, #tpu.memory_space<vmem>>, vector<2x32xf32>,
    } else {
    }
    %c0 = arith.constant 0 : index
    %c0_1 = arith.constant 0 : index
    %c0_2 = arith.constant 0 : index
    %3 = vector.load %arg4[%c0, %c0_1, %c0_2] : memref<3x32x32xbf16, #tpu.memory_space<vmem>>, vector<1x32x32xbf16>
    %4 = vector.shape_cast %3 : vector<1x32x32xbf16> to vector<32x32xbf16>
    %c1 = arith.constant 1 : index
    %c0_3 = arith.constant 0 : index
    %c0_4 = arith.constant 0 : index
    %5 = vector.load %arg4[%c1, %c0_3, %c0_4] : memref<3x32x32xbf16, #tpu.memory_space<vmem>>, vector<1x32x32xbf16>
    %6 = vector.shape_cast %5 : vector<1x32x32xbf16> to vector<32x32xbf16>
    %c2 = arith.constant 2 : index
    %c0_5 = arith.constant 0 : index
    %c0_6 = arith.constant 0 : index
    %7 = vector.load %arg4[%c2, %c0_5, %c0_6] : memref<3x32x32xbf16, #tpu.memory_space<vmem>>, vector<1x32x32xbf16>
    %8 = vector.shape_cast %7 : vector<1x32x32xbf16> to vector<32x32xbf16>
    %c0_7 = arith.constant 0 : index
    %c0_8 = arith.constant 0 : index
    %9 = vector.load %arg5[%c0_7, %c0_8] : memref<1x32xf32, #tpu.memory_space<vmem>>, vector<1x32xf32>
    %c0_9 = arith.constant 0 : index
    %c0_10 = arith.constant 0 : index
    %10 = vector.load %arg7[%c0_9, %c0_10] : memref<2x32xf32, #tpu.memory_space<vmem>>, vector<2x32xf32>
    %c0_i32_11 = arith.constant 0 : i32
    %c8_i32 = arith.constant 8 : i32
    %11 = arith.addi %c0_i32_11, %c8_i32 : i32
    %c1_i32 = arith.constant 1 : i32
    %12 = scf.for %arg8 = %c0_i32_11 to %11 step %c1_i32 iter_args(%arg9 = %10) -> (vector<2x32xf32>)  : i32 {
      %14 = arith.truncf %arg9 : vector<2x32xf32> to vector<2x32xbf16>
      %cst = arith.constant dense<0.000000e+00> : vector<2x32xf32>
      %15 = tpu.matmul %14, %4, %cst {dimension_numbers = #tpu.dot_dimension_numbers<[1], [0], [0], [1], [0, 0, 1, 1], [], []>} : vector<2x32xbf16>, vector<32x32xbf16>, vector<2x32xf32> -> vector<2x32xf32>
      %cst_15 = arith.constant dense<0.000000e+00> : vector<2x32xf32>
      %16 = tpu.matmul %14, %6, %cst_15 {dimension_numbers = #tpu.dot_dimension_numbers<[1], [0], [0], [1], [0, 0, 1, 1], [], []>} : vector<2x32xbf16>, vector<32x32xbf16>, vector<2x32xf32> -> vector<2x32xf32>
      %cst_16 = arith.constant dense<0.000000e+00> : vector<2x32xf32>
      %17 = tpu.matmul %14, %8, %cst_16 {dimension_numbers = #tpu.dot_dimension_numbers<[1], [0], [0], [1], [0, 0, 1, 1], [], []>} : vector<2x32xbf16>, vector<32x32xbf16>, vector<2x32xf32> -> vector<2x32xf32>
      %18 = vector.broadcast %9 : vector<1x32xf32> to vector<2x32xf32>
      %19 = arith.addf %17, %18 : vector<2x32xf32>
      %20 = arith.index_cast %arg8 : i32 to index
      %c0_17 = arith.constant 0 : index
      %c0_18 = arith.constant 0 : index
      %21 = vector.load %arg1[%20, %c0_17, %c0_18] : memref<8x2x32xf32, #tpu.memory_space<vmem>>, vector<1x2x32xf32>
      %22 = vector.shape_cast %21 : vector<1x2x32xf32> to vector<2x32xf32>
      %23 = arith.addf %22, %15 : vector<2x32xf32>
      %24 = arith.negf %23 : vector<2x32xf32>
      %25 = math.exp %24 : vector<2x32xf32>
      %cst_19 = arith.constant 1.000000e+00 : f32
      %26 = vector.broadcast %cst_19 : f32 to vector<2x32xf32>
      %27 = arith.addf %26, %25 : vector<2x32xf32>
      %28 = arith.divf %26, %27 : vector<2x32xf32>
      %29 = arith.index_cast %arg8 : i32 to index
      %c0_20 = arith.constant 0 : index
      %c0_21 = arith.constant 0 : index
      %30 = vector.load %arg2[%29, %c0_20, %c0_21] : memref<8x2x32xf32, #tpu.memory_space<vmem>>, vector<1x2x32xf32>
      %31 = vector.shape_cast %30 : vector<1x2x32xf32> to vector<2x32xf32>
      %32 = arith.addf %31, %16 : vector<2x32xf32>
      %33 = arith.negf %32 : vector<2x32xf32>
      %34 = math.exp %33 : vector<2x32xf32>
      %cst_22 = arith.constant 1.000000e+00 : f32
      %35 = vector.broadcast %cst_22 : f32 to vector<2x32xf32>
      %36 = arith.addf %35, %34 : vector<2x32xf32>
      %37 = arith.divf %35, %36 : vector<2x32xf32>
      %38 = arith.index_cast %arg8 : i32 to index
      %c0_23 = arith.constant 0 : index
      %c0_24 = arith.constant 0 : index
      %39 = vector.load %arg3[%38, %c0_23, %c0_24] : memref<8x2x32xf32, #tpu.memory_space<vmem>>, vector<1x2x32xf32>
      %40 = vector.shape_cast %39 : vector<1x2x32xf32> to vector<2x32xf32>
      %41 = arith.mulf %28, %19 : vector<2x32xf32>
      %42 = arith.addf %40, %41 : vector<2x32xf32>
      %43 = math.tanh %42 : vector<2x32xf32>
      %44 = arith.subf %arg9, %43 : vector<2x32xf32>
      %45 = arith.mulf %37, %44 : vector<2x32xf32>
      %46 = arith.addf %43, %45 : vector<2x32xf32>
      %47 = arith.index_cast %arg8 : i32 to index
      %c0_25 = arith.constant 0 : index
      %c0_26 = arith.constant 0 : index
      %48 = vector.load %arg6[%47, %c0_25, %c0_26] : memref<8x2x32xf32, #tpu.memory_space<vmem>>, vector<1x2x32xf32>
      %49 = vector.shape_cast %48 : vector<1x2x32xf32> to vector<2x32xf32>
      %50 = vector.shape_cast %46 : vector<2x32xf32> to vector<1x2x32xf32>
      tpu.vector_store %arg6[%47, %c0_25, %c0_26], %50 {strides = array<i32>} : memref<8x2x32xf32, #tpu.memory_space<vmem>>, vector<1x2x32xf32>,
      scf.yield %46 : vector<2x32xf32>
    }
    %c8_i32_12 = arith.constant 8 : i32
    %c0_13 = arith.constant 0 : index
    %c0_14 = arith.constant 0 : index
    %13 = vector.load %arg7[%c0_13, %c0_14] : memref<2x32xf32, #tpu.memory_space<vmem>>, vector<2x32xf32>
    tpu.vector_store %arg7[%c0_13, %c0_14], %12 {strides = array<i32>} : memref<2x32xf32, #tpu.memory_space<vmem>>, vector<2x32xf32>,
    return
  }
  func.func @transform_0(%arg0: i32) -> (i32, i32, i32) {
    %c0_i32 = arith.constant 0 : i32
    %c0_i32_0 = arith.constant 0 : i32
    %c0_i32_1 = arith.constant 0 : i32
    return %arg0, %c0_i32, %c0_i32_0 : i32, i32, i32
  }
  func.func @transform_1(%arg0: i32) -> (i32, i32, i32) {
    %c0_i32 = arith.constant 0 : i32
    %c0_i32_0 = arith.constant 0 : i32
    %c0_i32_1 = arith.constant 0 : i32
    return %arg0, %c0_i32, %c0_i32_0 : i32, i32, i32
  }
  func.func @transform_2(%arg0: i32) -> (i32, i32, i32) {
    %c0_i32 = arith.constant 0 : i32
    %c0_i32_0 = arith.constant 0 : i32
    %c0_i32_1 = arith.constant 0 : i32
    return %arg0, %c0_i32, %c0_i32_0 : i32, i32, i32
  }
  func.func @transform_3(%arg0: i32) -> (i32, i32, i32) {
    %c0_i32 = arith.constant 0 : i32
    %c0_i32_0 = arith.constant 0 : i32
    %c0_i32_1 = arith.constant 0 : i32
    %c0_i32_2 = arith.constant 0 : i32
    return %c0_i32, %c0_i32_0, %c0_i32_1 : i32, i32, i32
  }
  func.func @transform_4(%arg0: i32) -> (i32, i32) {
    %c0_i32 = arith.constant 0 : i32
    %c0_i32_0 = arith.constant 0 : i32
    %c0_i32_1 = arith.constant 0 : i32
    return %c0_i32, %c0_i32_0 : i32, i32
  }
  func.func @transform_5(%arg0: i32) -> (i32, i32, i32) {
    %c0_i32 = arith.constant 0 : i32
    %c0_i32_0 = arith.constant 0 : i32
    %c0_i32_1 = arith.constant 0 : i32
    return %arg0, %c0_i32, %c0_i32_0 : i32, i32, i32
  }
}

module attributes {stable_mosaic.version = 11 : i64} {
  func.func @_front_kernel(%arg0: i32, %arg1: memref<16x1xf32, #tpu.memory_space<vmem>>, %arg2: memref<16x1xf32, #tpu.memory_space<vmem>>, %arg3: memref<16x16xf32, #tpu.memory_space<vmem>>, %arg4: memref<1x32xbf16, #tpu.memory_space<vmem>>, %arg5: memref<1x32xf32, #tpu.memory_space<vmem>>, %arg6: memref<1x32xf32, #tpu.memory_space<vmem>>, %arg7: memref<1x32xf32, #tpu.memory_space<vmem>>, %arg8: memref<32x32xbf16, #tpu.memory_space<vmem>>, %arg9: memref<1x32xf32, #tpu.memory_space<vmem>>, %arg10: memref<1x32xf32, #tpu.memory_space<vmem>>, %arg11: memref<1x32xf32, #tpu.memory_space<vmem>>, %arg12: memref<32x32xbf16, #tpu.memory_space<vmem>>, %arg13: memref<1x32xf32, #tpu.memory_space<vmem>>, %arg14: memref<1x32xf32, #tpu.memory_space<vmem>>, %arg15: memref<1x32xf32, #tpu.memory_space<vmem>>, %arg16: memref<1x32xbf16, #tpu.memory_space<vmem>>, %arg17: memref<1x32xf32, #tpu.memory_space<vmem>>, %arg18: memref<1x32xf32, #tpu.memory_space<vmem>>, %arg19: memref<1x32xf32, #tpu.memory_space<vmem>>, %arg20: memref<32x32xbf16, #tpu.memory_space<vmem>>, %arg21: memref<1x32xf32, #tpu.memory_space<vmem>>, %arg22: memref<1x32xf32, #tpu.memory_space<vmem>>, %arg23: memref<1x32xf32, #tpu.memory_space<vmem>>, %arg24: memref<32x32xbf16, #tpu.memory_space<vmem>>, %arg25: memref<1x32xf32, #tpu.memory_space<vmem>>, %arg26: memref<1x32xf32, #tpu.memory_space<vmem>>, %arg27: memref<1x32xf32, #tpu.memory_space<vmem>>, %arg28: memref<16x32xbf16, #tpu.memory_space<vmem>>, %arg29: memref<1x32xf32, #tpu.memory_space<vmem>>, %arg30: memref<1x32xf32, #tpu.memory_space<vmem>>, %arg31: memref<1x32xf32, #tpu.memory_space<vmem>>, %arg32: memref<32x32xbf16, #tpu.memory_space<vmem>>, %arg33: memref<1x32xf32, #tpu.memory_space<vmem>>, %arg34: memref<1x32xf32, #tpu.memory_space<vmem>>, %arg35: memref<1x32xf32, #tpu.memory_space<vmem>>, %arg36: memref<32x32xbf16, #tpu.memory_space<vmem>>, %arg37: memref<1x32xf32, #tpu.memory_space<vmem>>, %arg38: memref<1x32xf32, #tpu.memory_space<vmem>>, %arg39: memref<1x32xf32, #tpu.memory_space<vmem>>, %arg40: memref<3x3x32x32xbf16, #tpu.memory_space<vmem>>, %arg41: memref<3x1x32xf32, #tpu.memory_space<vmem>>, %arg42: memref<16x32xf32, #tpu.memory_space<vmem>>, %arg43: memref<16x32xf32, #tpu.memory_space<vmem>>, %arg44: memref<16x32xf32, #tpu.memory_space<vmem>>, %arg45: memref<2x16x32xbf16, #tpu.memory_space<vmem>>) attributes {dimension_semantics = [#tpu.dimension_semantics<parallel>], iteration_bounds = array<i64: 1>, scalar_prefetch = 0 : i64, scratch_operands = 0 : i64, tpu.core_type = #tpu.core_type<tc>, window_params = [{transform_indices = @transform_0, window_bounds = array<i64: 16, 1>}, {transform_indices = @transform_1, window_bounds = array<i64: 16, 1>}, {transform_indices = @transform_2, window_bounds = array<i64: 16, 16>}, {pipeline_mode = #tpu.pipeline_mode<synchronous>, transform_indices = @transform_3, window_bounds = array<i64: 1, 32>}, {pipeline_mode = #tpu.pipeline_mode<synchronous>, transform_indices = @transform_4, window_bounds = array<i64: 1, 32>}, {pipeline_mode = #tpu.pipeline_mode<synchronous>, transform_indices = @transform_5, window_bounds = array<i64: 1, 32>}, {pipeline_mode = #tpu.pipeline_mode<synchronous>, transform_indices = @transform_6, window_bounds = array<i64: 1, 32>}, {pipeline_mode = #tpu.pipeline_mode<synchronous>, transform_indices = @transform_7, window_bounds = array<i64: 32, 32>}, {pipeline_mode = #tpu.pipeline_mode<synchronous>, transform_indices = @transform_8, window_bounds = array<i64: 1, 32>}, {pipeline_mode = #tpu.pipeline_mode<synchronous>, transform_indices = @transform_9, window_bounds = array<i64: 1, 32>}, {pipeline_mode = #tpu.pipeline_mode<synchronous>, transform_indices = @transform_10, window_bounds = array<i64: 1, 32>}, {pipeline_mode = #tpu.pipeline_mode<synchronous>, transform_indices = @transform_11, window_bounds = array<i64: 32, 32>}, {pipeline_mode = #tpu.pipeline_mode<synchronous>, transform_indices = @transform_12, window_bounds = array<i64: 1, 32>}, {pipeline_mode = #tpu.pipeline_mode<synchronous>, transform_indices = @transform_13, window_bounds = array<i64: 1, 32>}, {pipeline_mode = #tpu.pipeline_mode<synchronous>, transform_indices = @transform_14, window_bounds = array<i64: 1, 32>}, {pipeline_mode = #tpu.pipeline_mode<synchronous>, transform_indices = @transform_15, window_bounds = array<i64: 1, 32>}, {pipeline_mode = #tpu.pipeline_mode<synchronous>, transform_indices = @transform_16, window_bounds = array<i64: 1, 32>}, {pipeline_mode = #tpu.pipeline_mode<synchronous>, transform_indices = @transform_17, window_bounds = array<i64: 1, 32>}, {pipeline_mode = #tpu.pipeline_mode<synchronous>, transform_indices = @transform_18, window_bounds = array<i64: 1, 32>}, {pipeline_mode = #tpu.pipeline_mode<synchronous>, transform_indices = @transform_19, window_bounds = array<i64: 32, 32>}, {pipeline_mode = #tpu.pipeline_mode<synchronous>, transform_indices = @transform_20, window_bounds = array<i64: 1, 32>}, {pipeline_mode = #tpu.pipeline_mode<synchronous>, transform_indices = @transform_21, window_bounds = array<i64: 1, 32>}, {pipeline_mode = #tpu.pipeline_mode<synchronous>, transform_indices = @transform_22, window_bounds = array<i64: 1, 32>}, {pipeline_mode = #tpu.pipeline_mode<synchronous>, transform_indices = @transform_23, window_bounds = array<i64: 32, 32>}, {pipeline_mode = #tpu.pipeline_mode<synchronous>, transform_indices = @transform_24, window_bounds = array<i64: 1, 32>}, {pipeline_mode = #tpu.pipeline_mode<synchronous>, transform_indices = @transform_25, window_bounds = array<i64: 1, 32>}, {pipeline_mode = #tpu.pipeline_mode<synchronous>, transform_indices = @transform_26, window_bounds = array<i64: 1, 32>}, {pipeline_mode = #tpu.pipeline_mode<synchronous>, transform_indices = @transform_27, window_bounds = array<i64: 16, 32>}, {pipeline_mode = #tpu.pipeline_mode<synchronous>, transform_indices = @transform_28, window_bounds = array<i64: 1, 32>}, {pipeline_mode = #tpu.pipeline_mode<synchronous>, transform_indices = @transform_29, window_bounds = array<i64: 1, 32>}, {pipeline_mode = #tpu.pipeline_mode<synchronous>, transform_indices = @transform_30, window_bounds = array<i64: 1, 32>}, {pipeline_mode = #tpu.pipeline_mode<synchronous>, transform_indices = @transform_31, window_bounds = array<i64: 32, 32>}, {pipeline_mode = #tpu.pipeline_mode<synchronous>, transform_indices = @transform_32, window_bounds = array<i64: 1, 32>}, {pipeline_mode = #tpu.pipeline_mode<synchronous>, transform_indices = @transform_33, window_bounds = array<i64: 1, 32>}, {pipeline_mode = #tpu.pipeline_mode<synchronous>, transform_indices = @transform_34, window_bounds = array<i64: 1, 32>}, {pipeline_mode = #tpu.pipeline_mode<synchronous>, transform_indices = @transform_35, window_bounds = array<i64: 32, 32>}, {pipeline_mode = #tpu.pipeline_mode<synchronous>, transform_indices = @transform_36, window_bounds = array<i64: 1, 32>}, {pipeline_mode = #tpu.pipeline_mode<synchronous>, transform_indices = @transform_37, window_bounds = array<i64: 1, 32>}, {pipeline_mode = #tpu.pipeline_mode<synchronous>, transform_indices = @transform_38, window_bounds = array<i64: 1, 32>}, {pipeline_mode = #tpu.pipeline_mode<synchronous>, transform_indices = @transform_39, window_bounds = array<i64: 3, 3, 32, 32>}, {pipeline_mode = #tpu.pipeline_mode<synchronous>, transform_indices = @transform_40, window_bounds = array<i64: 3, 1, 32>}, {transform_indices = @transform_41, window_bounds = array<i64: 16, 32>}, {transform_indices = @transform_42, window_bounds = array<i64: 16, 32>}, {transform_indices = @transform_43, window_bounds = array<i64: 16, 32>}, {transform_indices = @transform_44, window_bounds = array<i64: 2, 16, 32>}]} {
    %c0 = arith.constant 0 : index
    %c0_0 = arith.constant 0 : index
    %0 = vector.load %arg1[%c0, %c0_0] : memref<16x1xf32, #tpu.memory_space<vmem>>, vector<16x1xf32>
    %c0_1 = arith.constant 0 : index
    %c0_2 = arith.constant 0 : index
    %1 = vector.load %arg4[%c0_1, %c0_2] : memref<1x32xbf16, #tpu.memory_space<vmem>>, vector<1x32xbf16>
    %2 = arith.extf %1 : vector<1x32xbf16> to vector<1x32xf32>
    %3 = vector.broadcast %0 : vector<16x1xf32> to vector<16x32xf32>
    %4 = vector.broadcast %2 : vector<1x32xf32> to vector<16x32xf32>
    %5 = arith.mulf %3, %4 : vector<16x32xf32>
    %c0_3 = arith.constant 0 : index
    %c0_4 = arith.constant 0 : index
    %6 = vector.load %arg5[%c0_3, %c0_4] : memref<1x32xf32, #tpu.memory_space<vmem>>, vector<1x32xf32>
    %7 = vector.broadcast %6 : vector<1x32xf32> to vector<16x32xf32>
    %8 = arith.addf %5, %7 : vector<16x32xf32>
    %cst = arith.constant dense<0.000000e+00> : vector<16xf32>
    %9 = vector.multi_reduction <add>, %8, %cst [1] : vector<16x32xf32> to vector<16xf32>
    %10 = vector.shape_cast %9 : vector<16xf32> to vector<16x1xf32>
    %cst_5 = arith.constant 3.200000e+01 : f32
    %11 = vector.broadcast %cst_5 : f32 to vector<16x1xf32>
    %12 = arith.divf %10, %11 : vector<16x1xf32>
    %13 = arith.mulf %8, %8 : vector<16x32xf32>
    %cst_6 = arith.constant dense<0.000000e+00> : vector<16xf32>
    %14 = vector.multi_reduction <add>, %13, %cst_6 [1] : vector<16x32xf32> to vector<16xf32>
    %15 = vector.shape_cast %14 : vector<16xf32> to vector<16x1xf32>
    %cst_7 = arith.constant 3.200000e+01 : f32
    %16 = vector.broadcast %cst_7 : f32 to vector<16x1xf32>
    %17 = arith.divf %15, %16 : vector<16x1xf32>
    %18 = arith.mulf %12, %12 : vector<16x1xf32>
    %19 = arith.subf %17, %18 : vector<16x1xf32>
    %cst_8 = arith.constant 0.000000e+00 : f32
    %20 = vector.broadcast %cst_8 : f32 to vector<16x1xf32>
    %21 = arith.maximumf %19, %20 : vector<16x1xf32>
    %22 = vector.broadcast %12 : vector<16x1xf32> to vector<16x32xf32>
    %23 = arith.subf %8, %22 : vector<16x32xf32>
    %cst_9 = arith.constant 9.99999974E-6 : f32
    %24 = vector.broadcast %cst_9 : f32 to vector<16x1xf32>
    %25 = arith.addf %21, %24 : vector<16x1xf32>
    %26 = math.rsqrt %25 : vector<16x1xf32>
    %27 = vector.broadcast %26 : vector<16x1xf32> to vector<16x32xf32>
    %28 = arith.mulf %23, %27 : vector<16x32xf32>
    %c0_10 = arith.constant 0 : index
    %c0_11 = arith.constant 0 : index
    %29 = vector.load %arg6[%c0_10, %c0_11] : memref<1x32xf32, #tpu.memory_space<vmem>>, vector<1x32xf32>
    %30 = vector.broadcast %29 : vector<1x32xf32> to vector<16x32xf32>
    %31 = arith.mulf %28, %30 : vector<16x32xf32>
    %c0_12 = arith.constant 0 : index
    %c0_13 = arith.constant 0 : index
    %32 = vector.load %arg7[%c0_12, %c0_13] : memref<1x32xf32, #tpu.memory_space<vmem>>, vector<1x32xf32>
    %33 = vector.broadcast %32 : vector<1x32xf32> to vector<16x32xf32>
    %34 = arith.addf %31, %33 : vector<16x32xf32>
    %cst_14 = arith.constant 0.000000e+00 : f32
    %35 = vector.broadcast %cst_14 : f32 to vector<16x32xf32>
    %36 = arith.maximumf %34, %35 : vector<16x32xf32>
    %c0_15 = arith.constant 0 : index
    %c0_16 = arith.constant 0 : index
    %37 = vector.load %arg8[%c0_15, %c0_16] : memref<32x32xbf16, #tpu.memory_space<vmem>>, vector<32x32xbf16>
    %38 = arith.truncf %36 : vector<16x32xf32> to vector<16x32xbf16>
    %cst_17 = arith.constant dense<0.000000e+00> : vector<16x32xf32>
    %39 = tpu.matmul %38, %37, %cst_17 {dimension_numbers = #tpu.dot_dimension_numbers<[1], [0], [0], [1], [0, 0, 1, 1], [], []>} : vector<16x32xbf16>, vector<32x32xbf16>, vector<16x32xf32> -> vector<16x32xf32>
    %c0_18 = arith.constant 0 : index
    %c0_19 = arith.constant 0 : index
    %40 = vector.load %arg9[%c0_18, %c0_19] : memref<1x32xf32, #tpu.memory_space<vmem>>, vector<1x32xf32>
    %41 = vector.broadcast %40 : vector<1x32xf32> to vector<16x32xf32>
    %42 = arith.addf %39, %41 : vector<16x32xf32>
    %cst_20 = arith.constant dense<0.000000e+00> : vector<16xf32>
    %43 = vector.multi_reduction <add>, %42, %cst_20 [1] : vector<16x32xf32> to vector<16xf32>
    %44 = vector.shape_cast %43 : vector<16xf32> to vector<16x1xf32>
    %cst_21 = arith.constant 3.200000e+01 : f32
    %45 = vector.broadcast %cst_21 : f32 to vector<16x1xf32>
    %46 = arith.divf %44, %45 : vector<16x1xf32>
    %47 = arith.mulf %42, %42 : vector<16x32xf32>
    %cst_22 = arith.constant dense<0.000000e+00> : vector<16xf32>
    %48 = vector.multi_reduction <add>, %47, %cst_22 [1] : vector<16x32xf32> to vector<16xf32>
    %49 = vector.shape_cast %48 : vector<16xf32> to vector<16x1xf32>
    %cst_23 = arith.constant 3.200000e+01 : f32
    %50 = vector.broadcast %cst_23 : f32 to vector<16x1xf32>
    %51 = arith.divf %49, %50 : vector<16x1xf32>
    %52 = arith.mulf %46, %46 : vector<16x1xf32>
    %53 = arith.subf %51, %52 : vector<16x1xf32>
    %cst_24 = arith.constant 0.000000e+00 : f32
    %54 = vector.broadcast %cst_24 : f32 to vector<16x1xf32>
    %55 = arith.maximumf %53, %54 : vector<16x1xf32>
    %56 = vector.broadcast %46 : vector<16x1xf32> to vector<16x32xf32>
    %57 = arith.subf %42, %56 : vector<16x32xf32>
    %cst_25 = arith.constant 9.99999974E-6 : f32
    %58 = vector.broadcast %cst_25 : f32 to vector<16x1xf32>
    %59 = arith.addf %55, %58 : vector<16x1xf32>
    %60 = math.rsqrt %59 : vector<16x1xf32>
    %61 = vector.broadcast %60 : vector<16x1xf32> to vector<16x32xf32>
    %62 = arith.mulf %57, %61 : vector<16x32xf32>
    %c0_26 = arith.constant 0 : index
    %c0_27 = arith.constant 0 : index
    %63 = vector.load %arg10[%c0_26, %c0_27] : memref<1x32xf32, #tpu.memory_space<vmem>>, vector<1x32xf32>
    %64 = vector.broadcast %63 : vector<1x32xf32> to vector<16x32xf32>
    %65 = arith.mulf %62, %64 : vector<16x32xf32>
    %c0_28 = arith.constant 0 : index
    %c0_29 = arith.constant 0 : index
    %66 = vector.load %arg11[%c0_28, %c0_29] : memref<1x32xf32, #tpu.memory_space<vmem>>, vector<1x32xf32>
    %67 = vector.broadcast %66 : vector<1x32xf32> to vector<16x32xf32>
    %68 = arith.addf %65, %67 : vector<16x32xf32>
    %cst_30 = arith.constant 0.000000e+00 : f32
    %69 = vector.broadcast %cst_30 : f32 to vector<16x32xf32>
    %70 = arith.maximumf %68, %69 : vector<16x32xf32>
    %c0_31 = arith.constant 0 : index
    %c0_32 = arith.constant 0 : index
    %71 = vector.load %arg12[%c0_31, %c0_32] : memref<32x32xbf16, #tpu.memory_space<vmem>>, vector<32x32xbf16>
    %72 = arith.truncf %70 : vector<16x32xf32> to vector<16x32xbf16>
    %cst_33 = arith.constant dense<0.000000e+00> : vector<16x32xf32>
    %73 = tpu.matmul %72, %71, %cst_33 {dimension_numbers = #tpu.dot_dimension_numbers<[1], [0], [0], [1], [0, 0, 1, 1], [], []>} : vector<16x32xbf16>, vector<32x32xbf16>, vector<16x32xf32> -> vector<16x32xf32>
    %c0_34 = arith.constant 0 : index
    %c0_35 = arith.constant 0 : index
    %74 = vector.load %arg13[%c0_34, %c0_35] : memref<1x32xf32, #tpu.memory_space<vmem>>, vector<1x32xf32>
    %75 = vector.broadcast %74 : vector<1x32xf32> to vector<16x32xf32>
    %76 = arith.addf %73, %75 : vector<16x32xf32>
    %cst_36 = arith.constant dense<0.000000e+00> : vector<16xf32>
    %77 = vector.multi_reduction <add>, %76, %cst_36 [1] : vector<16x32xf32> to vector<16xf32>
    %78 = vector.shape_cast %77 : vector<16xf32> to vector<16x1xf32>
    %cst_37 = arith.constant 3.200000e+01 : f32
    %79 = vector.broadcast %cst_37 : f32 to vector<16x1xf32>
    %80 = arith.divf %78, %79 : vector<16x1xf32>
    %81 = arith.mulf %76, %76 : vector<16x32xf32>
    %cst_38 = arith.constant dense<0.000000e+00> : vector<16xf32>
    %82 = vector.multi_reduction <add>, %81, %cst_38 [1] : vector<16x32xf32> to vector<16xf32>
    %83 = vector.shape_cast %82 : vector<16xf32> to vector<16x1xf32>
    %cst_39 = arith.constant 3.200000e+01 : f32
    %84 = vector.broadcast %cst_39 : f32 to vector<16x1xf32>
    %85 = arith.divf %83, %84 : vector<16x1xf32>
    %86 = arith.mulf %80, %80 : vector<16x1xf32>
    %87 = arith.subf %85, %86 : vector<16x1xf32>
    %cst_40 = arith.constant 0.000000e+00 : f32
    %88 = vector.broadcast %cst_40 : f32 to vector<16x1xf32>
    %89 = arith.maximumf %87, %88 : vector<16x1xf32>
    %90 = vector.broadcast %80 : vector<16x1xf32> to vector<16x32xf32>
    %91 = arith.subf %76, %90 : vector<16x32xf32>
    %cst_41 = arith.constant 9.99999974E-6 : f32
    %92 = vector.broadcast %cst_41 : f32 to vector<16x1xf32>
    %93 = arith.addf %89, %92 : vector<16x1xf32>
    %94 = math.rsqrt %93 : vector<16x1xf32>
    %95 = vector.broadcast %94 : vector<16x1xf32> to vector<16x32xf32>
    %96 = arith.mulf %91, %95 : vector<16x32xf32>
    %c0_42 = arith.constant 0 : index
    %c0_43 = arith.constant 0 : index
    %97 = vector.load %arg14[%c0_42, %c0_43] : memref<1x32xf32, #tpu.memory_space<vmem>>, vector<1x32xf32>
    %98 = vector.broadcast %97 : vector<1x32xf32> to vector<16x32xf32>
    %99 = arith.mulf %96, %98 : vector<16x32xf32>
    %c0_44 = arith.constant 0 : index
    %c0_45 = arith.constant 0 : index
    %100 = vector.load %arg15[%c0_44, %c0_45] : memref<1x32xf32, #tpu.memory_space<vmem>>, vector<1x32xf32>
    %101 = vector.broadcast %100 : vector<1x32xf32> to vector<16x32xf32>
    %102 = arith.addf %99, %101 : vector<16x32xf32>
    %cst_46 = arith.constant 0.000000e+00 : f32
    %103 = vector.broadcast %cst_46 : f32 to vector<16x32xf32>
    %104 = arith.maximumf %102, %103 : vector<16x32xf32>
    %c0_47 = arith.constant 0 : index
    %c0_48 = arith.constant 0 : index
    %105 = vector.load %arg2[%c0_47, %c0_48] : memref<16x1xf32, #tpu.memory_space<vmem>>, vector<16x1xf32>
    %c0_49 = arith.constant 0 : index
    %c0_50 = arith.constant 0 : index
    %106 = vector.load %arg16[%c0_49, %c0_50] : memref<1x32xbf16, #tpu.memory_space<vmem>>, vector<1x32xbf16>
    %107 = arith.extf %106 : vector<1x32xbf16> to vector<1x32xf32>
    %108 = vector.broadcast %105 : vector<16x1xf32> to vector<16x32xf32>
    %109 = vector.broadcast %107 : vector<1x32xf32> to vector<16x32xf32>
    %110 = arith.mulf %108, %109 : vector<16x32xf32>
    %c0_51 = arith.constant 0 : index
    %c0_52 = arith.constant 0 : index
    %111 = vector.load %arg17[%c0_51, %c0_52] : memref<1x32xf32, #tpu.memory_space<vmem>>, vector<1x32xf32>
    %112 = vector.broadcast %111 : vector<1x32xf32> to vector<16x32xf32>
    %113 = arith.addf %110, %112 : vector<16x32xf32>
    %cst_53 = arith.constant dense<0.000000e+00> : vector<16xf32>
    %114 = vector.multi_reduction <add>, %113, %cst_53 [1] : vector<16x32xf32> to vector<16xf32>
    %115 = vector.shape_cast %114 : vector<16xf32> to vector<16x1xf32>
    %cst_54 = arith.constant 3.200000e+01 : f32
    %116 = vector.broadcast %cst_54 : f32 to vector<16x1xf32>
    %117 = arith.divf %115, %116 : vector<16x1xf32>
    %118 = arith.mulf %113, %113 : vector<16x32xf32>
    %cst_55 = arith.constant dense<0.000000e+00> : vector<16xf32>
    %119 = vector.multi_reduction <add>, %118, %cst_55 [1] : vector<16x32xf32> to vector<16xf32>
    %120 = vector.shape_cast %119 : vector<16xf32> to vector<16x1xf32>
    %cst_56 = arith.constant 3.200000e+01 : f32
    %121 = vector.broadcast %cst_56 : f32 to vector<16x1xf32>
    %122 = arith.divf %120, %121 : vector<16x1xf32>
    %123 = arith.mulf %117, %117 : vector<16x1xf32>
    %124 = arith.subf %122, %123 : vector<16x1xf32>
    %cst_57 = arith.constant 0.000000e+00 : f32
    %125 = vector.broadcast %cst_57 : f32 to vector<16x1xf32>
    %126 = arith.maximumf %124, %125 : vector<16x1xf32>
    %127 = vector.broadcast %117 : vector<16x1xf32> to vector<16x32xf32>
    %128 = arith.subf %113, %127 : vector<16x32xf32>
    %cst_58 = arith.constant 9.99999974E-6 : f32
    %129 = vector.broadcast %cst_58 : f32 to vector<16x1xf32>
    %130 = arith.addf %126, %129 : vector<16x1xf32>
    %131 = math.rsqrt %130 : vector<16x1xf32>
    %132 = vector.broadcast %131 : vector<16x1xf32> to vector<16x32xf32>
    %133 = arith.mulf %128, %132 : vector<16x32xf32>
    %c0_59 = arith.constant 0 : index
    %c0_60 = arith.constant 0 : index
    %134 = vector.load %arg18[%c0_59, %c0_60] : memref<1x32xf32, #tpu.memory_space<vmem>>, vector<1x32xf32>
    %135 = vector.broadcast %134 : vector<1x32xf32> to vector<16x32xf32>
    %136 = arith.mulf %133, %135 : vector<16x32xf32>
    %c0_61 = arith.constant 0 : index
    %c0_62 = arith.constant 0 : index
    %137 = vector.load %arg19[%c0_61, %c0_62] : memref<1x32xf32, #tpu.memory_space<vmem>>, vector<1x32xf32>
    %138 = vector.broadcast %137 : vector<1x32xf32> to vector<16x32xf32>
    %139 = arith.addf %136, %138 : vector<16x32xf32>
    %cst_63 = arith.constant 0.000000e+00 : f32
    %140 = vector.broadcast %cst_63 : f32 to vector<16x32xf32>
    %141 = arith.maximumf %139, %140 : vector<16x32xf32>
    %c0_64 = arith.constant 0 : index
    %c0_65 = arith.constant 0 : index
    %142 = vector.load %arg20[%c0_64, %c0_65] : memref<32x32xbf16, #tpu.memory_space<vmem>>, vector<32x32xbf16>
    %143 = arith.truncf %141 : vector<16x32xf32> to vector<16x32xbf16>
    %cst_66 = arith.constant dense<0.000000e+00> : vector<16x32xf32>
    %144 = tpu.matmul %143, %142, %cst_66 {dimension_numbers = #tpu.dot_dimension_numbers<[1], [0], [0], [1], [0, 0, 1, 1], [], []>} : vector<16x32xbf16>, vector<32x32xbf16>, vector<16x32xf32> -> vector<16x32xf32>
    %c0_67 = arith.constant 0 : index
    %c0_68 = arith.constant 0 : index
    %145 = vector.load %arg21[%c0_67, %c0_68] : memref<1x32xf32, #tpu.memory_space<vmem>>, vector<1x32xf32>
    %146 = vector.broadcast %145 : vector<1x32xf32> to vector<16x32xf32>
    %147 = arith.addf %144, %146 : vector<16x32xf32>
    %cst_69 = arith.constant dense<0.000000e+00> : vector<16xf32>
    %148 = vector.multi_reduction <add>, %147, %cst_69 [1] : vector<16x32xf32> to vector<16xf32>
    %149 = vector.shape_cast %148 : vector<16xf32> to vector<16x1xf32>
    %cst_70 = arith.constant 3.200000e+01 : f32
    %150 = vector.broadcast %cst_70 : f32 to vector<16x1xf32>
    %151 = arith.divf %149, %150 : vector<16x1xf32>
    %152 = arith.mulf %147, %147 : vector<16x32xf32>
    %cst_71 = arith.constant dense<0.000000e+00> : vector<16xf32>
    %153 = vector.multi_reduction <add>, %152, %cst_71 [1] : vector<16x32xf32> to vector<16xf32>
    %154 = vector.shape_cast %153 : vector<16xf32> to vector<16x1xf32>
    %cst_72 = arith.constant 3.200000e+01 : f32
    %155 = vector.broadcast %cst_72 : f32 to vector<16x1xf32>
    %156 = arith.divf %154, %155 : vector<16x1xf32>
    %157 = arith.mulf %151, %151 : vector<16x1xf32>
    %158 = arith.subf %156, %157 : vector<16x1xf32>
    %cst_73 = arith.constant 0.000000e+00 : f32
    %159 = vector.broadcast %cst_73 : f32 to vector<16x1xf32>
    %160 = arith.maximumf %158, %159 : vector<16x1xf32>
    %161 = vector.broadcast %151 : vector<16x1xf32> to vector<16x32xf32>
    %162 = arith.subf %147, %161 : vector<16x32xf32>
    %cst_74 = arith.constant 9.99999974E-6 : f32
    %163 = vector.broadcast %cst_74 : f32 to vector<16x1xf32>
    %164 = arith.addf %160, %163 : vector<16x1xf32>
    %165 = math.rsqrt %164 : vector<16x1xf32>
    %166 = vector.broadcast %165 : vector<16x1xf32> to vector<16x32xf32>
    %167 = arith.mulf %162, %166 : vector<16x32xf32>
    %c0_75 = arith.constant 0 : index
    %c0_76 = arith.constant 0 : index
    %168 = vector.load %arg22[%c0_75, %c0_76] : memref<1x32xf32, #tpu.memory_space<vmem>>, vector<1x32xf32>
    %169 = vector.broadcast %168 : vector<1x32xf32> to vector<16x32xf32>
    %170 = arith.mulf %167, %169 : vector<16x32xf32>
    %c0_77 = arith.constant 0 : index
    %c0_78 = arith.constant 0 : index
    %171 = vector.load %arg23[%c0_77, %c0_78] : memref<1x32xf32, #tpu.memory_space<vmem>>, vector<1x32xf32>
    %172 = vector.broadcast %171 : vector<1x32xf32> to vector<16x32xf32>
    %173 = arith.addf %170, %172 : vector<16x32xf32>
    %cst_79 = arith.constant 0.000000e+00 : f32
    %174 = vector.broadcast %cst_79 : f32 to vector<16x32xf32>
    %175 = arith.maximumf %173, %174 : vector<16x32xf32>
    %c0_80 = arith.constant 0 : index
    %c0_81 = arith.constant 0 : index
    %176 = vector.load %arg24[%c0_80, %c0_81] : memref<32x32xbf16, #tpu.memory_space<vmem>>, vector<32x32xbf16>
    %177 = arith.truncf %175 : vector<16x32xf32> to vector<16x32xbf16>
    %cst_82 = arith.constant dense<0.000000e+00> : vector<16x32xf32>
    %178 = tpu.matmul %177, %176, %cst_82 {dimension_numbers = #tpu.dot_dimension_numbers<[1], [0], [0], [1], [0, 0, 1, 1], [], []>} : vector<16x32xbf16>, vector<32x32xbf16>, vector<16x32xf32> -> vector<16x32xf32>
    %c0_83 = arith.constant 0 : index
    %c0_84 = arith.constant 0 : index
    %179 = vector.load %arg25[%c0_83, %c0_84] : memref<1x32xf32, #tpu.memory_space<vmem>>, vector<1x32xf32>
    %180 = vector.broadcast %179 : vector<1x32xf32> to vector<16x32xf32>
    %181 = arith.addf %178, %180 : vector<16x32xf32>
    %cst_85 = arith.constant dense<0.000000e+00> : vector<16xf32>
    %182 = vector.multi_reduction <add>, %181, %cst_85 [1] : vector<16x32xf32> to vector<16xf32>
    %183 = vector.shape_cast %182 : vector<16xf32> to vector<16x1xf32>
    %cst_86 = arith.constant 3.200000e+01 : f32
    %184 = vector.broadcast %cst_86 : f32 to vector<16x1xf32>
    %185 = arith.divf %183, %184 : vector<16x1xf32>
    %186 = arith.mulf %181, %181 : vector<16x32xf32>
    %cst_87 = arith.constant dense<0.000000e+00> : vector<16xf32>
    %187 = vector.multi_reduction <add>, %186, %cst_87 [1] : vector<16x32xf32> to vector<16xf32>
    %188 = vector.shape_cast %187 : vector<16xf32> to vector<16x1xf32>
    %cst_88 = arith.constant 3.200000e+01 : f32
    %189 = vector.broadcast %cst_88 : f32 to vector<16x1xf32>
    %190 = arith.divf %188, %189 : vector<16x1xf32>
    %191 = arith.mulf %185, %185 : vector<16x1xf32>
    %192 = arith.subf %190, %191 : vector<16x1xf32>
    %cst_89 = arith.constant 0.000000e+00 : f32
    %193 = vector.broadcast %cst_89 : f32 to vector<16x1xf32>
    %194 = arith.maximumf %192, %193 : vector<16x1xf32>
    %195 = vector.broadcast %185 : vector<16x1xf32> to vector<16x32xf32>
    %196 = arith.subf %181, %195 : vector<16x32xf32>
    %cst_90 = arith.constant 9.99999974E-6 : f32
    %197 = vector.broadcast %cst_90 : f32 to vector<16x1xf32>
    %198 = arith.addf %194, %197 : vector<16x1xf32>
    %199 = math.rsqrt %198 : vector<16x1xf32>
    %200 = vector.broadcast %199 : vector<16x1xf32> to vector<16x32xf32>
    %201 = arith.mulf %196, %200 : vector<16x32xf32>
    %c0_91 = arith.constant 0 : index
    %c0_92 = arith.constant 0 : index
    %202 = vector.load %arg26[%c0_91, %c0_92] : memref<1x32xf32, #tpu.memory_space<vmem>>, vector<1x32xf32>
    %203 = vector.broadcast %202 : vector<1x32xf32> to vector<16x32xf32>
    %204 = arith.mulf %201, %203 : vector<16x32xf32>
    %c0_93 = arith.constant 0 : index
    %c0_94 = arith.constant 0 : index
    %205 = vector.load %arg27[%c0_93, %c0_94] : memref<1x32xf32, #tpu.memory_space<vmem>>, vector<1x32xf32>
    %206 = vector.broadcast %205 : vector<1x32xf32> to vector<16x32xf32>
    %207 = arith.addf %204, %206 : vector<16x32xf32>
    %cst_95 = arith.constant 0.000000e+00 : f32
    %208 = vector.broadcast %cst_95 : f32 to vector<16x32xf32>
    %209 = arith.maximumf %207, %208 : vector<16x32xf32>
    %c0_96 = arith.constant 0 : index
    %c0_97 = arith.constant 0 : index
    %210 = vector.load %arg3[%c0_96, %c0_97] : memref<16x16xf32, #tpu.memory_space<vmem>>, vector<16x16xf32>
    %c0_98 = arith.constant 0 : index
    %c0_99 = arith.constant 0 : index
    %211 = vector.load %arg28[%c0_98, %c0_99] : memref<16x32xbf16, #tpu.memory_space<vmem>>, vector<16x32xbf16>
    %212 = arith.truncf %210 : vector<16x16xf32> to vector<16x16xbf16>
    %cst_100 = arith.constant dense<0.000000e+00> : vector<16x32xf32>
    %213 = tpu.matmul %212, %211, %cst_100 {dimension_numbers = #tpu.dot_dimension_numbers<[1], [0], [0], [1], [0, 0, 1, 1], [], []>} : vector<16x16xbf16>, vector<16x32xbf16>, vector<16x32xf32> -> vector<16x32xf32>
    %c0_101 = arith.constant 0 : index
    %c0_102 = arith.constant 0 : index
    %214 = vector.load %arg29[%c0_101, %c0_102] : memref<1x32xf32, #tpu.memory_space<vmem>>, vector<1x32xf32>
    %215 = vector.broadcast %214 : vector<1x32xf32> to vector<16x32xf32>
    %216 = arith.addf %213, %215 : vector<16x32xf32>
    %cst_103 = arith.constant dense<0.000000e+00> : vector<16xf32>
    %217 = vector.multi_reduction <add>, %216, %cst_103 [1] : vector<16x32xf32> to vector<16xf32>
    %218 = vector.shape_cast %217 : vector<16xf32> to vector<16x1xf32>
    %cst_104 = arith.constant 3.200000e+01 : f32
    %219 = vector.broadcast %cst_104 : f32 to vector<16x1xf32>
    %220 = arith.divf %218, %219 : vector<16x1xf32>
    %221 = arith.mulf %216, %216 : vector<16x32xf32>
    %cst_105 = arith.constant dense<0.000000e+00> : vector<16xf32>
    %222 = vector.multi_reduction <add>, %221, %cst_105 [1] : vector<16x32xf32> to vector<16xf32>
    %223 = vector.shape_cast %222 : vector<16xf32> to vector<16x1xf32>
    %cst_106 = arith.constant 3.200000e+01 : f32
    %224 = vector.broadcast %cst_106 : f32 to vector<16x1xf32>
    %225 = arith.divf %223, %224 : vector<16x1xf32>
    %226 = arith.mulf %220, %220 : vector<16x1xf32>
    %227 = arith.subf %225, %226 : vector<16x1xf32>
    %cst_107 = arith.constant 0.000000e+00 : f32
    %228 = vector.broadcast %cst_107 : f32 to vector<16x1xf32>
    %229 = arith.maximumf %227, %228 : vector<16x1xf32>
    %230 = vector.broadcast %220 : vector<16x1xf32> to vector<16x32xf32>
    %231 = arith.subf %216, %230 : vector<16x32xf32>
    %cst_108 = arith.constant 9.99999974E-6 : f32
    %232 = vector.broadcast %cst_108 : f32 to vector<16x1xf32>
    %233 = arith.addf %229, %232 : vector<16x1xf32>
    %234 = math.rsqrt %233 : vector<16x1xf32>
    %235 = vector.broadcast %234 : vector<16x1xf32> to vector<16x32xf32>
    %236 = arith.mulf %231, %235 : vector<16x32xf32>
    %c0_109 = arith.constant 0 : index
    %c0_110 = arith.constant 0 : index
    %237 = vector.load %arg30[%c0_109, %c0_110] : memref<1x32xf32, #tpu.memory_space<vmem>>, vector<1x32xf32>
    %238 = vector.broadcast %237 : vector<1x32xf32> to vector<16x32xf32>
    %239 = arith.mulf %236, %238 : vector<16x32xf32>
    %c0_111 = arith.constant 0 : index
    %c0_112 = arith.constant 0 : index
    %240 = vector.load %arg31[%c0_111, %c0_112] : memref<1x32xf32, #tpu.memory_space<vmem>>, vector<1x32xf32>
    %241 = vector.broadcast %240 : vector<1x32xf32> to vector<16x32xf32>
    %242 = arith.addf %239, %241 : vector<16x32xf32>
    %cst_113 = arith.constant 0.000000e+00 : f32
    %243 = vector.broadcast %cst_113 : f32 to vector<16x32xf32>
    %244 = arith.maximumf %242, %243 : vector<16x32xf32>
    %c0_114 = arith.constant 0 : index
    %c0_115 = arith.constant 0 : index
    %245 = vector.load %arg32[%c0_114, %c0_115] : memref<32x32xbf16, #tpu.memory_space<vmem>>, vector<32x32xbf16>
    %246 = arith.truncf %244 : vector<16x32xf32> to vector<16x32xbf16>
    %cst_116 = arith.constant dense<0.000000e+00> : vector<16x32xf32>
    %247 = tpu.matmul %246, %245, %cst_116 {dimension_numbers = #tpu.dot_dimension_numbers<[1], [0], [0], [1], [0, 0, 1, 1], [], []>} : vector<16x32xbf16>, vector<32x32xbf16>, vector<16x32xf32> -> vector<16x32xf32>
    %c0_117 = arith.constant 0 : index
    %c0_118 = arith.constant 0 : index
    %248 = vector.load %arg33[%c0_117, %c0_118] : memref<1x32xf32, #tpu.memory_space<vmem>>, vector<1x32xf32>
    %249 = vector.broadcast %248 : vector<1x32xf32> to vector<16x32xf32>
    %250 = arith.addf %247, %249 : vector<16x32xf32>
    %cst_119 = arith.constant dense<0.000000e+00> : vector<16xf32>
    %251 = vector.multi_reduction <add>, %250, %cst_119 [1] : vector<16x32xf32> to vector<16xf32>
    %252 = vector.shape_cast %251 : vector<16xf32> to vector<16x1xf32>
    %cst_120 = arith.constant 3.200000e+01 : f32
    %253 = vector.broadcast %cst_120 : f32 to vector<16x1xf32>
    %254 = arith.divf %252, %253 : vector<16x1xf32>
    %255 = arith.mulf %250, %250 : vector<16x32xf32>
    %cst_121 = arith.constant dense<0.000000e+00> : vector<16xf32>
    %256 = vector.multi_reduction <add>, %255, %cst_121 [1] : vector<16x32xf32> to vector<16xf32>
    %257 = vector.shape_cast %256 : vector<16xf32> to vector<16x1xf32>
    %cst_122 = arith.constant 3.200000e+01 : f32
    %258 = vector.broadcast %cst_122 : f32 to vector<16x1xf32>
    %259 = arith.divf %257, %258 : vector<16x1xf32>
    %260 = arith.mulf %254, %254 : vector<16x1xf32>
    %261 = arith.subf %259, %260 : vector<16x1xf32>
    %cst_123 = arith.constant 0.000000e+00 : f32
    %262 = vector.broadcast %cst_123 : f32 to vector<16x1xf32>
    %263 = arith.maximumf %261, %262 : vector<16x1xf32>
    %264 = vector.broadcast %254 : vector<16x1xf32> to vector<16x32xf32>
    %265 = arith.subf %250, %264 : vector<16x32xf32>
    %cst_124 = arith.constant 9.99999974E-6 : f32
    %266 = vector.broadcast %cst_124 : f32 to vector<16x1xf32>
    %267 = arith.addf %263, %266 : vector<16x1xf32>
    %268 = math.rsqrt %267 : vector<16x1xf32>
    %269 = vector.broadcast %268 : vector<16x1xf32> to vector<16x32xf32>
    %270 = arith.mulf %265, %269 : vector<16x32xf32>
    %c0_125 = arith.constant 0 : index
    %c0_126 = arith.constant 0 : index
    %271 = vector.load %arg34[%c0_125, %c0_126] : memref<1x32xf32, #tpu.memory_space<vmem>>, vector<1x32xf32>
    %272 = vector.broadcast %271 : vector<1x32xf32> to vector<16x32xf32>
    %273 = arith.mulf %270, %272 : vector<16x32xf32>
    %c0_127 = arith.constant 0 : index
    %c0_128 = arith.constant 0 : index
    %274 = vector.load %arg35[%c0_127, %c0_128] : memref<1x32xf32, #tpu.memory_space<vmem>>, vector<1x32xf32>
    %275 = vector.broadcast %274 : vector<1x32xf32> to vector<16x32xf32>
    %276 = arith.addf %273, %275 : vector<16x32xf32>
    %cst_129 = arith.constant 0.000000e+00 : f32
    %277 = vector.broadcast %cst_129 : f32 to vector<16x32xf32>
    %278 = arith.maximumf %276, %277 : vector<16x32xf32>
    %c0_130 = arith.constant 0 : index
    %c0_131 = arith.constant 0 : index
    %279 = vector.load %arg36[%c0_130, %c0_131] : memref<32x32xbf16, #tpu.memory_space<vmem>>, vector<32x32xbf16>
    %280 = arith.truncf %278 : vector<16x32xf32> to vector<16x32xbf16>
    %cst_132 = arith.constant dense<0.000000e+00> : vector<16x32xf32>
    %281 = tpu.matmul %280, %279, %cst_132 {dimension_numbers = #tpu.dot_dimension_numbers<[1], [0], [0], [1], [0, 0, 1, 1], [], []>} : vector<16x32xbf16>, vector<32x32xbf16>, vector<16x32xf32> -> vector<16x32xf32>
    %c0_133 = arith.constant 0 : index
    %c0_134 = arith.constant 0 : index
    %282 = vector.load %arg37[%c0_133, %c0_134] : memref<1x32xf32, #tpu.memory_space<vmem>>, vector<1x32xf32>
    %283 = vector.broadcast %282 : vector<1x32xf32> to vector<16x32xf32>
    %284 = arith.addf %281, %283 : vector<16x32xf32>
    %cst_135 = arith.constant dense<0.000000e+00> : vector<16xf32>
    %285 = vector.multi_reduction <add>, %284, %cst_135 [1] : vector<16x32xf32> to vector<16xf32>
    %286 = vector.shape_cast %285 : vector<16xf32> to vector<16x1xf32>
    %cst_136 = arith.constant 3.200000e+01 : f32
    %287 = vector.broadcast %cst_136 : f32 to vector<16x1xf32>
    %288 = arith.divf %286, %287 : vector<16x1xf32>
    %289 = arith.mulf %284, %284 : vector<16x32xf32>
    %cst_137 = arith.constant dense<0.000000e+00> : vector<16xf32>
    %290 = vector.multi_reduction <add>, %289, %cst_137 [1] : vector<16x32xf32> to vector<16xf32>
    %291 = vector.shape_cast %290 : vector<16xf32> to vector<16x1xf32>
    %cst_138 = arith.constant 3.200000e+01 : f32
    %292 = vector.broadcast %cst_138 : f32 to vector<16x1xf32>
    %293 = arith.divf %291, %292 : vector<16x1xf32>
    %294 = arith.mulf %288, %288 : vector<16x1xf32>
    %295 = arith.subf %293, %294 : vector<16x1xf32>
    %cst_139 = arith.constant 0.000000e+00 : f32
    %296 = vector.broadcast %cst_139 : f32 to vector<16x1xf32>
    %297 = arith.maximumf %295, %296 : vector<16x1xf32>
    %298 = vector.broadcast %288 : vector<16x1xf32> to vector<16x32xf32>
    %299 = arith.subf %284, %298 : vector<16x32xf32>
    %cst_140 = arith.constant 9.99999974E-6 : f32
    %300 = vector.broadcast %cst_140 : f32 to vector<16x1xf32>
    %301 = arith.addf %297, %300 : vector<16x1xf32>
    %302 = math.rsqrt %301 : vector<16x1xf32>
    %303 = vector.broadcast %302 : vector<16x1xf32> to vector<16x32xf32>
    %304 = arith.mulf %299, %303 : vector<16x32xf32>
    %c0_141 = arith.constant 0 : index
    %c0_142 = arith.constant 0 : index
    %305 = vector.load %arg38[%c0_141, %c0_142] : memref<1x32xf32, #tpu.memory_space<vmem>>, vector<1x32xf32>
    %306 = vector.broadcast %305 : vector<1x32xf32> to vector<16x32xf32>
    %307 = arith.mulf %304, %306 : vector<16x32xf32>
    %c0_143 = arith.constant 0 : index
    %c0_144 = arith.constant 0 : index
    %308 = vector.load %arg39[%c0_143, %c0_144] : memref<1x32xf32, #tpu.memory_space<vmem>>, vector<1x32xf32>
    %309 = vector.broadcast %308 : vector<1x32xf32> to vector<16x32xf32>
    %310 = arith.addf %307, %309 : vector<16x32xf32>
    %cst_145 = arith.constant 0.000000e+00 : f32
    %311 = vector.broadcast %cst_145 : f32 to vector<16x32xf32>
    %312 = arith.maximumf %310, %311 : vector<16x32xf32>
    %313 = arith.truncf %104 : vector<16x32xf32> to vector<16x32xbf16>
    %314 = arith.truncf %209 : vector<16x32xf32> to vector<16x32xbf16>
    %315 = arith.truncf %312 : vector<16x32xf32> to vector<16x32xbf16>
    %c0_146 = arith.constant 0 : index
    %c0_147 = arith.constant 0 : index
    %c0_148 = arith.constant 0 : index
    %316 = vector.load %arg45[%c0_146, %c0_147, %c0_148] : memref<2x16x32xbf16, #tpu.memory_space<vmem>>, vector<1x16x32xbf16>
    %317 = vector.shape_cast %316 : vector<1x16x32xbf16> to vector<16x32xbf16>
    %318 = vector.shape_cast %313 : vector<16x32xbf16> to vector<1x16x32xbf16>
    tpu.vector_store %arg45[%c0_146, %c0_147, %c0_148], %318 {strides = array<i32>} : memref<2x16x32xbf16, #tpu.memory_space<vmem>>, vector<1x16x32xbf16>,
    %c1 = arith.constant 1 : index
    %c0_149 = arith.constant 0 : index
    %c0_150 = arith.constant 0 : index
    %319 = vector.load %arg45[%c1, %c0_149, %c0_150] : memref<2x16x32xbf16, #tpu.memory_space<vmem>>, vector<1x16x32xbf16>
    %320 = vector.shape_cast %319 : vector<1x16x32xbf16> to vector<16x32xbf16>
    %321 = vector.shape_cast %314 : vector<16x32xbf16> to vector<1x16x32xbf16>
    tpu.vector_store %arg45[%c1, %c0_149, %c0_150], %321 {strides = array<i32>} : memref<2x16x32xbf16, #tpu.memory_space<vmem>>, vector<1x16x32xbf16>,
    %c0_151 = arith.constant 0 : index
    %c0_152 = arith.constant 0 : index
    %c0_153 = arith.constant 0 : index
    %322 = vector.load %arg41[%c0_151, %c0_152, %c0_153] : memref<3x1x32xf32, #tpu.memory_space<vmem>>, vector<1x1x32xf32>
    %323 = vector.shape_cast %322 : vector<1x1x32xf32> to vector<1x32xf32>
    %c0_154 = arith.constant 0 : index
    %c0_155 = arith.constant 0 : index
    %c0_156 = arith.constant 0 : index
    %c0_157 = arith.constant 0 : index
    %324 = vector.load %arg40[%c0_154, %c0_155, %c0_156, %c0_157] : memref<3x3x32x32xbf16, #tpu.memory_space<vmem>>, vector<1x1x32x32xbf16>
    %325 = vector.shape_cast %324 : vector<1x1x32x32xbf16> to vector<32x32xbf16>
    %cst_158 = arith.constant dense<0.000000e+00> : vector<16x32xf32>
    %326 = tpu.matmul %313, %325, %cst_158 {dimension_numbers = #tpu.dot_dimension_numbers<[1], [0], [0], [1], [0, 0, 1, 1], [], []>} : vector<16x32xbf16>, vector<32x32xbf16>, vector<16x32xf32> -> vector<16x32xf32>
    %327 = vector.broadcast %323 : vector<1x32xf32> to vector<16x32xf32>
    %328 = arith.addf %327, %326 : vector<16x32xf32>
    %c0_159 = arith.constant 0 : index
    %c1_160 = arith.constant 1 : index
    %c0_161 = arith.constant 0 : index
    %c0_162 = arith.constant 0 : index
    %329 = vector.load %arg40[%c0_159, %c1_160, %c0_161, %c0_162] : memref<3x3x32x32xbf16, #tpu.memory_space<vmem>>, vector<1x1x32x32xbf16>
    %330 = vector.shape_cast %329 : vector<1x1x32x32xbf16> to vector<32x32xbf16>
    %cst_163 = arith.constant dense<0.000000e+00> : vector<16x32xf32>
    %331 = tpu.matmul %314, %330, %cst_163 {dimension_numbers = #tpu.dot_dimension_numbers<[1], [0], [0], [1], [0, 0, 1, 1], [], []>} : vector<16x32xbf16>, vector<32x32xbf16>, vector<16x32xf32> -> vector<16x32xf32>
    %332 = arith.addf %328, %331 : vector<16x32xf32>
    %c0_164 = arith.constant 0 : index
    %c2 = arith.constant 2 : index
    %c0_165 = arith.constant 0 : index
    %c0_166 = arith.constant 0 : index
    %333 = vector.load %arg40[%c0_164, %c2, %c0_165, %c0_166] : memref<3x3x32x32xbf16, #tpu.memory_space<vmem>>, vector<1x1x32x32xbf16>
    %334 = vector.shape_cast %333 : vector<1x1x32x32xbf16> to vector<32x32xbf16>
    %cst_167 = arith.constant dense<0.000000e+00> : vector<16x32xf32>
    %335 = tpu.matmul %315, %334, %cst_167 {dimension_numbers = #tpu.dot_dimension_numbers<[1], [0], [0], [1], [0, 0, 1, 1], [], []>} : vector<16x32xbf16>, vector<32x32xbf16>, vector<16x32xf32> -> vector<16x32xf32>
    %336 = arith.addf %332, %335 : vector<16x32xf32>
    %c0_168 = arith.constant 0 : index
    %c0_169 = arith.constant 0 : index
    %337 = vector.load %arg42[%c0_168, %c0_169] : memref<16x32xf32, #tpu.memory_space<vmem>>, vector<16x32xf32>
    tpu.vector_store %arg42[%c0_168, %c0_169], %336 {strides = array<i32>} : memref<16x32xf32, #tpu.memory_space<vmem>>, vector<16x32xf32>,
    %c1_170 = arith.constant 1 : index
    %c0_171 = arith.constant 0 : index
    %c0_172 = arith.constant 0 : index
    %338 = vector.load %arg41[%c1_170, %c0_171, %c0_172] : memref<3x1x32xf32, #tpu.memory_space<vmem>>, vector<1x1x32xf32>
    %339 = vector.shape_cast %338 : vector<1x1x32xf32> to vector<1x32xf32>
    %c1_173 = arith.constant 1 : index
    %c0_174 = arith.constant 0 : index
    %c0_175 = arith.constant 0 : index
    %c0_176 = arith.constant 0 : index
    %340 = vector.load %arg40[%c1_173, %c0_174, %c0_175, %c0_176] : memref<3x3x32x32xbf16, #tpu.memory_space<vmem>>, vector<1x1x32x32xbf16>
    %341 = vector.shape_cast %340 : vector<1x1x32x32xbf16> to vector<32x32xbf16>
    %cst_177 = arith.constant dense<0.000000e+00> : vector<16x32xf32>
    %342 = tpu.matmul %313, %341, %cst_177 {dimension_numbers = #tpu.dot_dimension_numbers<[1], [0], [0], [1], [0, 0, 1, 1], [], []>} : vector<16x32xbf16>, vector<32x32xbf16>, vector<16x32xf32> -> vector<16x32xf32>
    %343 = vector.broadcast %339 : vector<1x32xf32> to vector<16x32xf32>
    %344 = arith.addf %343, %342 : vector<16x32xf32>
    %c1_178 = arith.constant 1 : index
    %c1_179 = arith.constant 1 : index
    %c0_180 = arith.constant 0 : index
    %c0_181 = arith.constant 0 : index
    %345 = vector.load %arg40[%c1_178, %c1_179, %c0_180, %c0_181] : memref<3x3x32x32xbf16, #tpu.memory_space<vmem>>, vector<1x1x32x32xbf16>
    %346 = vector.shape_cast %345 : vector<1x1x32x32xbf16> to vector<32x32xbf16>
    %cst_182 = arith.constant dense<0.000000e+00> : vector<16x32xf32>
    %347 = tpu.matmul %314, %346, %cst_182 {dimension_numbers = #tpu.dot_dimension_numbers<[1], [0], [0], [1], [0, 0, 1, 1], [], []>} : vector<16x32xbf16>, vector<32x32xbf16>, vector<16x32xf32> -> vector<16x32xf32>
    %348 = arith.addf %344, %347 : vector<16x32xf32>
    %c1_183 = arith.constant 1 : index
    %c2_184 = arith.constant 2 : index
    %c0_185 = arith.constant 0 : index
    %c0_186 = arith.constant 0 : index
    %349 = vector.load %arg40[%c1_183, %c2_184, %c0_185, %c0_186] : memref<3x3x32x32xbf16, #tpu.memory_space<vmem>>, vector<1x1x32x32xbf16>
    %350 = vector.shape_cast %349 : vector<1x1x32x32xbf16> to vector<32x32xbf16>
    %cst_187 = arith.constant dense<0.000000e+00> : vector<16x32xf32>
    %351 = tpu.matmul %315, %350, %cst_187 {dimension_numbers = #tpu.dot_dimension_numbers<[1], [0], [0], [1], [0, 0, 1, 1], [], []>} : vector<16x32xbf16>, vector<32x32xbf16>, vector<16x32xf32> -> vector<16x32xf32>
    %352 = arith.addf %348, %351 : vector<16x32xf32>
    %c0_188 = arith.constant 0 : index
    %c0_189 = arith.constant 0 : index
    %353 = vector.load %arg43[%c0_188, %c0_189] : memref<16x32xf32, #tpu.memory_space<vmem>>, vector<16x32xf32>
    tpu.vector_store %arg43[%c0_188, %c0_189], %352 {strides = array<i32>} : memref<16x32xf32, #tpu.memory_space<vmem>>, vector<16x32xf32>,
    %c2_190 = arith.constant 2 : index
    %c0_191 = arith.constant 0 : index
    %c0_192 = arith.constant 0 : index
    %354 = vector.load %arg41[%c2_190, %c0_191, %c0_192] : memref<3x1x32xf32, #tpu.memory_space<vmem>>, vector<1x1x32xf32>
    %355 = vector.shape_cast %354 : vector<1x1x32xf32> to vector<1x32xf32>
    %c2_193 = arith.constant 2 : index
    %c0_194 = arith.constant 0 : index
    %c0_195 = arith.constant 0 : index
    %c0_196 = arith.constant 0 : index
    %356 = vector.load %arg40[%c2_193, %c0_194, %c0_195, %c0_196] : memref<3x3x32x32xbf16, #tpu.memory_space<vmem>>, vector<1x1x32x32xbf16>
    %357 = vector.shape_cast %356 : vector<1x1x32x32xbf16> to vector<32x32xbf16>
    %cst_197 = arith.constant dense<0.000000e+00> : vector<16x32xf32>
    %358 = tpu.matmul %313, %357, %cst_197 {dimension_numbers = #tpu.dot_dimension_numbers<[1], [0], [0], [1], [0, 0, 1, 1], [], []>} : vector<16x32xbf16>, vector<32x32xbf16>, vector<16x32xf32> -> vector<16x32xf32>
    %359 = vector.broadcast %355 : vector<1x32xf32> to vector<16x32xf32>
    %360 = arith.addf %359, %358 : vector<16x32xf32>
    %c2_198 = arith.constant 2 : index
    %c1_199 = arith.constant 1 : index
    %c0_200 = arith.constant 0 : index
    %c0_201 = arith.constant 0 : index
    %361 = vector.load %arg40[%c2_198, %c1_199, %c0_200, %c0_201] : memref<3x3x32x32xbf16, #tpu.memory_space<vmem>>, vector<1x1x32x32xbf16>
    %362 = vector.shape_cast %361 : vector<1x1x32x32xbf16> to vector<32x32xbf16>
    %cst_202 = arith.constant dense<0.000000e+00> : vector<16x32xf32>
    %363 = tpu.matmul %314, %362, %cst_202 {dimension_numbers = #tpu.dot_dimension_numbers<[1], [0], [0], [1], [0, 0, 1, 1], [], []>} : vector<16x32xbf16>, vector<32x32xbf16>, vector<16x32xf32> -> vector<16x32xf32>
    %364 = arith.addf %360, %363 : vector<16x32xf32>
    %c2_203 = arith.constant 2 : index
    %c2_204 = arith.constant 2 : index
    %c0_205 = arith.constant 0 : index
    %c0_206 = arith.constant 0 : index
    %365 = vector.load %arg40[%c2_203, %c2_204, %c0_205, %c0_206] : memref<3x3x32x32xbf16, #tpu.memory_space<vmem>>, vector<1x1x32x32xbf16>
    %366 = vector.shape_cast %365 : vector<1x1x32x32xbf16> to vector<32x32xbf16>
    %cst_207 = arith.constant dense<0.000000e+00> : vector<16x32xf32>
    %367 = tpu.matmul %315, %366, %cst_207 {dimension_numbers = #tpu.dot_dimension_numbers<[1], [0], [0], [1], [0, 0, 1, 1], [], []>} : vector<16x32xbf16>, vector<32x32xbf16>, vector<16x32xf32> -> vector<16x32xf32>
    %368 = arith.addf %364, %367 : vector<16x32xf32>
    %c0_208 = arith.constant 0 : index
    %c0_209 = arith.constant 0 : index
    %369 = vector.load %arg44[%c0_208, %c0_209] : memref<16x32xf32, #tpu.memory_space<vmem>>, vector<16x32xf32>
    tpu.vector_store %arg44[%c0_208, %c0_209], %368 {strides = array<i32>} : memref<16x32xf32, #tpu.memory_space<vmem>>, vector<16x32xf32>,
    return
  }
  func.func @transform_0(%arg0: i32) -> (i32, i32) {
    %c0_i32 = arith.constant 0 : i32
    %c0_i32_0 = arith.constant 0 : i32
    return %arg0, %c0_i32 : i32, i32
  }
  func.func @transform_1(%arg0: i32) -> (i32, i32) {
    %c0_i32 = arith.constant 0 : i32
    %c0_i32_0 = arith.constant 0 : i32
    return %arg0, %c0_i32 : i32, i32
  }
  func.func @transform_2(%arg0: i32) -> (i32, i32) {
    %c0_i32 = arith.constant 0 : i32
    %c0_i32_0 = arith.constant 0 : i32
    return %arg0, %c0_i32 : i32, i32
  }
  func.func @transform_3(%arg0: i32) -> (i32, i32) {
    %c0_i32 = arith.constant 0 : i32
    %c0_i32_0 = arith.constant 0 : i32
    %c0_i32_1 = arith.constant 0 : i32
    return %c0_i32, %c0_i32_0 : i32, i32
  }
  func.func @transform_4(%arg0: i32) -> (i32, i32) {
    %c0_i32 = arith.constant 0 : i32
    %c0_i32_0 = arith.constant 0 : i32
    %c0_i32_1 = arith.constant 0 : i32
    return %c0_i32, %c0_i32_0 : i32, i32
  }
  func.func @transform_5(%arg0: i32) -> (i32, i32) {
    %c0_i32 = arith.constant 0 : i32
    %c0_i32_0 = arith.constant 0 : i32
    %c0_i32_1 = arith.constant 0 : i32
    return %c0_i32, %c0_i32_0 : i32, i32
  }
  func.func @transform_6(%arg0: i32) -> (i32, i32) {
    %c0_i32 = arith.constant 0 : i32
    %c0_i32_0 = arith.constant 0 : i32
    %c0_i32_1 = arith.constant 0 : i32
    return %c0_i32, %c0_i32_0 : i32, i32
  }
  func.func @transform_7(%arg0: i32) -> (i32, i32) {
    %c0_i32 = arith.constant 0 : i32
    %c0_i32_0 = arith.constant 0 : i32
    %c0_i32_1 = arith.constant 0 : i32
    return %c0_i32, %c0_i32_0 : i32, i32
  }
  func.func @transform_8(%arg0: i32) -> (i32, i32) {
    %c0_i32 = arith.constant 0 : i32
    %c0_i32_0 = arith.constant 0 : i32
    %c0_i32_1 = arith.constant 0 : i32
    return %c0_i32, %c0_i32_0 : i32, i32
  }
  func.func @transform_9(%arg0: i32) -> (i32, i32) {
    %c0_i32 = arith.constant 0 : i32
    %c0_i32_0 = arith.constant 0 : i32
    %c0_i32_1 = arith.constant 0 : i32
    return %c0_i32, %c0_i32_0 : i32, i32
  }
  func.func @transform_10(%arg0: i32) -> (i32, i32) {
    %c0_i32 = arith.constant 0 : i32
    %c0_i32_0 = arith.constant 0 : i32
    %c0_i32_1 = arith.constant 0 : i32
    return %c0_i32, %c0_i32_0 : i32, i32
  }
  func.func @transform_11(%arg0: i32) -> (i32, i32) {
    %c0_i32 = arith.constant 0 : i32
    %c0_i32_0 = arith.constant 0 : i32
    %c0_i32_1 = arith.constant 0 : i32
    return %c0_i32, %c0_i32_0 : i32, i32
  }
  func.func @transform_12(%arg0: i32) -> (i32, i32) {
    %c0_i32 = arith.constant 0 : i32
    %c0_i32_0 = arith.constant 0 : i32
    %c0_i32_1 = arith.constant 0 : i32
    return %c0_i32, %c0_i32_0 : i32, i32
  }
  func.func @transform_13(%arg0: i32) -> (i32, i32) {
    %c0_i32 = arith.constant 0 : i32
    %c0_i32_0 = arith.constant 0 : i32
    %c0_i32_1 = arith.constant 0 : i32
    return %c0_i32, %c0_i32_0 : i32, i32
  }
  func.func @transform_14(%arg0: i32) -> (i32, i32) {
    %c0_i32 = arith.constant 0 : i32
    %c0_i32_0 = arith.constant 0 : i32
    %c0_i32_1 = arith.constant 0 : i32
    return %c0_i32, %c0_i32_0 : i32, i32
  }
  func.func @transform_15(%arg0: i32) -> (i32, i32) {
    %c0_i32 = arith.constant 0 : i32
    %c0_i32_0 = arith.constant 0 : i32
    %c0_i32_1 = arith.constant 0 : i32
    return %c0_i32, %c0_i32_0 : i32, i32
  }
  func.func @transform_16(%arg0: i32) -> (i32, i32) {
    %c0_i32 = arith.constant 0 : i32
    %c0_i32_0 = arith.constant 0 : i32
    %c0_i32_1 = arith.constant 0 : i32
    return %c0_i32, %c0_i32_0 : i32, i32
  }
  func.func @transform_17(%arg0: i32) -> (i32, i32) {
    %c0_i32 = arith.constant 0 : i32
    %c0_i32_0 = arith.constant 0 : i32
    %c0_i32_1 = arith.constant 0 : i32
    return %c0_i32, %c0_i32_0 : i32, i32
  }
  func.func @transform_18(%arg0: i32) -> (i32, i32) {
    %c0_i32 = arith.constant 0 : i32
    %c0_i32_0 = arith.constant 0 : i32
    %c0_i32_1 = arith.constant 0 : i32
    return %c0_i32, %c0_i32_0 : i32, i32
  }
  func.func @transform_19(%arg0: i32) -> (i32, i32) {
    %c0_i32 = arith.constant 0 : i32
    %c0_i32_0 = arith.constant 0 : i32
    %c0_i32_1 = arith.constant 0 : i32
    return %c0_i32, %c0_i32_0 : i32, i32
  }
  func.func @transform_20(%arg0: i32) -> (i32, i32) {
    %c0_i32 = arith.constant 0 : i32
    %c0_i32_0 = arith.constant 0 : i32
    %c0_i32_1 = arith.constant 0 : i32
    return %c0_i32, %c0_i32_0 : i32, i32
  }
  func.func @transform_21(%arg0: i32) -> (i32, i32) {
    %c0_i32 = arith.constant 0 : i32
    %c0_i32_0 = arith.constant 0 : i32
    %c0_i32_1 = arith.constant 0 : i32
    return %c0_i32, %c0_i32_0 : i32, i32
  }
  func.func @transform_22(%arg0: i32) -> (i32, i32) {
    %c0_i32 = arith.constant 0 : i32
    %c0_i32_0 = arith.constant 0 : i32
    %c0_i32_1 = arith.constant 0 : i32
    return %c0_i32, %c0_i32_0 : i32, i32
  }
  func.func @transform_23(%arg0: i32) -> (i32, i32) {
    %c0_i32 = arith.constant 0 : i32
    %c0_i32_0 = arith.constant 0 : i32
    %c0_i32_1 = arith.constant 0 : i32
    return %c0_i32, %c0_i32_0 : i32, i32
  }
  func.func @transform_24(%arg0: i32) -> (i32, i32) {
    %c0_i32 = arith.constant 0 : i32
    %c0_i32_0 = arith.constant 0 : i32
    %c0_i32_1 = arith.constant 0 : i32
    return %c0_i32, %c0_i32_0 : i32, i32
  }
  func.func @transform_25(%arg0: i32) -> (i32, i32) {
    %c0_i32 = arith.constant 0 : i32
    %c0_i32_0 = arith.constant 0 : i32
    %c0_i32_1 = arith.constant 0 : i32
    return %c0_i32, %c0_i32_0 : i32, i32
  }
  func.func @transform_26(%arg0: i32) -> (i32, i32) {
    %c0_i32 = arith.constant 0 : i32
    %c0_i32_0 = arith.constant 0 : i32
    %c0_i32_1 = arith.constant 0 : i32
    return %c0_i32, %c0_i32_0 : i32, i32
  }
  func.func @transform_27(%arg0: i32) -> (i32, i32) {
    %c0_i32 = arith.constant 0 : i32
    %c0_i32_0 = arith.constant 0 : i32
    %c0_i32_1 = arith.constant 0 : i32
    return %c0_i32, %c0_i32_0 : i32, i32
  }
  func.func @transform_28(%arg0: i32) -> (i32, i32) {
    %c0_i32 = arith.constant 0 : i32
    %c0_i32_0 = arith.constant 0 : i32
    %c0_i32_1 = arith.constant 0 : i32
    return %c0_i32, %c0_i32_0 : i32, i32
  }
  func.func @transform_29(%arg0: i32) -> (i32, i32) {
    %c0_i32 = arith.constant 0 : i32
    %c0_i32_0 = arith.constant 0 : i32
    %c0_i32_1 = arith.constant 0 : i32
    return %c0_i32, %c0_i32_0 : i32, i32
  }
  func.func @transform_30(%arg0: i32) -> (i32, i32) {
    %c0_i32 = arith.constant 0 : i32
    %c0_i32_0 = arith.constant 0 : i32
    %c0_i32_1 = arith.constant 0 : i32
    return %c0_i32, %c0_i32_0 : i32, i32
  }
  func.func @transform_31(%arg0: i32) -> (i32, i32) {
    %c0_i32 = arith.constant 0 : i32
    %c0_i32_0 = arith.constant 0 : i32
    %c0_i32_1 = arith.constant 0 : i32
    return %c0_i32, %c0_i32_0 : i32, i32
  }
  func.func @transform_32(%arg0: i32) -> (i32, i32) {
    %c0_i32 = arith.constant 0 : i32
    %c0_i32_0 = arith.constant 0 : i32
    %c0_i32_1 = arith.constant 0 : i32
    return %c0_i32, %c0_i32_0 : i32, i32
  }
  func.func @transform_33(%arg0: i32) -> (i32, i32) {
    %c0_i32 = arith.constant 0 : i32
    %c0_i32_0 = arith.constant 0 : i32
    %c0_i32_1 = arith.constant 0 : i32
    return %c0_i32, %c0_i32_0 : i32, i32
  }
  func.func @transform_34(%arg0: i32) -> (i32, i32) {
    %c0_i32 = arith.constant 0 : i32
    %c0_i32_0 = arith.constant 0 : i32
    %c0_i32_1 = arith.constant 0 : i32
    return %c0_i32, %c0_i32_0 : i32, i32
  }
  func.func @transform_35(%arg0: i32) -> (i32, i32) {
    %c0_i32 = arith.constant 0 : i32
    %c0_i32_0 = arith.constant 0 : i32
    %c0_i32_1 = arith.constant 0 : i32
    return %c0_i32, %c0_i32_0 : i32, i32
  }
  func.func @transform_36(%arg0: i32) -> (i32, i32) {
    %c0_i32 = arith.constant 0 : i32
    %c0_i32_0 = arith.constant 0 : i32
    %c0_i32_1 = arith.constant 0 : i32
    return %c0_i32, %c0_i32_0 : i32, i32
  }
  func.func @transform_37(%arg0: i32) -> (i32, i32) {
    %c0_i32 = arith.constant 0 : i32
    %c0_i32_0 = arith.constant 0 : i32
    %c0_i32_1 = arith.constant 0 : i32
    return %c0_i32, %c0_i32_0 : i32, i32
  }
  func.func @transform_38(%arg0: i32) -> (i32, i32) {
    %c0_i32 = arith.constant 0 : i32
    %c0_i32_0 = arith.constant 0 : i32
    %c0_i32_1 = arith.constant 0 : i32
    return %c0_i32, %c0_i32_0 : i32, i32
  }
  func.func @transform_39(%arg0: i32) -> (i32, i32, i32, i32) {
    %c0_i32 = arith.constant 0 : i32
    %c0_i32_0 = arith.constant 0 : i32
    %c0_i32_1 = arith.constant 0 : i32
    %c0_i32_2 = arith.constant 0 : i32
    %c0_i32_3 = arith.constant 0 : i32
    return %c0_i32, %c0_i32_0, %c0_i32_1, %c0_i32_2 : i32, i32, i32, i32
  }
  func.func @transform_40(%arg0: i32) -> (i32, i32, i32) {
    %c0_i32 = arith.constant 0 : i32
    %c0_i32_0 = arith.constant 0 : i32
    %c0_i32_1 = arith.constant 0 : i32
    %c0_i32_2 = arith.constant 0 : i32
    return %c0_i32, %c0_i32_0, %c0_i32_1 : i32, i32, i32
  }
  func.func @transform_41(%arg0: i32) -> (i32, i32) {
    %c0_i32 = arith.constant 0 : i32
    %c0_i32_0 = arith.constant 0 : i32
    return %arg0, %c0_i32 : i32, i32
  }
  func.func @transform_42(%arg0: i32) -> (i32, i32) {
    %c0_i32 = arith.constant 0 : i32
    %c0_i32_0 = arith.constant 0 : i32
    return %arg0, %c0_i32 : i32, i32
  }
  func.func @transform_43(%arg0: i32) -> (i32, i32) {
    %c0_i32 = arith.constant 0 : i32
    %c0_i32_0 = arith.constant 0 : i32
    return %arg0, %c0_i32 : i32, i32
  }
  func.func @transform_44(%arg0: i32) -> (i32, i32, i32) {
    %c0_i32 = arith.constant 0 : i32
    %c0_i32_0 = arith.constant 0 : i32
    %c0_i32_1 = arith.constant 0 : i32
    return %c0_i32, %arg0, %c0_i32_0 : i32, i32, i32
  }
}

module attributes {stable_mosaic.version = 11 : i64} {
  func.func @_tail_kernel(%arg0: i32, %arg1: memref<16x32xf32, #tpu.memory_space<vmem>>, %arg2: memref<2x16x32xbf16, #tpu.memory_space<vmem>>, %arg3: memref<3x32x32xbf16, #tpu.memory_space<vmem>>, %arg4: memref<1x32xf32, #tpu.memory_space<vmem>>, %arg5: memref<1x32xf32, #tpu.memory_space<vmem>>, %arg6: memref<1x32xf32, #tpu.memory_space<vmem>>, %arg7: memref<32x32xbf16, #tpu.memory_space<vmem>>, %arg8: memref<1x32xf32, #tpu.memory_space<vmem>>, %arg9: memref<1x32xf32, #tpu.memory_space<vmem>>, %arg10: memref<1x32xf32, #tpu.memory_space<vmem>>, %arg11: memref<32x32xbf16, #tpu.memory_space<vmem>>, %arg12: memref<1x32xf32, #tpu.memory_space<vmem>>, %arg13: memref<1x32xf32, #tpu.memory_space<vmem>>, %arg14: memref<1x32xf32, #tpu.memory_space<vmem>>, %arg15: memref<32x128xbf16, #tpu.memory_space<vmem>>, %arg16: memref<1x128xf32, #tpu.memory_space<vmem>>, %arg17: memref<16x128xf32, #tpu.memory_space<vmem>>) attributes {dimension_semantics = [#tpu.dimension_semantics<parallel>], iteration_bounds = array<i64: 1>, scalar_prefetch = 0 : i64, scratch_operands = 0 : i64, tpu.core_type = #tpu.core_type<tc>, window_params = [{transform_indices = @transform_0, window_bounds = array<i64: 16, 32>}, {transform_indices = @transform_1, window_bounds = array<i64: 2, 16, 32>}, {pipeline_mode = #tpu.pipeline_mode<synchronous>, transform_indices = @transform_2, window_bounds = array<i64: 3, 32, 32>}, {pipeline_mode = #tpu.pipeline_mode<synchronous>, transform_indices = @transform_3, window_bounds = array<i64: 1, 32>}, {pipeline_mode = #tpu.pipeline_mode<synchronous>, transform_indices = @transform_4, window_bounds = array<i64: 1, 32>}, {pipeline_mode = #tpu.pipeline_mode<synchronous>, transform_indices = @transform_5, window_bounds = array<i64: 1, 32>}, {pipeline_mode = #tpu.pipeline_mode<synchronous>, transform_indices = @transform_6, window_bounds = array<i64: 32, 32>}, {pipeline_mode = #tpu.pipeline_mode<synchronous>, transform_indices = @transform_7, window_bounds = array<i64: 1, 32>}, {pipeline_mode = #tpu.pipeline_mode<synchronous>, transform_indices = @transform_8, window_bounds = array<i64: 1, 32>}, {pipeline_mode = #tpu.pipeline_mode<synchronous>, transform_indices = @transform_9, window_bounds = array<i64: 1, 32>}, {pipeline_mode = #tpu.pipeline_mode<synchronous>, transform_indices = @transform_10, window_bounds = array<i64: 32, 32>}, {pipeline_mode = #tpu.pipeline_mode<synchronous>, transform_indices = @transform_11, window_bounds = array<i64: 1, 32>}, {pipeline_mode = #tpu.pipeline_mode<synchronous>, transform_indices = @transform_12, window_bounds = array<i64: 1, 32>}, {pipeline_mode = #tpu.pipeline_mode<synchronous>, transform_indices = @transform_13, window_bounds = array<i64: 1, 32>}, {pipeline_mode = #tpu.pipeline_mode<synchronous>, transform_indices = @transform_14, window_bounds = array<i64: 32, 128>}, {pipeline_mode = #tpu.pipeline_mode<synchronous>, transform_indices = @transform_15, window_bounds = array<i64: 1, 128>}, {transform_indices = @transform_16, window_bounds = array<i64: 16, 128>}]} {
    %c0 = arith.constant 0 : index
    %c0_0 = arith.constant 0 : index
    %0 = vector.load %arg1[%c0, %c0_0] : memref<16x32xf32, #tpu.memory_space<vmem>>, vector<16x32xf32>
    %1 = arith.truncf %0 : vector<16x32xf32> to vector<16x32xbf16>
    %c0_1 = arith.constant 0 : index
    %c0_2 = arith.constant 0 : index
    %c0_3 = arith.constant 0 : index
    %2 = vector.load %arg2[%c0_1, %c0_2, %c0_3] : memref<2x16x32xbf16, #tpu.memory_space<vmem>>, vector<1x16x32xbf16>
    %3 = vector.shape_cast %2 : vector<1x16x32xbf16> to vector<16x32xbf16>
    %c1 = arith.constant 1 : index
    %c0_4 = arith.constant 0 : index
    %c0_5 = arith.constant 0 : index
    %4 = vector.load %arg2[%c1, %c0_4, %c0_5] : memref<2x16x32xbf16, #tpu.memory_space<vmem>>, vector<1x16x32xbf16>
    %5 = vector.shape_cast %4 : vector<1x16x32xbf16> to vector<16x32xbf16>
    %c0_6 = arith.constant 0 : index
    %c0_7 = arith.constant 0 : index
    %c0_8 = arith.constant 0 : index
    %6 = vector.load %arg3[%c0_6, %c0_7, %c0_8] : memref<3x32x32xbf16, #tpu.memory_space<vmem>>, vector<1x32x32xbf16>
    %7 = vector.shape_cast %6 : vector<1x32x32xbf16> to vector<32x32xbf16>
    %cst = arith.constant dense<0.000000e+00> : vector<16x32xf32>
    %8 = tpu.matmul %1, %7, %cst {dimension_numbers = #tpu.dot_dimension_numbers<[1], [0], [0], [1], [0, 0, 1, 1], [], []>} : vector<16x32xbf16>, vector<32x32xbf16>, vector<16x32xf32> -> vector<16x32xf32>
    %c1_9 = arith.constant 1 : index
    %c0_10 = arith.constant 0 : index
    %c0_11 = arith.constant 0 : index
    %9 = vector.load %arg3[%c1_9, %c0_10, %c0_11] : memref<3x32x32xbf16, #tpu.memory_space<vmem>>, vector<1x32x32xbf16>
    %10 = vector.shape_cast %9 : vector<1x32x32xbf16> to vector<32x32xbf16>
    %cst_12 = arith.constant dense<0.000000e+00> : vector<16x32xf32>
    %11 = tpu.matmul %3, %10, %cst_12 {dimension_numbers = #tpu.dot_dimension_numbers<[1], [0], [0], [1], [0, 0, 1, 1], [], []>} : vector<16x32xbf16>, vector<32x32xbf16>, vector<16x32xf32> -> vector<16x32xf32>
    %12 = arith.addf %8, %11 : vector<16x32xf32>
    %c2 = arith.constant 2 : index
    %c0_13 = arith.constant 0 : index
    %c0_14 = arith.constant 0 : index
    %13 = vector.load %arg3[%c2, %c0_13, %c0_14] : memref<3x32x32xbf16, #tpu.memory_space<vmem>>, vector<1x32x32xbf16>
    %14 = vector.shape_cast %13 : vector<1x32x32xbf16> to vector<32x32xbf16>
    %cst_15 = arith.constant dense<0.000000e+00> : vector<16x32xf32>
    %15 = tpu.matmul %5, %14, %cst_15 {dimension_numbers = #tpu.dot_dimension_numbers<[1], [0], [0], [1], [0, 0, 1, 1], [], []>} : vector<16x32xbf16>, vector<32x32xbf16>, vector<16x32xf32> -> vector<16x32xf32>
    %16 = arith.addf %12, %15 : vector<16x32xf32>
    %c0_16 = arith.constant 0 : index
    %c0_17 = arith.constant 0 : index
    %17 = vector.load %arg4[%c0_16, %c0_17] : memref<1x32xf32, #tpu.memory_space<vmem>>, vector<1x32xf32>
    %18 = vector.broadcast %17 : vector<1x32xf32> to vector<16x32xf32>
    %19 = arith.addf %16, %18 : vector<16x32xf32>
    %cst_18 = arith.constant dense<0.000000e+00> : vector<16xf32>
    %20 = vector.multi_reduction <add>, %19, %cst_18 [1] : vector<16x32xf32> to vector<16xf32>
    %21 = vector.shape_cast %20 : vector<16xf32> to vector<16x1xf32>
    %cst_19 = arith.constant 3.200000e+01 : f32
    %22 = vector.broadcast %cst_19 : f32 to vector<16x1xf32>
    %23 = arith.divf %21, %22 : vector<16x1xf32>
    %24 = arith.mulf %19, %19 : vector<16x32xf32>
    %cst_20 = arith.constant dense<0.000000e+00> : vector<16xf32>
    %25 = vector.multi_reduction <add>, %24, %cst_20 [1] : vector<16x32xf32> to vector<16xf32>
    %26 = vector.shape_cast %25 : vector<16xf32> to vector<16x1xf32>
    %cst_21 = arith.constant 3.200000e+01 : f32
    %27 = vector.broadcast %cst_21 : f32 to vector<16x1xf32>
    %28 = arith.divf %26, %27 : vector<16x1xf32>
    %29 = arith.mulf %23, %23 : vector<16x1xf32>
    %30 = arith.subf %28, %29 : vector<16x1xf32>
    %cst_22 = arith.constant 0.000000e+00 : f32
    %31 = vector.broadcast %cst_22 : f32 to vector<16x1xf32>
    %32 = arith.maximumf %30, %31 : vector<16x1xf32>
    %33 = vector.broadcast %23 : vector<16x1xf32> to vector<16x32xf32>
    %34 = arith.subf %19, %33 : vector<16x32xf32>
    %cst_23 = arith.constant 9.99999974E-6 : f32
    %35 = vector.broadcast %cst_23 : f32 to vector<16x1xf32>
    %36 = arith.addf %32, %35 : vector<16x1xf32>
    %37 = math.rsqrt %36 : vector<16x1xf32>
    %38 = vector.broadcast %37 : vector<16x1xf32> to vector<16x32xf32>
    %39 = arith.mulf %34, %38 : vector<16x32xf32>
    %c0_24 = arith.constant 0 : index
    %c0_25 = arith.constant 0 : index
    %40 = vector.load %arg5[%c0_24, %c0_25] : memref<1x32xf32, #tpu.memory_space<vmem>>, vector<1x32xf32>
    %41 = vector.broadcast %40 : vector<1x32xf32> to vector<16x32xf32>
    %42 = arith.mulf %39, %41 : vector<16x32xf32>
    %c0_26 = arith.constant 0 : index
    %c0_27 = arith.constant 0 : index
    %43 = vector.load %arg6[%c0_26, %c0_27] : memref<1x32xf32, #tpu.memory_space<vmem>>, vector<1x32xf32>
    %44 = vector.broadcast %43 : vector<1x32xf32> to vector<16x32xf32>
    %45 = arith.addf %42, %44 : vector<16x32xf32>
    %cst_28 = arith.constant 0.000000e+00 : f32
    %46 = vector.broadcast %cst_28 : f32 to vector<16x32xf32>
    %47 = arith.maximumf %45, %46 : vector<16x32xf32>
    %c0_29 = arith.constant 0 : index
    %c0_30 = arith.constant 0 : index
    %48 = vector.load %arg7[%c0_29, %c0_30] : memref<32x32xbf16, #tpu.memory_space<vmem>>, vector<32x32xbf16>
    %49 = arith.truncf %47 : vector<16x32xf32> to vector<16x32xbf16>
    %cst_31 = arith.constant dense<0.000000e+00> : vector<16x32xf32>
    %50 = tpu.matmul %49, %48, %cst_31 {dimension_numbers = #tpu.dot_dimension_numbers<[1], [0], [0], [1], [0, 0, 1, 1], [], []>} : vector<16x32xbf16>, vector<32x32xbf16>, vector<16x32xf32> -> vector<16x32xf32>
    %c0_32 = arith.constant 0 : index
    %c0_33 = arith.constant 0 : index
    %51 = vector.load %arg8[%c0_32, %c0_33] : memref<1x32xf32, #tpu.memory_space<vmem>>, vector<1x32xf32>
    %52 = vector.broadcast %51 : vector<1x32xf32> to vector<16x32xf32>
    %53 = arith.addf %50, %52 : vector<16x32xf32>
    %cst_34 = arith.constant dense<0.000000e+00> : vector<16xf32>
    %54 = vector.multi_reduction <add>, %53, %cst_34 [1] : vector<16x32xf32> to vector<16xf32>
    %55 = vector.shape_cast %54 : vector<16xf32> to vector<16x1xf32>
    %cst_35 = arith.constant 3.200000e+01 : f32
    %56 = vector.broadcast %cst_35 : f32 to vector<16x1xf32>
    %57 = arith.divf %55, %56 : vector<16x1xf32>
    %58 = arith.mulf %53, %53 : vector<16x32xf32>
    %cst_36 = arith.constant dense<0.000000e+00> : vector<16xf32>
    %59 = vector.multi_reduction <add>, %58, %cst_36 [1] : vector<16x32xf32> to vector<16xf32>
    %60 = vector.shape_cast %59 : vector<16xf32> to vector<16x1xf32>
    %cst_37 = arith.constant 3.200000e+01 : f32
    %61 = vector.broadcast %cst_37 : f32 to vector<16x1xf32>
    %62 = arith.divf %60, %61 : vector<16x1xf32>
    %63 = arith.mulf %57, %57 : vector<16x1xf32>
    %64 = arith.subf %62, %63 : vector<16x1xf32>
    %cst_38 = arith.constant 0.000000e+00 : f32
    %65 = vector.broadcast %cst_38 : f32 to vector<16x1xf32>
    %66 = arith.maximumf %64, %65 : vector<16x1xf32>
    %67 = vector.broadcast %57 : vector<16x1xf32> to vector<16x32xf32>
    %68 = arith.subf %53, %67 : vector<16x32xf32>
    %cst_39 = arith.constant 9.99999974E-6 : f32
    %69 = vector.broadcast %cst_39 : f32 to vector<16x1xf32>
    %70 = arith.addf %66, %69 : vector<16x1xf32>
    %71 = math.rsqrt %70 : vector<16x1xf32>
    %72 = vector.broadcast %71 : vector<16x1xf32> to vector<16x32xf32>
    %73 = arith.mulf %68, %72 : vector<16x32xf32>
    %c0_40 = arith.constant 0 : index
    %c0_41 = arith.constant 0 : index
    %74 = vector.load %arg9[%c0_40, %c0_41] : memref<1x32xf32, #tpu.memory_space<vmem>>, vector<1x32xf32>
    %75 = vector.broadcast %74 : vector<1x32xf32> to vector<16x32xf32>
    %76 = arith.mulf %73, %75 : vector<16x32xf32>
    %c0_42 = arith.constant 0 : index
    %c0_43 = arith.constant 0 : index
    %77 = vector.load %arg10[%c0_42, %c0_43] : memref<1x32xf32, #tpu.memory_space<vmem>>, vector<1x32xf32>
    %78 = vector.broadcast %77 : vector<1x32xf32> to vector<16x32xf32>
    %79 = arith.addf %76, %78 : vector<16x32xf32>
    %cst_44 = arith.constant 0.000000e+00 : f32
    %80 = vector.broadcast %cst_44 : f32 to vector<16x32xf32>
    %81 = arith.maximumf %79, %80 : vector<16x32xf32>
    %c0_45 = arith.constant 0 : index
    %c0_46 = arith.constant 0 : index
    %82 = vector.load %arg11[%c0_45, %c0_46] : memref<32x32xbf16, #tpu.memory_space<vmem>>, vector<32x32xbf16>
    %83 = arith.truncf %81 : vector<16x32xf32> to vector<16x32xbf16>
    %cst_47 = arith.constant dense<0.000000e+00> : vector<16x32xf32>
    %84 = tpu.matmul %83, %82, %cst_47 {dimension_numbers = #tpu.dot_dimension_numbers<[1], [0], [0], [1], [0, 0, 1, 1], [], []>} : vector<16x32xbf16>, vector<32x32xbf16>, vector<16x32xf32> -> vector<16x32xf32>
    %c0_48 = arith.constant 0 : index
    %c0_49 = arith.constant 0 : index
    %85 = vector.load %arg12[%c0_48, %c0_49] : memref<1x32xf32, #tpu.memory_space<vmem>>, vector<1x32xf32>
    %86 = vector.broadcast %85 : vector<1x32xf32> to vector<16x32xf32>
    %87 = arith.addf %84, %86 : vector<16x32xf32>
    %cst_50 = arith.constant dense<0.000000e+00> : vector<16xf32>
    %88 = vector.multi_reduction <add>, %87, %cst_50 [1] : vector<16x32xf32> to vector<16xf32>
    %89 = vector.shape_cast %88 : vector<16xf32> to vector<16x1xf32>
    %cst_51 = arith.constant 3.200000e+01 : f32
    %90 = vector.broadcast %cst_51 : f32 to vector<16x1xf32>
    %91 = arith.divf %89, %90 : vector<16x1xf32>
    %92 = arith.mulf %87, %87 : vector<16x32xf32>
    %cst_52 = arith.constant dense<0.000000e+00> : vector<16xf32>
    %93 = vector.multi_reduction <add>, %92, %cst_52 [1] : vector<16x32xf32> to vector<16xf32>
    %94 = vector.shape_cast %93 : vector<16xf32> to vector<16x1xf32>
    %cst_53 = arith.constant 3.200000e+01 : f32
    %95 = vector.broadcast %cst_53 : f32 to vector<16x1xf32>
    %96 = arith.divf %94, %95 : vector<16x1xf32>
    %97 = arith.mulf %91, %91 : vector<16x1xf32>
    %98 = arith.subf %96, %97 : vector<16x1xf32>
    %cst_54 = arith.constant 0.000000e+00 : f32
    %99 = vector.broadcast %cst_54 : f32 to vector<16x1xf32>
    %100 = arith.maximumf %98, %99 : vector<16x1xf32>
    %101 = vector.broadcast %91 : vector<16x1xf32> to vector<16x32xf32>
    %102 = arith.subf %87, %101 : vector<16x32xf32>
    %cst_55 = arith.constant 9.99999974E-6 : f32
    %103 = vector.broadcast %cst_55 : f32 to vector<16x1xf32>
    %104 = arith.addf %100, %103 : vector<16x1xf32>
    %105 = math.rsqrt %104 : vector<16x1xf32>
    %106 = vector.broadcast %105 : vector<16x1xf32> to vector<16x32xf32>
    %107 = arith.mulf %102, %106 : vector<16x32xf32>
    %c0_56 = arith.constant 0 : index
    %c0_57 = arith.constant 0 : index
    %108 = vector.load %arg13[%c0_56, %c0_57] : memref<1x32xf32, #tpu.memory_space<vmem>>, vector<1x32xf32>
    %109 = vector.broadcast %108 : vector<1x32xf32> to vector<16x32xf32>
    %110 = arith.mulf %107, %109 : vector<16x32xf32>
    %c0_58 = arith.constant 0 : index
    %c0_59 = arith.constant 0 : index
    %111 = vector.load %arg14[%c0_58, %c0_59] : memref<1x32xf32, #tpu.memory_space<vmem>>, vector<1x32xf32>
    %112 = vector.broadcast %111 : vector<1x32xf32> to vector<16x32xf32>
    %113 = arith.addf %110, %112 : vector<16x32xf32>
    %cst_60 = arith.constant 0.000000e+00 : f32
    %114 = vector.broadcast %cst_60 : f32 to vector<16x32xf32>
    %115 = arith.maximumf %113, %114 : vector<16x32xf32>
    %116 = arith.truncf %115 : vector<16x32xf32> to vector<16x32xbf16>
    %c0_61 = arith.constant 0 : index
    %c0_62 = arith.constant 0 : index
    %117 = vector.load %arg15[%c0_61, %c0_62] : memref<32x128xbf16, #tpu.memory_space<vmem>>, vector<32x128xbf16>
    %cst_63 = arith.constant dense<0.000000e+00> : vector<16x128xf32>
    %118 = tpu.matmul %116, %117, %cst_63 {dimension_numbers = #tpu.dot_dimension_numbers<[1], [0], [0], [1], [0, 0, 1, 1], [], []>} : vector<16x32xbf16>, vector<32x128xbf16>, vector<16x128xf32> -> vector<16x128xf32>
    %c0_64 = arith.constant 0 : index
    %c0_65 = arith.constant 0 : index
    %119 = vector.load %arg16[%c0_64, %c0_65] : memref<1x128xf32, #tpu.memory_space<vmem>>, vector<1x128xf32>
    %120 = vector.broadcast %119 : vector<1x128xf32> to vector<16x128xf32>
    %121 = arith.addf %118, %120 : vector<16x128xf32>
    %122 = arith.negf %121 : vector<16x128xf32>
    %123 = math.exp %122 : vector<16x128xf32>
    %cst_66 = arith.constant 1.000000e+00 : f32
    %124 = vector.broadcast %cst_66 : f32 to vector<16x128xf32>
    %125 = arith.addf %124, %123 : vector<16x128xf32>
    %126 = arith.divf %124, %125 : vector<16x128xf32>
    %c0_67 = arith.constant 0 : index
    %c0_68 = arith.constant 0 : index
    %127 = vector.load %arg17[%c0_67, %c0_68] : memref<16x128xf32, #tpu.memory_space<vmem>>, vector<16x128xf32>
    tpu.vector_store %arg17[%c0_67, %c0_68], %126 {strides = array<i32>} : memref<16x128xf32, #tpu.memory_space<vmem>>, vector<16x128xf32>,
    return
  }
  func.func @transform_0(%arg0: i32) -> (i32, i32) {
    %c0_i32 = arith.constant 0 : i32
    %c0_i32_0 = arith.constant 0 : i32
    return %arg0, %c0_i32 : i32, i32
  }
  func.func @transform_1(%arg0: i32) -> (i32, i32, i32) {
    %c0_i32 = arith.constant 0 : i32
    %c0_i32_0 = arith.constant 0 : i32
    %c0_i32_1 = arith.constant 0 : i32
    return %c0_i32, %arg0, %c0_i32_0 : i32, i32, i32
  }
  func.func @transform_2(%arg0: i32) -> (i32, i32, i32) {
    %c0_i32 = arith.constant 0 : i32
    %c0_i32_0 = arith.constant 0 : i32
    %c0_i32_1 = arith.constant 0 : i32
    %c0_i32_2 = arith.constant 0 : i32
    return %c0_i32, %c0_i32_0, %c0_i32_1 : i32, i32, i32
  }
  func.func @transform_3(%arg0: i32) -> (i32, i32) {
    %c0_i32 = arith.constant 0 : i32
    %c0_i32_0 = arith.constant 0 : i32
    %c0_i32_1 = arith.constant 0 : i32
    return %c0_i32, %c0_i32_0 : i32, i32
  }
  func.func @transform_4(%arg0: i32) -> (i32, i32) {
    %c0_i32 = arith.constant 0 : i32
    %c0_i32_0 = arith.constant 0 : i32
    %c0_i32_1 = arith.constant 0 : i32
    return %c0_i32, %c0_i32_0 : i32, i32
  }
  func.func @transform_5(%arg0: i32) -> (i32, i32) {
    %c0_i32 = arith.constant 0 : i32
    %c0_i32_0 = arith.constant 0 : i32
    %c0_i32_1 = arith.constant 0 : i32
    return %c0_i32, %c0_i32_0 : i32, i32
  }
  func.func @transform_6(%arg0: i32) -> (i32, i32) {
    %c0_i32 = arith.constant 0 : i32
    %c0_i32_0 = arith.constant 0 : i32
    %c0_i32_1 = arith.constant 0 : i32
    return %c0_i32, %c0_i32_0 : i32, i32
  }
  func.func @transform_7(%arg0: i32) -> (i32, i32) {
    %c0_i32 = arith.constant 0 : i32
    %c0_i32_0 = arith.constant 0 : i32
    %c0_i32_1 = arith.constant 0 : i32
    return %c0_i32, %c0_i32_0 : i32, i32
  }
  func.func @transform_8(%arg0: i32) -> (i32, i32) {
    %c0_i32 = arith.constant 0 : i32
    %c0_i32_0 = arith.constant 0 : i32
    %c0_i32_1 = arith.constant 0 : i32
    return %c0_i32, %c0_i32_0 : i32, i32
  }
  func.func @transform_9(%arg0: i32) -> (i32, i32) {
    %c0_i32 = arith.constant 0 : i32
    %c0_i32_0 = arith.constant 0 : i32
    %c0_i32_1 = arith.constant 0 : i32
    return %c0_i32, %c0_i32_0 : i32, i32
  }
  func.func @transform_10(%arg0: i32) -> (i32, i32) {
    %c0_i32 = arith.constant 0 : i32
    %c0_i32_0 = arith.constant 0 : i32
    %c0_i32_1 = arith.constant 0 : i32
    return %c0_i32, %c0_i32_0 : i32, i32
  }
  func.func @transform_11(%arg0: i32) -> (i32, i32) {
    %c0_i32 = arith.constant 0 : i32
    %c0_i32_0 = arith.constant 0 : i32
    %c0_i32_1 = arith.constant 0 : i32
    return %c0_i32, %c0_i32_0 : i32, i32
  }
  func.func @transform_12(%arg0: i32) -> (i32, i32) {
    %c0_i32 = arith.constant 0 : i32
    %c0_i32_0 = arith.constant 0 : i32
    %c0_i32_1 = arith.constant 0 : i32
    return %c0_i32, %c0_i32_0 : i32, i32
  }
  func.func @transform_13(%arg0: i32) -> (i32, i32) {
    %c0_i32 = arith.constant 0 : i32
    %c0_i32_0 = arith.constant 0 : i32
    %c0_i32_1 = arith.constant 0 : i32
    return %c0_i32, %c0_i32_0 : i32, i32
  }
  func.func @transform_14(%arg0: i32) -> (i32, i32) {
    %c0_i32 = arith.constant 0 : i32
    %c0_i32_0 = arith.constant 0 : i32
    %c0_i32_1 = arith.constant 0 : i32
    return %c0_i32, %c0_i32_0 : i32, i32
  }
  func.func @transform_15(%arg0: i32) -> (i32, i32) {
    %c0_i32 = arith.constant 0 : i32
    %c0_i32_0 = arith.constant 0 : i32
    %c0_i32_1 = arith.constant 0 : i32
    return %c0_i32, %c0_i32_0 : i32, i32
  }
  func.func @transform_16(%arg0: i32) -> (i32, i32) {
    %c0_i32 = arith.constant 0 : i32
    %c0_i32_0 = arith.constant 0 : i32
    return %arg0, %c0_i32 : i32, i32
  }
}

</mosaic_0001>

<llo_original>
// kernel: ddsp_decoder_forward.4
$region0: #{ddsp_decoder_forward.4}
  #allocation0 [shape = 'u32[]', space=smem, size = 0x4, offset = 0x4, fixed_abs, tag = 'smem constant byte address 0x4 - core index']
  #allocation1 [shape = 'u32[72,128]{1,0:T(1,128)}', space=vmem, size = 0x9000, scoped, tag = 'internal scratch']
  #allocation2 [shape = 'f32[2,32]{1,0:T(2,128)}', space=vmem, size = 0x400, scoped, tag = 'scratch operand']
  %s0 = inlined_call_operand.vmem [shape: f32[8,2,32], index: 0, kind: input, shape index: {}]
  %s1 = inlined_call_operand.vmem [shape: f32[8,2,32], index: 1, kind: input, shape index: {}]
  %s2 = inlined_call_operand.vmem [shape: f32[8,2,32], index: 2, kind: input, shape index: {}]
  %s3 = inlined_call_operand.hbm [shape: bf16[3,32,32], index: 3, kind: input, shape index: {}]
  %s4 = inlined_call_operand.hbm [shape: f32[1,32], index: 4, kind: input, shape index: {}]
  %s5 = inlined_call_operand.vmem [shape: f32[8,2,32], index: 5, kind: output, shape index: {}]
  %s6 = sld [smem:[#allocation0]]
  $region49: #{ddsp_decoder_forward.4} parent=0
    _
  %s8 = ssub.s32 1, %s6
  %s9 = scalar_select 0, %s8, %s6
  $region1: #{ddsp_decoder_forward.4} parent=0
    #allocation3 [shape = 'u8[24576]{0}', space=vmem, size = 0x6000, scoped, tag = 'input window, operand 3, single buffered']
    #allocation4 [shape = 's32[1]{0}', space=sflag, size = 0x4, scoped, tag = 'scoped memory for ddsp_decoder_forward.4']
    #allocation5 [shape = 'u8[512]{0}', space=vmem, size = 0x400, scoped, tag = 'input window, operand 4, single buffered']
    #allocation6 [shape = 's32[1]{0}', space=sflag, size = 0x4, scoped, tag = 'scoped memory for ddsp_decoder_forward.4']
    %10 = vsyncpa [#allocation4], 0
    %11 = vsyncpa [#allocation6], 0
    // Predicated region
    $region2: #{ddsp_decoder_forward.4} parent=1 // pred_check
      _
    $region3: #{ddsp_decoder_forward.4} parent=1 // pred_check_branch
      %13 = sbr.rel (0) target = $region5
    $region4: #{ddsp_decoder_forward.4} parent=1 // pred_region
      _
    $region5: #{ddsp_decoder_forward.4} parent=1 // pred_fallthru
      _
    // Predicated region
    $region6: #{ddsp_decoder_forward.4} parent=1 // pred_check
      _
    $region7: #{ddsp_decoder_forward.4} parent=1 // pred_check_branch
      %15 = sbr.rel (0) target = $region9
    $region8: #{ddsp_decoder_forward.4} parent=1 // pred_region
      _
    $region9: #{ddsp_decoder_forward.4} parent=1 // pred_fallthru
      _
    // Predicated region
    $region10: #{ddsp_decoder_forward.4} parent=1 // pred_check
      _
    $region11: #{ddsp_decoder_forward.4} parent=1 // pred_check_branch
      %17 = sbr.rel (0) target = $region13
    $region12: #{ddsp_decoder_forward.4} parent=1 // pred_region
      _
    $region13: #{ddsp_decoder_forward.4} parent=1 // pred_fallthru
      _
    // Predicated region
    $region14: #{ddsp_decoder_forward.4} parent=1 // pred_check
      _
    $region15: #{ddsp_decoder_forward.4} parent=1 // pred_check_branch
      %19 = sbr.rel (0) target = $region17
    $region16: #{ddsp_decoder_forward.4} parent=1 // pred_region
      %21 = vsyncadd [#allocation4], 0
      %s22 = sshll.u32 %s3, 4
      %s23 = int_to_ptr.hbm [resolvable:$true] %s22
      %s24 = sshll.u32 [#allocation3], 4
      %s25 = int_to_ptr.vmem [resolvable:$true] %s24
      %30 = dma.hbm_to_vmem [thread:$0]  %s23, 768, %s25, [#allocation4], 64, 64, 4
    $region17: #{ddsp_decoder_forward.4} parent=1 // pred_fallthru
      _
    // Predicated region
    $region18: #{ddsp_decoder_forward.4} parent=1 // pred_check
      _
    $region19: #{ddsp_decoder_forward.4} parent=1 // pred_check_branch
      %32 = sbr.rel (0) target = $region21
    $region20: #{ddsp_decoder_forward.4} parent=1 // pred_region
      %34 = vsyncadd [#allocation6], 0
      %s36 = sshll.u32 %s4, 4
      %s37 = int_to_ptr.hbm [resolvable:$true] %s36
      %s38 = sshll.u32 [#allocation5], 4
      %s39 = int_to_ptr.vmem [resolvable:$true] %s38
      %41 = dma.hbm_to_vmem [thread:$0]  %s37, 16, %s39, [#allocation6]
    $region21: #{ddsp_decoder_forward.4} parent=1 // pred_fallthru
      _
    // Predicated region
    $region22: #{ddsp_decoder_forward.4} parent=1 // pred_check
      _
    $region23: #{ddsp_decoder_forward.4} parent=1 // pred_check_branch
      %43 = sbr.rel (0) target = $region25
    $region24: #{ddsp_decoder_forward.4} parent=1 // pred_region
      %45 = dma.done [#allocation4], 768
    $region25: #{ddsp_decoder_forward.4} parent=1 // pred_fallthru
      _
    // Predicated region
    $region26: #{ddsp_decoder_forward.4} parent=1 // pred_check
      _
    $region27: #{ddsp_decoder_forward.4} parent=1 // pred_check_branch
      %47 = sbr.rel (0) target = $region29
    $region28: #{ddsp_decoder_forward.4} parent=1 // pred_region
      %49 = dma.done [#allocation6], 16
    $region29: #{ddsp_decoder_forward.4} parent=1 // pred_fallthru
      _
    %p51 = scmp.eq.s32.totalorder 0, 0
    // Predicated region
    $region30: #{ddsp_decoder_forward.4} parent=1 // pred_check
      %p52 = pneg %p51
    $region31: #{ddsp_decoder_forward.4} parent=1 // pred_check_branch
      %54 = sbr.rel (%p52) target = $region33
    $region32: #{ddsp_decoder_forward.4} parent=1 // pred_region
      %vm55 = vcmask 254976
      %56 = vst.msk [vmem:[#allocation2] sm:$0x3] %vm55, 0.0
    $region33: #{ddsp_decoder_forward.4} parent=1 // pred_fallthru
      _
    %v57 = vld [vmem:[#allocation3] sm:$0xf]
    %v58 = vld [vmem:[#allocation3 + $0x4] sm:$0xf]
    %v59 = vld [vmem:[#allocation3 + $0x8] sm:$0xf]
    %v60 = vld [vmem:[#allocation3 + $0xc] sm:$0xf]
    %s61 = scalar_lea.vmem [#allocation3], 16
    %v62 = vld [vmem:[%s61] sm:$0xf]
    %v63 = vld [vmem:[%s61 + $0x4] sm:$0xf]
    %v64 = vld [vmem:[%s61 + $0x8] sm:$0xf]
    %v65 = vld [vmem:[%s61 + $0xc] sm:$0xf]
    %s66 = scalar_lea.vmem [#allocation3], 32
    %v67 = vld [vmem:[%s66] sm:$0xf]
    %v68 = vld [vmem:[%s66 + $0x4] sm:$0xf]
    %v69 = vld [vmem:[%s66 + $0x8] sm:$0xf]
    %v70 = vld [vmem:[%s66 + $0xc] sm:$0xf]
    %v71 = vld [vmem:[#allocation5] sm:$0x1]
    %v72 = vld [vmem:[#allocation2] sm:$0x3]
    loop: start=0, step=1, limit=8
    $region34: #{ddsp_decoder_forward.4} parent=1 // loop_pre_header
      _
    $region35: #{ddsp_decoder_forward.4} parent=1 // loop_header
      %s74 = sphi 0, %s78
      %p75 = scmp.ge.s32.totalorder %s74, 8
      %v79 = vphi %v72, %v215
    $region36: #{ddsp_decoder_forward.4} parent=1 // loop_header_branch
      %77 = sbr.rel (%p75) target = $region40
    $region37: #{ddsp_decoder_forward.4} parent=1 // loop_body
      %v80 = vpack.c.bf16 %v79, %v79
      %v85 = vunpack.c.l.b16 %v57
      %v86 = vunpack.c.l.b16 %v58
      %v87 = vunpack.c.l.b16 %v59
      %v88 = vunpack.c.l.b16 %v60
      %v89 = vpack.c.b16 %v86, %v85
      %v90 = vpack.c.b16 %v88, %v87
      %vm93 = vcmask 261120
      %v95 = vsel %vm93, %v80, 0
      %97 = vmatpush.bf16.msra.mxu0 0
      %98 = vmatpush.bf16.msra.mxu0 0
      %99 = vmatpush.bf16.msra.mxu0 0
      %100 = vmatpush.bf16.msra.mxu0 0
      %101 = vmatpush.bf16.msra.mxu0 0
      %102 = vmatpush.bf16.msra.mxu0 0
      %103 = vmatpush.bf16.msra.mxu0 %v90
      %104 = vmatpush.bf16.msra.mxu0 %v89
      %105 = vmatmul.bf16.gmra.mxu0 %v95
      %v106 = vpop.f32.mrf.mxu0
      %v107 = vadd.f32 0.0, %v106
      %v108 = vpop.f32.mrf.mxu0
      %109 = vdwg.mxu0
      %v114 = vunpack.c.l.b16 %v62
      %v115 = vunpack.c.l.b16 %v63
      %v116 = vunpack.c.l.b16 %v64
      %v117 = vunpack.c.l.b16 %v65
      %v118 = vpack.c.b16 %v115, %v114
      %v119 = vpack.c.b16 %v117, %v116
      %122 = vmatpush.bf16.msra.mxu0 0
      %123 = vmatpush.bf16.msra.mxu0 0
      %124 = vmatpush.bf16.msra.mxu0 0
      %125 = vmatpush.bf16.msra.mxu0 0
      %126 = vmatpush.bf16.msra.mxu0 0
      %127 = vmatpush.bf16.msra.mxu0 0
      %128 = vmatpush.bf16.msra.mxu0 %v119
      %129 = vmatpush.bf16.msra.mxu0 %v118
      %130 = vmatmul.bf16.gmra.mxu0 %v95
      %v131 = vpop.f32.mrf.mxu0
      %v132 = vadd.f32 0.0, %v131
      %v133 = vpop.f32.mrf.mxu0
      %134 = vdwg.mxu0
      %v136 = vperm.slane %v71, 0
      %v142 = vunpack.c.l.b16 %v67
      %v143 = vunpack.c.l.b16 %v68
      %v144 = vunpack.c.l.b16 %v69
      %v145 = vunpack.c.l.b16 %v70
      %v146 = vpack.c.b16 %v143, %v142
      %v147 = vpack.c.b16 %v145, %v144
      %150 = vmatpush.bf16.msra.mxu0 0
      %151 = vmatpush.bf16.msra.mxu0 0
      %152 = vmatpush.bf16.msra.mxu0 0
      %153 = vmatpush.bf16.msra.mxu0 0
      %154 = vmatpush.bf16.msra.mxu0 0
      %155 = vmatpush.bf16.msra.mxu0 0
      %156 = vmatpush.bf16.msra.mxu0 %v147
      %157 = vmatpush.bf16.msra.mxu0 %v146
      %158 = vmatmul.bf16.gmra.mxu0 %v95
      %v159 = vpop.f32.mrf.mxu0
      %v160 = vadd.f32 %v136, %v159
      %v161 = vpop.f32.mrf.mxu0
      %162 = vdwg.mxu0
      %s163 = smul.u32 %s74, 2
      %s164 = scalar_lea.vmem %s0, %s163
      %v165 = vld [vmem:[%s164] sm:$0x3]
      %v166 = vadd.f32 %v165, %v107
      %v167 = vxor.u32 %v166, 2147483648
      %v168 = vmul.f32 %v167, 1.442695
      %v169 = vpow.pop %v168
      %v170 = vadd.f32 %v169, 1.0
      %v171 = vrcp.pop %v170
      %v172 = vmul.f32 %v170, %v171
      %v173 = vsub.f32 1.0, %v172
      %v174 = vmul.f32 %v171, %v173
      %v175 = vadd.f32 %v171, %v174
      %vm176 = vweird.f32 %v170
      %vm177 = vweird.f32 %v171
      %vm178 = vmor %vm176, %vm177
      %v179 = vsel %vm178, %v171, %v175
      %v180 = vand.u32 2147483647, %v170
      %vm181 = vcmp.eq.f32.partialorder %v180, 8.507059e+37
      %v182 = vand.u32 %v170, 2147483648
      %v183 = vor.u32 1.1754944e-38, %v182
      %v184 = vsel %vm181, %v183, %v179
      %v185 = vmul.f32 1.0, %v184
      %s186 = scalar_lea.vmem %s1, %s163
      %v187 = vld [vmem:[%s186] sm:$0x3]
      %v188 = vadd.f32 %v187, %v132
      %v189 = vxor.u32 %v188, 2147483648
      %v190 = vmul.f32 %v189, 1.442695
      %v191 = vpow.pop %v190
      %v192 = vadd.f32 %v191, 1.0
      %v193 = vrcp.pop %v192
      %v194 = vmul.f32 %v192, %v193
      %v195 = vsub.f32 1.0, %v194
      %v196 = vmul.f32 %v193, %v195
      %v197 = vadd.f32 %v193, %v196
      %vm198 = vweird.f32 %v192
      %vm199 = vweird.f32 %v193
      %vm200 = vmor %vm198, %vm199
      %v201 = vsel %vm200, %v193, %v197
      %v202 = vand.u32 2147483647, %v192
      %vm203 = vcmp.eq.f32.partialorder %v202, 8.507059e+37
      %v204 = vand.u32 %v192, 2147483648
      %v205 = vor.u32 1.1754944e-38, %v204
      %v206 = vsel %vm203, %v205, %v201
      %v207 = vmul.f32 1.0, %v206
      %s208 = scalar_lea.vmem %s2, %s163
      %v209 = vld [vmem:[%s208] sm:$0x3]
      %v210 = vmul.f32 %v185, %v160
      %v211 = vadd.f32 %v209, %v210
      %v212 = vtanh.pop %v211
      %v213 = vsub.f32 %v79, %v212
      %v214 = vmul.f32 %v207, %v213
      %v215 = vadd.f32 %v212, %v214
      %s216 = scalar_lea.vmem %s5, %s163
      %vm217 = vcmask 254976
      %218 = vst.msk [vmem:[%s216] sm:$0x3] %vm217, %v215
    $region38: #{ddsp_decoder_forward.4} parent=1 // loop_footer
      %s78 = sadd.s32 1, %s74
    $region39: #{ddsp_decoder_forward.4} parent=1 // loop_footer_branch
      %73 = sbr.rel target = $region35
    $region40: #{ddsp_decoder_forward.4} parent=1 // loop_exit
      _
    %vm219 = vcmask 254976
    %220 = vst.msk [vmem:[#allocation2] sm:$0x3] %vm219, %v79
    // Predicated region
    $region41: #{ddsp_decoder_forward.4} parent=1 // pred_check
      _
    $region42: #{ddsp_decoder_forward.4} parent=1 // pred_check_branch
      %222 = sbr.rel (0) target = $region44
    $region43: #{ddsp_decoder_forward.4} parent=1 // pred_region
      _
    $region44: #{ddsp_decoder_forward.4} parent=1 // pred_fallthru
      _
    // Predicated region
    $region45: #{ddsp_decoder_forward.4} parent=1 // pred_check
      _
    $region46: #{ddsp_decoder_forward.4} parent=1 // pred_check_branch
      %224 = sbr.rel (0) target = $region48
    $region47: #{ddsp_decoder_forward.4} parent=1 // pred_region
      _
    $region48: #{ddsp_decoder_forward.4} parent=1 // pred_fallthru
      _
    %225 = vsyncpa [#allocation4], 1
    %226 = vsyncpa [#allocation6], 1

// kernel: ddsp_decoder_forward.5
$region0: #{ddsp_decoder_forward.5}
  #allocation0 [shape = 'u32[]', space=smem, size = 0x4, offset = 0x4, fixed_abs, tag = 'smem constant byte address 0x4 - core index']
  #allocation1 [shape = 'u32[72,128]{1,0:T(1,128)}', space=vmem, size = 0x9000, scoped, tag = 'internal scratch']
  %s0 = inlined_call_operand.vmem [shape: f32[16,32], index: 0, kind: input, shape index: {}]
  %s1 = inlined_call_operand.vmem [shape: bf16[2,16,32], index: 1, kind: input, shape index: {}]
  %s2 = inlined_call_operand.vmem [shape: bf16[3,32,32], index: 2, kind: input, shape index: {}]
  %s3 = inlined_call_operand.hbm [shape: f32[1,32], index: 3, kind: input, shape index: {}]
  %s4 = inlined_call_operand.vmem [shape: f32[1,32], index: 4, kind: input, shape index: {}, may-alias: {4,8,12}]
  %s5 = inlined_call_operand.vmem [shape: f32[1,32], index: 5, kind: input, shape index: {}, may-alias: {5,9,13}]
  %s6 = inlined_call_operand.hbm [shape: bf16[32,32], index: 6, kind: input, shape index: {}]
  %s7 = inlined_call_operand.hbm [shape: f32[1,32], index: 7, kind: input, shape index: {}]
  %s8 = inlined_call_operand.vmem [shape: f32[1,32], index: 8, kind: input, shape index: {}, may-alias: {4,8,12}]
  %s9 = inlined_call_operand.vmem [shape: f32[1,32], index: 9, kind: input, shape index: {}, may-alias: {5,9,13}]
  %s10 = inlined_call_operand.hbm [shape: bf16[32,32], index: 10, kind: input, shape index: {}]
  %s11 = inlined_call_operand.hbm [shape: f32[1,32], index: 11, kind: input, shape index: {}]
  %s12 = inlined_call_operand.vmem [shape: f32[1,32], index: 12, kind: input, shape index: {}, may-alias: {4,8,12}]
  %s13 = inlined_call_operand.vmem [shape: f32[1,32], index: 13, kind: input, shape index: {}, may-alias: {5,9,13}]
  %s14 = inlined_call_operand.vmem [shape: bf16[32,128], index: 14, kind: input, shape index: {}]
  %s15 = inlined_call_operand.hbm [shape: f32[1,128], index: 15, kind: input, shape index: {}]
  %s16 = inlined_call_operand.vmem [shape: f32[16,128], index: 16, kind: output, shape index: {}]
  %s17 = sld [smem:[#allocation0]]
  $region98: #{ddsp_decoder_forward.5} parent=0
    _
  %s19 = ssub.s32 1, %s17
  %s20 = scalar_select 0, %s19, %s17
  $region1: #{ddsp_decoder_forward.5} parent=0
    #allocation2 [shape = 'u8[512]{0}', space=vmem, size = 0x400, scoped, tag = 'input window, operand 3, single buffered']
    #allocation3 [shape = 's32[1]{0}', space=sflag, size = 0x4, scoped, tag = 'scoped memory for ddsp_decoder_forward.5']
    #allocation4 [shape = 'u8[8192]{0}', space=vmem, size = 0x2000, scoped, tag = 'input window, operand 6, single buffered']
    #allocation5 [shape = 's32[1]{0}', space=sflag, size = 0x4, scoped, tag = 'scoped memory for ddsp_decoder_forward.5']
    #allocation6 [shape = 'u8[512]{0}', space=vmem, size = 0x400, scoped, tag = 'input window, operand 7, single buffered']
    #allocation7 [shape = 'u8[8192]{0}', space=vmem, size = 0x2000, scoped, tag = 'input window, operand 10, single buffered']
    #allocation8 [shape = 's32[1]{0}', space=sflag, size = 0x4, scoped, tag = 'scoped memory for ddsp_decoder_forward.5']
    #allocation9 [shape = 'u8[512]{0}', space=vmem, size = 0x400, scoped, tag = 'input window, operand 11, single buffered']
    #allocation10 [shape = 'u8[512]{0}', space=vmem, size = 0x400, scoped, tag = 'input window, operand 15, single buffered']
    #allocation11 [shape = 's32[1]{0}', space=sflag, size = 0x4, scoped, tag = 'scoped memory for ddsp_decoder_forward.5']
    %21 = vsyncpa [#allocation3], 0
    %22 = vsyncpa [#allocation5], 0
    %23 = vsyncpa [#allocation8], 0
    %24 = vsyncpa [#allocation11], 0
    // Predicated region
    $region2: #{ddsp_decoder_forward.5} parent=1 // pred_check
      _
    $region3: #{ddsp_decoder_forward.5} parent=1 // pred_check_branch
      %26 = sbr.rel (0) target = $region5
    $region4: #{ddsp_decoder_forward.5} parent=1 // pred_region
      _
    $region5: #{ddsp_decoder_forward.5} parent=1 // pred_fallthru
      _
    // Predicated region
    $region6: #{ddsp_decoder_forward.5} parent=1 // pred_check
      _
    $region7: #{ddsp_decoder_forward.5} parent=1 // pred_check_branch
      %28 = sbr.rel (0) target = $region9
    $region8: #{ddsp_decoder_forward.5} parent=1 // pred_region
      _
    $region9: #{ddsp_decoder_forward.5} parent=1 // pred_fallthru
      _
    // Predicated region
    $region10: #{ddsp_decoder_forward.5} parent=1 // pred_check
      _
    $region11: #{ddsp_decoder_forward.5} parent=1 // pred_check_branch
      %30 = sbr.rel (0) target = $region13
    $region12: #{ddsp_decoder_forward.5} parent=1 // pred_region
      _
    $region13: #{ddsp_decoder_forward.5} parent=1 // pred_fallthru
      _
    // Predicated region
    $region14: #{ddsp_decoder_forward.5} parent=1 // pred_check
      _
    $region15: #{ddsp_decoder_forward.5} parent=1 // pred_check_branch
      %32 = sbr.rel (0) target = $region17
    $region16: #{ddsp_decoder_forward.5} parent=1 // pred_region
      %34 = vsyncadd [#allocation3], 0
      %s36 = sshll.u32 %s3, 4
      %s37 = int_to_ptr.hbm [resolvable:$true] %s36
      %s38 = sshll.u32 [#allocation2], 4
      %s39 = int_to_ptr.vmem [resolvable:$true] %s38
      %41 = dma.hbm_to_vmem [thread:$0]  %s37, 16, %s39, [#allocation3]
    $region17: #{ddsp_decoder_forward.5} parent=1 // pred_fallthru
      _
    // Predicated region
    $region18: #{ddsp_decoder_forward.5} parent=1 // pred_check
      _
    $region19: #{ddsp_decoder_forward.5} parent=1 // pred_check_branch
      %43 = sbr.rel (0) target = $region21
    $region20: #{ddsp_decoder_forward.5} parent=1 // pred_region
      _
    $region21: #{ddsp_decoder_forward.5} parent=1 // pred_fallthru
      _
    // Predicated region
    $region22: #{ddsp_decoder_forward.5} parent=1 // pred_check
      _
    $region23: #{ddsp_decoder_forward.5} parent=1 // pred_check_branch
      %45 = sbr.rel (0) target = $region25
    $region24: #{ddsp_decoder_forward.5} parent=1 // pred_region
      _
    $region25: #{ddsp_decoder_forward.5} parent=1 // pred_fallthru
      _
    // Predicated region
    $region26: #{ddsp_decoder_forward.5} parent=1 // pred_check
      _
    $region27: #{ddsp_decoder_forward.5} parent=1 // pred_check_branch
      %47 = sbr.rel (0) target = $region29
    $region28: #{ddsp_decoder_forward.5} parent=1 // pred_region
      %49 = vsyncadd [#allocation5], 0
      %s50 = sshll.u32 %s6, 4
      %s51 = int_to_ptr.hbm [resolvable:$true] %s50
      %s52 = sshll.u32 [#allocation4], 4
      %s53 = int_to_ptr.vmem [resolvable:$true] %s52
      %58 = dma.hbm_to_vmem [thread:$0]  %s51, 256, %s53, [#allocation5], 64, 64, 4
    $region29: #{ddsp_decoder_forward.5} parent=1 // pred_fallthru
      _
    // Predicated region
    $region30: #{ddsp_decoder_forward.5} parent=1 // pred_check
      _
    $region31: #{ddsp_decoder_forward.5} parent=1 // pred_check_branch
      %60 = sbr.rel (0) target = $region33
    $region32: #{ddsp_decoder_forward.5} parent=1 // pred_region
      %62 = vsyncadd [#allocation5], 0
      %s64 = sshll.u32 %s7, 4
      %s65 = int_to_ptr.hbm [resolvable:$true] %s64
      %s66 = sshll.u32 [#allocation6], 4
      %s67 = int_to_ptr.vmem [resolvable:$true] %s66
      %69 = dma.hbm_to_vmem [thread:$0]  %s65, 16, %s67, [#allocation5]
    $region33: #{ddsp_decoder_forward.5} parent=1 // pred_fallthru
      _
    // Predicated region
    $region34: #{ddsp_decoder_forward.5} parent=1 // pred_check
      _
    $region35: #{ddsp_decoder_forward.5} parent=1 // pred_check_branch
      %71 = sbr.rel (0) target = $region37
    $region36: #{ddsp_decoder_forward.5} parent=1 // pred_region
      _
    $region37: #{ddsp_decoder_forward.5} parent=1 // pred_fallthru
      _
    // Predicated region
    $region38: #{ddsp_decoder_forward.5} parent=1 // pred_check
      _
    $region39: #{ddsp_decoder_forward.5} parent=1 // pred_check_branch
      %73 = sbr.rel (0) target = $region41
    $region40: #{ddsp_decoder_forward.5} parent=1 // pred_region
      _
    $region41: #{ddsp_decoder_forward.5} parent=1 // pred_fallthru
      _
    // Predicated region
    $region42: #{ddsp_decoder_forward.5} parent=1 // pred_check
      _
    $region43: #{ddsp_decoder_forward.5} parent=1 // pred_check_branch
      %75 = sbr.rel (0) target = $region45
    $region44: #{ddsp_decoder_forward.5} parent=1 // pred_region
      %77 = vsyncadd [#allocation8], 0
      %s78 = sshll.u32 %s10, 4
      %s79 = int_to_ptr.hbm [resolvable:$true] %s78
      %s80 = sshll.u32 [#allocation7], 4
      %s81 = int_to_ptr.vmem [resolvable:$true] %s80
      %86 = dma.hbm_to_vmem [thread:$0]  %s79, 256, %s81, [#allocation8], 64, 64, 4
    $region45: #{ddsp_decoder_forward.5} parent=1 // pred_fallthru
      _
    // Predicated region
    $region46: #{ddsp_decoder_forward.5} parent=1 // pred_check
      _
    $region47: #{ddsp_decoder_forward.5} parent=1 // pred_check_branch
      %88 = sbr.rel (0) target = $region49
    $region48: #{ddsp_decoder_forward.5} parent=1 // pred_region
      %90 = vsyncadd [#allocation8], 0
      %s92 = sshll.u32 %s11, 4
      %s93 = int_to_ptr.hbm [resolvable:$true] %s92
      %s94 = sshll.u32 [#allocation9], 4
      %s95 = int_to_ptr.vmem [resolvable:$true] %s94
      %97 = dma.hbm_to_vmem [thread:$0]  %s93, 16, %s95, [#allocation8]
    $region49: #{ddsp_decoder_forward.5} parent=1 // pred_fallthru
      _
    // Predicated region
    $region50: #{ddsp_decoder_forward.5} parent=1 // pred_check
      _
    $region51: #{ddsp_decoder_forward.5} parent=1 // pred_check_branch
      %99 = sbr.rel (0) target = $region53
    $region52: #{ddsp_decoder_forward.5} parent=1 // pred_region
      _
    $region53: #{ddsp_decoder_forward.5} parent=1 // pred_fallthru
      _
    // Predicated region
    $region54: #{ddsp_decoder_forward.5} parent=1 // pred_check
      _
    $region55: #{ddsp_decoder_forward.5} parent=1 // pred_check_branch
      %101 = sbr.rel (0) target = $region57
    $region56: #{ddsp_decoder_forward.5} parent=1 // pred_region
      _
    $region57: #{ddsp_decoder_forward.5} parent=1 // pred_fallthru
      _
    // Predicated region
    $region58: #{ddsp_decoder_forward.5} parent=1 // pred_check
      _
    $region59: #{ddsp_decoder_forward.5} parent=1 // pred_check_branch
      %103 = sbr.rel (0) target = $region61
    $region60: #{ddsp_decoder_forward.5} parent=1 // pred_region
      _
    $region61: #{ddsp_decoder_forward.5} parent=1 // pred_fallthru
      _
    // Predicated region
    $region62: #{ddsp_decoder_forward.5} parent=1 // pred_check
      _
    $region63: #{ddsp_decoder_forward.5} parent=1 // pred_check_branch
      %105 = sbr.rel (0) target = $region65
    $region64: #{ddsp_decoder_forward.5} parent=1 // pred_region
      %107 = vsyncadd [#allocation11], 0
      %s109 = sshll.u32 %s15, 4
      %s110 = int_to_ptr.hbm [resolvable:$true] %s109
      %s111 = sshll.u32 [#allocation10], 4
      %s112 = int_to_ptr.vmem [resolvable:$true] %s111
      %114 = dma.hbm_to_vmem [thread:$0]  %s110, 16, %s112, [#allocation11]
    $region65: #{ddsp_decoder_forward.5} parent=1 // pred_fallthru
      _
    // Predicated region
    $region66: #{ddsp_decoder_forward.5} parent=1 // pred_check
      _
    $region67: #{ddsp_decoder_forward.5} parent=1 // pred_check_branch
      %116 = sbr.rel (0) target = $region69
    $region68: #{ddsp_decoder_forward.5} parent=1 // pred_region
      %118 = dma.done [#allocation3], 16
    $region69: #{ddsp_decoder_forward.5} parent=1 // pred_fallthru
      _
    // Predicated region
    $region70: #{ddsp_decoder_forward.5} parent=1 // pred_check
      _
    $region71: #{ddsp_decoder_forward.5} parent=1 // pred_check_branch
      %120 = sbr.rel (0) target = $region73
    $region72: #{ddsp_decoder_forward.5} parent=1 // pred_region
      %122 = dma.done [#allocation5], 256
    $region73: #{ddsp_decoder_forward.5} parent=1 // pred_fallthru
      _
    // Predicated region
    $region74: #{ddsp_decoder_forward.5} parent=1 // pred_check
      _
    $region75: #{ddsp_decoder_forward.5} parent=1 // pred_check_branch
      %124 = sbr.rel (0) target = $region77
    $region76: #{ddsp_decoder_forward.5} parent=1 // pred_region
      %126 = dma.done [#allocation5], 16
    $region77: #{ddsp_decoder_forward.5} parent=1 // pred_fallthru
      _
    // Predicated region
    $region78: #{ddsp_decoder_forward.5} parent=1 // pred_check
      _
    $region79: #{ddsp_decoder_forward.5} parent=1 // pred_check_branch
      %128 = sbr.rel (0) target = $region81
    $region80: #{ddsp_decoder_forward.5} parent=1 // pred_region
      %130 = dma.done [#allocation8], 256
    $region81: #{ddsp_decoder_forward.5} parent=1 // pred_fallthru
      _
    // Predicated region
    $region82: #{ddsp_decoder_forward.5} parent=1 // pred_check
      _
    $region83: #{ddsp_decoder_forward.5} parent=1 // pred_check_branch
      %132 = sbr.rel (0) target = $region85
    $region84: #{ddsp_decoder_forward.5} parent=1 // pred_region
      %134 = dma.done [#allocation8], 16
    $region85: #{ddsp_decoder_forward.5} parent=1 // pred_fallthru
      _
    // Predicated region
    $region86: #{ddsp_decoder_forward.5} parent=1 // pred_check
      _
    $region87: #{ddsp_decoder_forward.5} parent=1 // pred_check_branch
      %136 = sbr.rel (0) target = $region89
    $region88: #{ddsp_decoder_forward.5} parent=1 // pred_region
      %138 = dma.done [#allocation11], 16
    $region89: #{ddsp_decoder_forward.5} parent=1 // pred_fallthru
      _
    %v140 = vld [vmem:[%s0] sm:$0xff]
    %v141 = vld [vmem:[%s0 + $0x8] sm:$0xff]
    %v142 = vpack.c.bf16 %v141, %v140
    %v143 = vld [vmem:[%s1] sm:$0xf]
    %v144 = vld [vmem:[%s1 + $0x4] sm:$0xf]
    %s145 = scalar_lea.vmem %s1, 8
    %v146 = vld [vmem:[%s145] sm:$0xf]
    %v147 = vld [vmem:[%s145 + $0x4] sm:$0xf]
    %v148 = vld [vmem:[%s2] sm:$0xf]
    %v149 = vld [vmem:[%s2 + $0x4] sm:$0xf]
    %v150 = vld [vmem:[%s2 + $0x8] sm:$0xf]
    %v151 = vld [vmem:[%s2 + $0xc] sm:$0xf]
    %s152 = scalar_lea.vmem %s2, 16
    %v153 = vld [vmem:[%s152] sm:$0xf]
    %v154 = vld [vmem:[%s152 + $0x4] sm:$0xf]
    %v155 = vld [vmem:[%s152 + $0x8] sm:$0xf]
    %v156 = vld [vmem:[%s152 + $0xc] sm:$0xf]
    %v159 = vunpack.c.l.b16 %v143
    %v160 = vunpack.c.l.b16 %v144
    %v161 = vpack.c.b16 %v160, %v159
    %v166 = vunpack.c.l.b16 %v153
    %v167 = vunpack.c.l.b16 %v154
    %v168 = vunpack.c.l.b16 %v155
    %v169 = vunpack.c.l.b16 %v156
    %v170 = vpack.c.b16 %v167, %v166
    %v171 = vpack.c.b16 %v169, %v168
    %vm174 = vcmask 261120
    %v176 = vsel %vm174, %v161, 0
    %178 = vmatpush.bf16.msra.mxu0 0
    %179 = vmatpush.bf16.msra.mxu0 0
    %180 = vmatpush.bf16.msra.mxu0 0
    %181 = vmatpush.bf16.msra.mxu0 0
    %182 = vmatpush.bf16.msra.mxu0 0
    %183 = vmatpush.bf16.msra.mxu0 0
    %184 = vmatpush.bf16.msra.mxu0 %v171
    %185 = vmatpush.bf16.msra.mxu0 %v170
    %186 = vmatmul.bf16.gmra.mxu0 %v176
    %v187 = vpop.f32.mrf.mxu0
    %v188 = vadd.f32 0.0, %v187
    %v189 = vpop.f32.mrf.mxu0
    %v190 = vadd.f32 0.0, %v189
    %191 = vdwg.mxu0
    %v196 = vunpack.c.l.b16 %v148
    %v197 = vunpack.c.l.b16 %v149
    %v198 = vunpack.c.l.b16 %v150
    %v199 = vunpack.c.l.b16 %v151
    %v200 = vpack.c.b16 %v197, %v196
    %v201 = vpack.c.b16 %v199, %v198
    %v205 = vsel %vm174, %v142, 0
    %207 = vmatpush.bf16.msra.mxu0 0
    %208 = vmatpush.bf16.msra.mxu0 0
    %209 = vmatpush.bf16.msra.mxu0 0
    %210 = vmatpush.bf16.msra.mxu0 0
    %211 = vmatpush.bf16.msra.mxu0 0
    %212 = vmatpush.bf16.msra.mxu0 0
    %213 = vmatpush.bf16.msra.mxu0 %v201
    %214 = vmatpush.bf16.msra.mxu0 %v200
    %215 = vmatmul.bf16.gmra.mxu0 %v205
    %v216 = vpop.f32.mrf.mxu0
    %v217 = vadd.f32 %v188, %v216
    %v218 = vpop.f32.mrf.mxu0
    %v219 = vadd.f32 %v190, %v218
    %220 = vdwg.mxu0
    %s221 = scalar_lea.vmem %s2, 32
    %v222 = vld [vmem:[%s221] sm:$0xf]
    %v223 = vld [vmem:[%s221 + $0x4] sm:$0xf]
    %v224 = vld [vmem:[%s221 + $0x8] sm:$0xf]
    %v225 = vld [vmem:[%s221 + $0xc] sm:$0xf]
    %v228 = vunpack.c.l.b16 %v146
    %v229 = vunpack.c.l.b16 %v147
    %v230 = vpack.c.b16 %v229, %v228
    %v235 = vunpack.c.l.b16 %v222
    %v236 = vunpack.c.l.b16 %v223
    %v237 = vunpack.c.l.b16 %v224
    %v238 = vunpack.c.l.b16 %v225
    %v239 = vpack.c.b16 %v236, %v235
    %v240 = vpack.c.b16 %v238, %v237
    %v244 = vsel %vm174, %v230, 0
    %246 = vmatpush.bf16.msra.mxu0 0
    %247 = vmatpush.bf16.msra.mxu0 0
    %248 = vmatpush.bf16.msra.mxu0 0
    %249 = vmatpush.bf16.msra.mxu0 0
    %250 = vmatpush.bf16.msra.mxu0 0
    %251 = vmatpush.bf16.msra.mxu0 0
    %252 = vmatpush.bf16.msra.mxu0 %v240
    %253 = vmatpush.bf16.msra.mxu0 %v239
    %254 = vmatmul.bf16.gmra.mxu0 %v244
    %v255 = vpop.f32.mrf.mxu0
    %v256 = vadd.f32 0.0, %v255
    %v257 = vpop.f32.mrf.mxu0
    %v258 = vadd.f32 0.0, %v257
    %259 = vdwg.mxu0
    %v260 = vadd.f32 %v217, %v256
    %v261 = vadd.f32 %v219, %v258
    %v262 = vld [vmem:[#allocation2] sm:$0x1]
    %v264 = vperm.slane %v262, 0
    %v266 = vadd.f32 %v260, %v264
    %v267 = vadd.f32 %v261, %v264
    %v268 = vsel %vm174, %v266, 0.0
    %269 = vadd.xlane.f32.xlu0 %v268
    %v270 = vpop.xlane.xlu0 %269
    %v271 = vsel %vm174, %v267, 0.0
    %272 = vadd.xlane.f32.xlu0 %v271
    %v273 = vpop.xlane.xlu0 %272
    %v274 = vrcp.pop 32.0
    %v275 = vmul.f32 32.0, %v274
    %v276 = vsub.f32 1.0, %v275
    %v277 = vmul.f32 %v274, %v276
    %v278 = vadd.f32 %v274, %v277
    %vm279 = vweird.f32 %v274
    %v280 = vsel %vm279, %v274, %v278
    %v281 = vmul.f32 %v270, %v280
    %v282 = vmul.f32 %v273, %v280
    %v283 = vmul.f32 %v266, %v266
    %v284 = vmul.f32 %v267, %v267
    %v285 = vsel %vm174, %v283, 0.0
    %286 = vadd.xlane.f32.xlu0 %v285
    %v287 = vpop.xlane.xlu0 %286
    %v288 = vsel %vm174, %v284, 0.0
    %289 = vadd.xlane.f32.xlu0 %v288
    %v290 = vpop.xlane.xlu0 %289
    %v291 = vmul.f32 %v287, %v280
    %v292 = vmul.f32 %v290, %v280
    %v293 = vmul.f32 %v281, %v281
    %v294 = vmul.f32 %v282, %v282
    %v295 = vsub.f32 %v291, %v293
    %v296 = vsub.f32 %v292, %v294
    %v297 = vmax.f32 %v295, 0.0
    %v298 = vmax.f32 %v296, 0.0
    %v299 = vsub.f32 %v266, %v281
    %v300 = vsub.f32 %v267, %v282
    %v301 = vadd.f32 %v297, 1e-05
    %v302 = vadd.f32 %v298, 1e-05
    %v303 = vrsqrt.pop %v301
    %v304 = vmul.f32 %v303, %v301
    %v305 = vmul.f32 %v304, %v303
    %v306 = vmul.f32 0.5, %v305
    %v307 = vsub.f32 1.5, %v306
    %v308 = vmul.f32 %v303, %v307
    %vm309 = vweird.f32 %v301
    %vm310 = vweird.f32 %v303
    %vm311 = vmor %vm309, %vm310
    %v312 = vsel %vm311, %v303, %v308
    %v313 = vrsqrt.pop %v302
    %v314 = vmul.f32 %v313, %v302
    %v315 = vmul.f32 %v314, %v313
    %v316 = vmul.f32 0.5, %v315
    %v317 = vsub.f32 1.5, %v316
    %v318 = vmul.f32 %v313, %v317
    %vm319 = vweird.f32 %v302
    %vm320 = vweird.f32 %v313
    %vm321 = vmor %vm319, %vm320
    %v322 = vsel %vm321, %v313, %v318
    %v323 = vmul.f32 %v299, %v312
    %v324 = vmul.f32 %v300, %v322
    %v325 = vld [vmem:[%s4] sm:$0x1]
    %v327 = vperm.slane %v325, 0
    %v329 = vmul.f32 %v323, %v327
    %v330 = vmul.f32 %v324, %v327
    %v331 = vld [vmem:[%s5] sm:$0x1]
    %v333 = vperm.slane %v331, 0
    %v335 = vadd.f32 %v329, %v333
    %v336 = vadd.f32 %v330, %v333
    %v337 = vmax.f32 %v335, 0.0
    %v338 = vmax.f32 %v336, 0.0
    %v339 = vld [vmem:[#allocation4] sm:$0xf]
    %v340 = vld [vmem:[#allocation4 + $0x4] sm:$0xf]
    %v341 = vld [vmem:[#allocation4 + $0x8] sm:$0xf]
    %v342 = vld [vmem:[#allocation4 + $0xc] sm:$0xf]
    %v343 = vpack.c.bf16 %v338, %v337
    %v344 = vld [vmem:[#allocation6] sm:$0x1]
    %v346 = vperm.slane %v344, 0
    %v352 = vunpack.c.l.b16 %v339
    %v353 = vunpack.c.l.b16 %v340
    %v354 = vunpack.c.l.b16 %v341
    %v355 = vunpack.c.l.b16 %v342
    %v356 = vpack.c.b16 %v353, %v352
    %v357 = vpack.c.b16 %v355, %v354
    %v361 = vsel %vm174, %v343, 0
    %363 = vmatpush.bf16.msra.mxu0 0
    %364 = vmatpush.bf16.msra.mxu0 0
    %365 = vmatpush.bf16.msra.mxu0 0
    %366 = vmatpush.bf16.msra.mxu0 0
    %367 = vmatpush.bf16.msra.mxu0 0
    %368 = vmatpush.bf16.msra.mxu0 0
    %369 = vmatpush.bf16.msra.mxu0 %v357
    %370 = vmatpush.bf16.msra.mxu0 %v356
    %371 = vmatmul.bf16.gmra.mxu0 %v361
    %v372 = vpop.f32.mrf.mxu0
    %v373 = vadd.f32 %v346, %v372
    %v374 = vpop.f32.mrf.mxu0
    %v375 = vadd.f32 %v346, %v374
    %376 = vdwg.mxu0
    %v377 = vsel %vm174, %v373, 0.0
    %378 = vadd.xlane.f32.xlu0 %v377
    %v379 = vpop.xlane.xlu0 %378
    %v380 = vsel %vm174, %v375, 0.0
    %381 = vadd.xlane.f32.xlu0 %v380
    %v382 = vpop.xlane.xlu0 %381
    %v383 = vmul.f32 %v379, %v280
    %v384 = vmul.f32 %v382, %v280
    %v385 = vmul.f32 %v373, %v373
    %v386 = vmul.f32 %v375, %v375
    %v387 = vsel %vm174, %v385, 0.0
    %388 = vadd.xlane.f32.xlu0 %v387
    %v389 = vpop.xlane.xlu0 %388
    %v390 = vsel %vm174, %v386, 0.0
    %391 = vadd.xlane.f32.xlu0 %v390
    %v392 = vpop.xlane.xlu0 %391
    %v393 = vmul.f32 %v389, %v280
    %v394 = vmul.f32 %v392, %v280
    %v395 = vmul.f32 %v383, %v383
    %v396 = vmul.f32 %v384, %v384
    %v397 = vsub.f32 %v393, %v395
    %v398 = vsub.f32 %v394, %v396
    %v399 = vmax.f32 %v397, 0.0
    %v400 = vmax.f32 %v398, 0.0
    %v401 = vsub.f32 %v373, %v383
    %v402 = vsub.f32 %v375, %v384
    %v403 = vadd.f32 %v399, 1e-05
    %v404 = vadd.f32 %v400, 1e-05
    %v405 = vrsqrt.pop %v403
    %v406 = vmul.f32 %v405, %v403
    %v407 = vmul.f32 %v406, %v405
    %v408 = vmul.f32 0.5, %v407
    %v409 = vsub.f32 1.5, %v408
    %v410 = vmul.f32 %v405, %v409
    %vm411 = vweird.f32 %v403
    %vm412 = vweird.f32 %v405
    %vm413 = vmor %vm411, %vm412
    %v414 = vsel %vm413, %v405, %v410
    %v415 = vrsqrt.pop %v404
    %v416 = vmul.f32 %v415, %v404
    %v417 = vmul.f32 %v416, %v415
    %v418 = vmul.f32 0.5, %v417
    %v419 = vsub.f32 1.5, %v418
    %v420 = vmul.f32 %v415, %v419
    %vm421 = vweird.f32 %v404
    %vm422 = vweird.f32 %v415
    %vm423 = vmor %vm421, %vm422
    %v424 = vsel %vm423, %v415, %v420
    %v425 = vmul.f32 %v401, %v414
    %v426 = vmul.f32 %v402, %v424
    %v427 = vld [vmem:[%s8] sm:$0x1]
    %v429 = vperm.slane %v427, 0
    %v431 = vmul.f32 %v425, %v429
    %v432 = vmul.f32 %v426, %v429
    %v433 = vld [vmem:[%s9] sm:$0x1]
    %v435 = vperm.slane %v433, 0
    %v437 = vadd.f32 %v431, %v435
    %v438 = vadd.f32 %v432, %v435
    %v439 = vmax.f32 %v437, 0.0
    %v440 = vmax.f32 %v438, 0.0
    %v441 = vld [vmem:[#allocation7] sm:$0xf]
    %v442 = vld [vmem:[#allocation7 + $0x4] sm:$0xf]
    %v443 = vld [vmem:[#allocation7 + $0x8] sm:$0xf]
    %v444 = vld [vmem:[#allocation7 + $0xc] sm:$0xf]
    %v445 = vpack.c.bf16 %v440, %v439
    %v446 = vld [vmem:[#allocation9] sm:$0x1]
    %v448 = vperm.slane %v446, 0
    %v454 = vunpack.c.l.b16 %v441
    %v455 = vunpack.c.l.b16 %v442
    %v456 = vunpack.c.l.b16 %v443
    %v457 = vunpack.c.l.b16 %v444
    %v458 = vpack.c.b16 %v455, %v454
    %v459 = vpack.c.b16 %v457, %v456
    %v463 = vsel %vm174, %v445, 0
    %465 = vmatpush.bf16.msra.mxu0 0
    %466 = vmatpush.bf16.msra.mxu0 0
    %467 = vmatpush.bf16.msra.mxu0 0
    %468 = vmatpush.bf16.msra.mxu0 0
    %469 = vmatpush.bf16.msra.mxu0 0
    %470 = vmatpush.bf16.msra.mxu0 0
    %471 = vmatpush.bf16.msra.mxu0 %v459
    %472 = vmatpush.bf16.msra.mxu0 %v458
    %473 = vmatmul.bf16.gmra.mxu0 %v463
    %v474 = vpop.f32.mrf.mxu0
    %v475 = vadd.f32 %v448, %v474
    %v476 = vpop.f32.mrf.mxu0
    %v477 = vadd.f32 %v448, %v476
    %478 = vdwg.mxu0
    %v479 = vsel %vm174, %v475, 0.0
    %480 = vadd.xlane.f32.xlu0 %v479
    %v481 = vpop.xlane.xlu0 %480
    %v482 = vsel %vm174, %v477, 0.0
    %483 = vadd.xlane.f32.xlu0 %v482
    %v484 = vpop.xlane.xlu0 %483
    %v485 = vmul.f32 %v481, %v280
    %v486 = vmul.f32 %v484, %v280
    %v487 = vmul.f32 %v475, %v475
    %v488 = vmul.f32 %v477, %v477
    %v489 = vsel %vm174, %v487, 0.0
    %490 = vadd.xlane.f32.xlu0 %v489
    %v491 = vpop.xlane.xlu0 %490
    %v492 = vsel %vm174, %v488, 0.0
    %493 = vadd.xlane.f32.xlu0 %v492
    %v494 = vpop.xlane.xlu0 %493
    %v495 = vmul.f32 %v491, %v280
    %v496 = vmul.f32 %v494, %v280
    %v497 = vmul.f32 %v485, %v485
    %v498 = vmul.f32 %v486, %v486
    %v499 = vsub.f32 %v495, %v497
    %v500 = vsub.f32 %v496, %v498
    %v501 = vmax.f32 %v499, 0.0
    %v502 = vmax.f32 %v500, 0.0
    %v503 = vsub.f32 %v475, %v485
    %v504 = vsub.f32 %v477, %v486
    %v505 = vadd.f32 %v501, 1e-05
    %v506 = vadd.f32 %v502, 1e-05
    %v507 = vrsqrt.pop %v505
    %v508 = vmul.f32 %v507, %v505
    %v509 = vmul.f32 %v508, %v507
    %v510 = vmul.f32 0.5, %v509
    %v511 = vsub.f32 1.5, %v510
    %v512 = vmul.f32 %v507, %v511
    %vm513 = vweird.f32 %v505
    %vm514 = vweird.f32 %v507
    %vm515 = vmor %vm513, %vm514
    %v516 = vsel %vm515, %v507, %v512
    %v517 = vrsqrt.pop %v506
    %v518 = vmul.f32 %v517, %v506
    %v519 = vmul.f32 %v518, %v517
    %v520 = vmul.f32 0.5, %v519
    %v521 = vsub.f32 1.5, %v520
    %v522 = vmul.f32 %v517, %v521
    %vm523 = vweird.f32 %v506
    %vm524 = vweird.f32 %v517
    %vm525 = vmor %vm523, %vm524
    %v526 = vsel %vm525, %v517, %v522
    %v527 = vmul.f32 %v503, %v516
    %v528 = vmul.f32 %v504, %v526
    %v529 = vld [vmem:[%s12] sm:$0x1]
    %v531 = vperm.slane %v529, 0
    %v533 = vmul.f32 %v527, %v531
    %v534 = vmul.f32 %v528, %v531
    %v535 = vld [vmem:[%s13] sm:$0x1]
    %v537 = vperm.slane %v535, 0
    %v539 = vadd.f32 %v533, %v537
    %v540 = vadd.f32 %v534, %v537
    %v541 = vmax.f32 %v539, 0.0
    %v542 = vmax.f32 %v540, 0.0
    %v543 = vpack.c.bf16 %v542, %v541
    %v544 = vld [vmem:[%s14] sm:$0xf]
    %v545 = vld [vmem:[%s14 + $0x4] sm:$0xf]
    %v546 = vld [vmem:[%s14 + $0x8] sm:$0xf]
    %v547 = vld [vmem:[%s14 + $0xc] sm:$0xf]
    %v548 = vld [vmem:[#allocation10] sm:$0x1]
    %v550 = vperm.slane %v548, 0
    %v556 = vunpack.c.l.b16 %v544
    %v557 = vunpack.c.l.b16 %v545
    %v558 = vunpack.c.l.b16 %v546
    %v559 = vunpack.c.l.b16 %v547
    %v560 = vpack.c.b16 %v557, %v556
    %v561 = vpack.c.b16 %v559, %v558
    %v565 = vsel %vm174, %v543, 0
    %567 = vmatpush.bf16.msra.mxu0 0
    %568 = vmatpush.bf16.msra.mxu0 0
    %569 = vmatpush.bf16.msra.mxu0 0
    %570 = vmatpush.bf16.msra.mxu0 0
    %571 = vmatpush.bf16.msra.mxu0 0
    %572 = vmatpush.bf16.msra.mxu0 0
    %573 = vmatpush.bf16.msra.mxu0 %v561
    %574 = vmatpush.bf16.msra.mxu0 %v560
    %575 = vmatmul.bf16.gmra.mxu0 %v565
    %v576 = vpop.f32.mrf.mxu0
    %v577 = vadd.f32 %v550, %v576
    %v578 = vpop.f32.mrf.mxu0
    %v579 = vadd.f32 %v550, %v578
    %580 = vdwg.mxu0
    %v581 = vxor.u32 %v577, 2147483648
    %v582 = vxor.u32 %v579, 2147483648
    %v583 = vmul.f32 %v581, 1.442695
    %v584 = vpow.pop %v583
    %v585 = vmul.f32 %v582, 1.442695
    %v586 = vpow.pop %v585
    %v587 = vadd.f32 %v584, 1.0
    %v588 = vadd.f32 %v586, 1.0
    %v589 = vrcp.pop %v587
    %v590 = vmul.f32 %v587, %v589
    %v591 = vsub.f32 1.0, %v590
    %v592 = vmul.f32 %v589, %v591
    %v593 = vadd.f32 %v589, %v592
    %vm594 = vweird.f32 %v587
    %vm595 = vweird.f32 %v589
    %vm596 = vmor %vm594, %vm595
    %v597 = vsel %vm596, %v589, %v593
    %v598 = vand.u32 2147483647, %v587
    %vm599 = vcmp.eq.f32.partialorder %v598, 8.507059e+37
    %v600 = vand.u32 %v587, 2147483648
    %v601 = vor.u32 1.1754944e-38, %v600
    %v602 = vsel %vm599, %v601, %v597
    %v603 = vmul.f32 1.0, %v602
    %v604 = vrcp.pop %v588
    %v605 = vmul.f32 %v588, %v604
    %v606 = vsub.f32 1.0, %v605
    %v607 = vmul.f32 %v604, %v606
    %v608 = vadd.f32 %v604, %v607
    %vm609 = vweird.f32 %v588
    %vm610 = vweird.f32 %v604
    %vm611 = vmor %vm609, %vm610
    %v612 = vsel %vm611, %v604, %v608
    %v613 = vand.u32 2147483647, %v588
    %vm614 = vcmp.eq.f32.partialorder %v613, 8.507059e+37
    %v615 = vand.u32 %v588, 2147483648
    %v616 = vor.u32 1.1754944e-38, %v615
    %v617 = vsel %vm614, %v616, %v612
    %v618 = vmul.f32 1.0, %v617
    %619 = vst [vmem:[%s16] sm:$0xff] %v603
    %620 = vst [vmem:[%s16 + $0x8] sm:$0xff] %v618
    // Predicated region
    $region90: #{ddsp_decoder_forward.5} parent=1 // pred_check
      _
    $region91: #{ddsp_decoder_forward.5} parent=1 // pred_check_branch
      %622 = sbr.rel (0) target = $region93
    $region92: #{ddsp_decoder_forward.5} parent=1 // pred_region
      _
    $region93: #{ddsp_decoder_forward.5} parent=1 // pred_fallthru
      _
    // Predicated region
    $region94: #{ddsp_decoder_forward.5} parent=1 // pred_check
      _
    $region95: #{ddsp_decoder_forward.5} parent=1 // pred_check_branch
      %624 = sbr.rel (0) target = $region97
    $region96: #{ddsp_decoder_forward.5} parent=1 // pred_region
      _
    $region97: #{ddsp_decoder_forward.5} parent=1 // pred_fallthru
      _
    %625 = vsyncpa [#allocation3], 1
    %626 = vsyncpa [#allocation5], 1
    %627 = vsyncpa [#allocation8], 1
    %628 = vsyncpa [#allocation11], 1

// kernel: ddsp_decoder_forward.3
$region0: #{ddsp_decoder_forward.3}
  #allocation0 [shape = 'u32[]', space=smem, size = 0x4, offset = 0x4, fixed_abs, tag = 'smem constant byte address 0x4 - core index']
  #allocation1 [shape = 'u32[72,128]{1,0:T(1,128)}', space=vmem, size = 0x9000, scoped, tag = 'internal scratch']
  %s0 = inlined_call_operand.smem [shape: u32[45], index: -1, kind: input, shape index: {}]
  %s1 = sld [smem:[%s0]]
  %s2 = scalar_lea.smem %s0, 1
  %s3 = sld [smem:[%s2]]
  %s4 = scalar_lea.smem %s0, 2
  %s5 = sld [smem:[%s4]]
  %s6 = scalar_lea.smem %s0, 3
  %s7 = sld [smem:[%s6]]
  %s8 = scalar_lea.smem %s0, 4
  %s9 = sld [smem:[%s8]]
  %s10 = scalar_lea.smem %s0, 5
  %s11 = sld [smem:[%s10]]
  %s12 = scalar_lea.smem %s0, 6
  %s13 = sld [smem:[%s12]]
  %s14 = scalar_lea.smem %s0, 7
  %s15 = sld [smem:[%s14]]
  %s16 = scalar_lea.smem %s0, 8
  %s17 = sld [smem:[%s16]]
  %s18 = scalar_lea.smem %s0, 9
  %s19 = sld [smem:[%s18]]
  %s20 = scalar_lea.smem %s0, 10
  %s21 = sld [smem:[%s20]]
  %s22 = scalar_lea.smem %s0, 11
  %s23 = sld [smem:[%s22]]
  %s24 = scalar_lea.smem %s0, 12
  %s25 = sld [smem:[%s24]]
  %s26 = scalar_lea.smem %s0, 13
  %s27 = sld [smem:[%s26]]
  %s28 = scalar_lea.smem %s0, 14
  %s29 = sld [smem:[%s28]]
  %s30 = scalar_lea.smem %s0, 15
  %s31 = sld [smem:[%s30]]
  %s32 = scalar_lea.smem %s0, 16
  %s33 = sld [smem:[%s32]]
  %s34 = scalar_lea.smem %s0, 17
  %s35 = sld [smem:[%s34]]
  %s36 = scalar_lea.smem %s0, 18
  %s37 = sld [smem:[%s36]]
  %s38 = scalar_lea.smem %s0, 19
  %s39 = sld [smem:[%s38]]
  %s40 = scalar_lea.smem %s0, 20
  %s41 = sld [smem:[%s40]]
  %s42 = scalar_lea.smem %s0, 21
  %s43 = sld [smem:[%s42]]
  %s44 = scalar_lea.smem %s0, 22
  %s45 = sld [smem:[%s44]]
  %s46 = scalar_lea.smem %s0, 23
  %s47 = sld [smem:[%s46]]
  %s48 = scalar_lea.smem %s0, 24
  %s49 = sld [smem:[%s48]]
  %s50 = scalar_lea.smem %s0, 25
  %s51 = sld [smem:[%s50]]
  %s52 = scalar_lea.smem %s0, 26
  %s53 = sld [smem:[%s52]]
  %s54 = scalar_lea.smem %s0, 27
  %s55 = sld [smem:[%s54]]
  %s56 = scalar_lea.smem %s0, 28
  %s57 = sld [smem:[%s56]]
  %s58 = scalar_lea.smem %s0, 29
  %s59 = sld [smem:[%s58]]
  %s60 = scalar_lea.smem %s0, 30
  %s61 = sld [smem:[%s60]]
  %s62 = scalar_lea.smem %s0, 31
  %s63 = sld [smem:[%s62]]
  %s64 = scalar_lea.smem %s0, 32
  %s65 = sld [smem:[%s64]]
  %s66 = scalar_lea.smem %s0, 33
  %s67 = sld [smem:[%s66]]
  %s68 = scalar_lea.smem %s0, 34
  %s69 = sld [smem:[%s68]]
  %s70 = scalar_lea.smem %s0, 35
  %s71 = sld [smem:[%s70]]
  %s72 = scalar_lea.smem %s0, 36
  %s73 = sld [smem:[%s72]]
  %s74 = scalar_lea.smem %s0, 37
  %s75 = sld [smem:[%s74]]
  %s76 = scalar_lea.smem %s0, 38
  %s77 = sld [smem:[%s76]]
  %s78 = scalar_lea.smem %s0, 39
  %s79 = sld [smem:[%s78]]
  %s80 = scalar_lea.smem %s0, 40
  %s81 = sld [smem:[%s80]]
  %s82 = scalar_lea.smem %s0, 41
  %s83 = sld [smem:[%s82]]
  %s84 = scalar_lea.smem %s0, 42
  %s85 = sld [smem:[%s84]]
  %s86 = scalar_lea.smem %s0, 43
  %s87 = sld [smem:[%s86]]
  %s88 = scalar_lea.smem %s0, 44
  %s89 = sld [smem:[%s88]]
  %90 = xla_tuple %s83, %s85, %s87, %s89
  %s91 = sld [smem:[#allocation0]]
  $region262: #{ddsp_decoder_forward.3} parent=0
    _
  %s93 = ssub.s32 1, %s91
  %s94 = scalar_select 0, %s93, %s91
  $region1: #{ddsp_decoder_forward.3} parent=0
    #allocation2 [shape = 'u8[512]{0}', space=vmem, size = 0x400, scoped, tag = 'input window, operand 3, single buffered']
    #allocation3 [shape = 's32[1]{0}', space=sflag, size = 0x4, scoped, tag = 'scoped memory for ddsp_decoder_forward.3']
    #allocation4 [shape = 'u8[512]{0}', space=vmem, size = 0x400, scoped, tag = 'input window, operand 4, single buffered']
    #allocation5 [shape = 's32[1]{0}', space=sflag, size = 0x4, scoped, tag = 'scoped memory for ddsp_decoder_forward.3']
    #allocation6 [shape = 'u8[8192]{0}', space=vmem, size = 0x2000, scoped, tag = 'input window, operand 7, single buffered']
    #allocation7 [shape = 'u8[512]{0}', space=vmem, size = 0x400, scoped, tag = 'input window, operand 8, single buffered']
    #allocation8 [shape = 's32[1]{0}', space=sflag, size = 0x4, scoped, tag = 'scoped memory for ddsp_decoder_forward.3']
    #allocation9 [shape = 'u8[8192]{0}', space=vmem, size = 0x2000, scoped, tag = 'input window, operand 11, single buffered']
    #allocation10 [shape = 'u8[512]{0}', space=vmem, size = 0x400, scoped, tag = 'input window, operand 12, single buffered']
    #allocation11 [shape = 's32[1]{0}', space=sflag, size = 0x4, scoped, tag = 'scoped memory for ddsp_decoder_forward.3']
    #allocation12 [shape = 'u8[512]{0}', space=vmem, size = 0x400, scoped, tag = 'input window, operand 15, single buffered']
    #allocation13 [shape = 'u8[512]{0}', space=vmem, size = 0x400, scoped, tag = 'input window, operand 16, single buffered']
    #allocation14 [shape = 's32[1]{0}', space=sflag, size = 0x4, scoped, tag = 'scoped memory for ddsp_decoder_forward.3']
    #allocation15 [shape = 'u8[8192]{0}', space=vmem, size = 0x2000, scoped, tag = 'input window, operand 19, single buffered']
    #allocation16 [shape = 'u8[512]{0}', space=vmem, size = 0x400, scoped, tag = 'input window, operand 20, single buffered']
    #allocation17 [shape = 's32[1]{0}', space=sflag, size = 0x4, scoped, tag = 'scoped memory for ddsp_decoder_forward.3']
    #allocation18 [shape = 'u8[8192]{0}', space=vmem, size = 0x2000, scoped, tag = 'input window, operand 23, single buffered']
    #allocation19 [shape = 'u8[512]{0}', space=vmem, size = 0x400, scoped, tag = 'input window, operand 24, single buffered']
    #allocation20 [shape = 's32[1]{0}', space=sflag, size = 0x4, scoped, tag = 'scoped memory for ddsp_decoder_forward.3']
    #allocation21 [shape = 'u8[512]{0}', space=vmem, size = 0x400, scoped, tag = 'input window, operand 28, single buffered']
    #allocation22 [shape = 'u8[8192]{0}', space=vmem, size = 0x2000, scoped, tag = 'input window, operand 31, single buffered']
    #allocation23 [shape = 's32[1]{0}', space=sflag, size = 0x4, scoped, tag = 'scoped memory for ddsp_decoder_forward.3']
    #allocation24 [shape = 'u8[512]{0}', space=vmem, size = 0x400, scoped, tag = 'input window, operand 32, single buffered']
    #allocation25 [shape = 'u8[73728]{0}', space=vmem, size = 0x12000, scoped, tag = 'input window, operand 39, single buffered']
    #allocation26 [shape = 's32[1]{0}', space=sflag, size = 0x4, scoped, tag = 'scoped memory for ddsp_decoder_forward.3']
    %95 = vsyncpa [#allocation3], 0
    %96 = vsyncpa [#allocation5], 0
    %97 = vsyncpa [#allocation8], 0
    %98 = vsyncpa [#allocation11], 0
    %99 = vsyncpa [#allocation14], 0
    %100 = vsyncpa [#allocation17], 0
    %101 = vsyncpa [#allocation20], 0
    %102 = vsyncpa [#allocation23], 0
    %103 = vsyncpa [#allocation26], 0
    // Predicated region
    $region2: #{ddsp_decoder_forward.3} parent=1 // pred_check
      _
    $region3: #{ddsp_decoder_forward.3} parent=1 // pred_check_branch
      %105 = sbr.rel (0) target = $region5
    $region4: #{ddsp_decoder_forward.3} parent=1 // pred_region
      _
    $region5: #{ddsp_decoder_forward.3} parent=1 // pred_fallthru
      _
    // Predicated region
    $region6: #{ddsp_decoder_forward.3} parent=1 // pred_check
      _
    $region7: #{ddsp_decoder_forward.3} parent=1 // pred_check_branch
      %107 = sbr.rel (0) target = $region9
    $region8: #{ddsp_decoder_forward.3} parent=1 // pred_region
      _
    $region9: #{ddsp_decoder_forward.3} parent=1 // pred_fallthru
      _
    // Predicated region
    $region10: #{ddsp_decoder_forward.3} parent=1 // pred_check
      _
    $region11: #{ddsp_decoder_forward.3} parent=1 // pred_check_branch
      %109 = sbr.rel (0) target = $region13
    $region12: #{ddsp_decoder_forward.3} parent=1 // pred_region
      _
    $region13: #{ddsp_decoder_forward.3} parent=1 // pred_fallthru
      _
    // Predicated region
    $region14: #{ddsp_decoder_forward.3} parent=1 // pred_check
      _
    $region15: #{ddsp_decoder_forward.3} parent=1 // pred_check_branch
      %111 = sbr.rel (0) target = $region17
    $region16: #{ddsp_decoder_forward.3} parent=1 // pred_region
      %113 = vsyncadd [#allocation3], 0
      %s115 = sshll.u32 %s7, 4
      %s116 = int_to_ptr.hbm [resolvable:$true] %s115
      %s117 = sshll.u32 [#allocation2], 4
      %s118 = int_to_ptr.vmem [resolvable:$true] %s117
      %120 = dma.hbm_to_vmem [thread:$0]  %s116, 16, %s118, [#allocation3]
    $region17: #{ddsp_decoder_forward.3} parent=1 // pred_fallthru
      _
    // Predicated region
    $region18: #{ddsp_decoder_forward.3} parent=1 // pred_check
      _
    $region19: #{ddsp_decoder_forward.3} parent=1 // pred_check_branch
      %122 = sbr.rel (0) target = $region21
    $region20: #{ddsp_decoder_forward.3} parent=1 // pred_region
      %124 = vsyncadd [#allocation5], 0
      %s126 = sshll.u32 %s9, 4
      %s127 = int_to_ptr.hbm [resolvable:$true] %s126
      %s128 = sshll.u32 [#allocation4], 4
      %s129 = int_to_ptr.vmem [resolvable:$true] %s128
      %131 = dma.hbm_to_vmem [thread:$0]  %s127, 16, %s129, [#allocation5]
    $region21: #{ddsp_decoder_forward.3} parent=1 // pred_fallthru
      _
    // Predicated region
    $region22: #{ddsp_decoder_forward.3} parent=1 // pred_check
      _
    $region23: #{ddsp_decoder_forward.3} parent=1 // pred_check_branch
      %133 = sbr.rel (0) target = $region25
    $region24: #{ddsp_decoder_forward.3} parent=1 // pred_region
      _
    $region25: #{ddsp_decoder_forward.3} parent=1 // pred_fallthru
      _
    // Predicated region
    $region26: #{ddsp_decoder_forward.3} parent=1 // pred_check
      _
    $region27: #{ddsp_decoder_forward.3} parent=1 // pred_check_branch
      %135 = sbr.rel (0) target = $region29
    $region28: #{ddsp_decoder_forward.3} parent=1 // pred_region
      _
    $region29: #{ddsp_decoder_forward.3} parent=1 // pred_fallthru
      _
    // Predicated region
    $region30: #{ddsp_decoder_forward.3} parent=1 // pred_check
      _
    $region31: #{ddsp_decoder_forward.3} parent=1 // pred_check_branch
      %137 = sbr.rel (0) target = $region33
    $region32: #{ddsp_decoder_forward.3} parent=1 // pred_region
      %139 = vsyncadd [#allocation5], 0
      %s140 = sshll.u32 %s15, 4
      %s141 = int_to_ptr.hbm [resolvable:$true] %s140
      %s142 = sshll.u32 [#allocation6], 4
      %s143 = int_to_ptr.vmem [resolvable:$true] %s142
      %148 = dma.hbm_to_vmem [thread:$0]  %s141, 256, %s143, [#allocation5], 64, 64, 4
    $region33: #{ddsp_decoder_forward.3} parent=1 // pred_fallthru
      _
    // Predicated region
    $region34: #{ddsp_decoder_forward.3} parent=1 // pred_check
      _
    $region35: #{ddsp_decoder_forward.3} parent=1 // pred_check_branch
      %150 = sbr.rel (0) target = $region37
    $region36: #{ddsp_decoder_forward.3} parent=1 // pred_region
      %152 = vsyncadd [#allocation8], 0
      %s154 = sshll.u32 %s17, 4
      %s155 = int_to_ptr.hbm [resolvable:$true] %s154
      %s156 = sshll.u32 [#allocation7], 4
      %s157 = int_to_ptr.vmem [resolvable:$true] %s156
      %159 = dma.hbm_to_vmem [thread:$0]  %s155, 16, %s157, [#allocation8]
    $region37: #{ddsp_decoder_forward.3} parent=1 // pred_fallthru
      _
    // Predicated region
    $region38: #{ddsp_decoder_forward.3} parent=1 // pred_check
      _
    $region39: #{ddsp_decoder_forward.3} parent=1 // pred_check_branch
      %161 = sbr.rel (0) target = $region41
    $region40: #{ddsp_decoder_forward.3} parent=1 // pred_region
      _
    $region41: #{ddsp_decoder_forward.3} parent=1 // pred_fallthru
      _
    // Predicated region
    $region42: #{ddsp_decoder_forward.3} parent=1 // pred_check
      _
    $region43: #{ddsp_decoder_forward.3} parent=1 // pred_check_branch
      %163 = sbr.rel (0) target = $region45
    $region44: #{ddsp_decoder_forward.3} parent=1 // pred_region
      _
    $region45: #{ddsp_decoder_forward.3} parent=1 // pred_fallthru
      _
    // Predicated region
    $region46: #{ddsp_decoder_forward.3} parent=1 // pred_check
      _
    $region47: #{ddsp_decoder_forward.3} parent=1 // pred_check_branch
      %165 = sbr.rel (0) target = $region49
    $region48: #{ddsp_decoder_forward.3} parent=1 // pred_region
      %167 = vsyncadd [#allocation8], 0
      %s168 = sshll.u32 %s23, 4
      %s169 = int_to_ptr.hbm [resolvable:$true] %s168
      %s170 = sshll.u32 [#allocation9], 4
      %s171 = int_to_ptr.vmem [resolvable:$true] %s170
      %176 = dma.hbm_to_vmem [thread:$0]  %s169, 256, %s171, [#allocation8], 64, 64, 4
    $region49: #{ddsp_decoder_forward.3} parent=1 // pred_fallthru
      _
    // Predicated region
    $region50: #{ddsp_decoder_forward.3} parent=1 // pred_check
      _
    $region51: #{ddsp_decoder_forward.3} parent=1 // pred_check_branch
      %178 = sbr.rel (0) target = $region53
    $region52: #{ddsp_decoder_forward.3} parent=1 // pred_region
      %180 = vsyncadd [#allocation11], 0
      %s182 = sshll.u32 %s25, 4
      %s183 = int_to_ptr.hbm [resolvable:$true] %s182
      %s184 = sshll.u32 [#allocation10], 4
      %s185 = int_to_ptr.vmem [resolvable:$true] %s184
      %187 = dma.hbm_to_vmem [thread:$0]  %s183, 16, %s185, [#allocation11]
    $region53: #{ddsp_decoder_forward.3} parent=1 // pred_fallthru
      _
    // Predicated region
    $region54: #{ddsp_decoder_forward.3} parent=1 // pred_check
      _
    $region55: #{ddsp_decoder_forward.3} parent=1 // pred_check_branch
      %189 = sbr.rel (0) target = $region57
    $region56: #{ddsp_decoder_forward.3} parent=1 // pred_region
      _
    $region57: #{ddsp_decoder_forward.3} parent=1 // pred_fallthru
      _
    // Predicated region
    $region58: #{ddsp_decoder_forward.3} parent=1 // pred_check
      _
    $region59: #{ddsp_decoder_forward.3} parent=1 // pred_check_branch
      %191 = sbr.rel (0) target = $region61
    $region60: #{ddsp_decoder_forward.3} parent=1 // pred_region
      _
    $region61: #{ddsp_decoder_forward.3} parent=1 // pred_fallthru
      _
    // Predicated region
    $region62: #{ddsp_decoder_forward.3} parent=1 // pred_check
      _
    $region63: #{ddsp_decoder_forward.3} parent=1 // pred_check_branch
      %193 = sbr.rel (0) target = $region65
    $region64: #{ddsp_decoder_forward.3} parent=1 // pred_region
      %195 = vsyncadd [#allocation11], 0
      %s197 = sshll.u32 %s31, 4
      %s198 = int_to_ptr.hbm [resolvable:$true] %s197
      %s199 = sshll.u32 [#allocation12], 4
      %s200 = int_to_ptr.vmem [resolvable:$true] %s199
      %202 = dma.hbm_to_vmem [thread:$0]  %s198, 16, %s200, [#allocation11]
    $region65: #{ddsp_decoder_forward.3} parent=1 // pred_fallthru
      _
    // Predicated region
    $region66: #{ddsp_decoder_forward.3} parent=1 // pred_check
      _
    $region67: #{ddsp_decoder_forward.3} parent=1 // pred_check_branch
      %204 = sbr.rel (0) target = $region69
    $region68: #{ddsp_decoder_forward.3} parent=1 // pred_region
      %206 = vsyncadd [#allocation14], 0
      %s208 = sshll.u32 %s33, 4
      %s209 = int_to_ptr.hbm [resolvable:$true] %s208
      %s210 = sshll.u32 [#allocation13], 4
      %s211 = int_to_ptr.vmem [resolvable:$true] %s210
      %213 = dma.hbm_to_vmem [thread:$0]  %s209, 16, %s211, [#allocation14]
    $region69: #{ddsp_decoder_forward.3} parent=1 // pred_fallthru
      _
    // Predicated region
    $region70: #{ddsp_decoder_forward.3} parent=1 // pred_check
      _
    $region71: #{ddsp_decoder_forward.3} parent=1 // pred_check_branch
      %215 = sbr.rel (0) target = $region73
    $region72: #{ddsp_decoder_forward.3} parent=1 // pred_region
      _
    $region73: #{ddsp_decoder_forward.3} parent=1 // pred_fallthru
      _
    // Predicated region
    $region74: #{ddsp_decoder_forward.3} parent=1 // pred_check
      _
    $region75: #{ddsp_decoder_forward.3} parent=1 // pred_check_branch
      %217 = sbr.rel (0) target = $region77
    $region76: #{ddsp_decoder_forward.3} parent=1 // pred_region
      _
    $region77: #{ddsp_decoder_forward.3} parent=1 // pred_fallthru
      _
    // Predicated region
    $region78: #{ddsp_decoder_forward.3} parent=1 // pred_check
      _
    $region79: #{ddsp_decoder_forward.3} parent=1 // pred_check_branch
      %219 = sbr.rel (0) target = $region81
    $region80: #{ddsp_decoder_forward.3} parent=1 // pred_region
      %221 = vsyncadd [#allocation14], 0
      %s222 = sshll.u32 %s39, 4
      %s223 = int_to_ptr.hbm [resolvable:$true] %s222
      %s224 = sshll.u32 [#allocation15], 4
      %s225 = int_to_ptr.vmem [resolvable:$true] %s224
      %230 = dma.hbm_to_vmem [thread:$0]  %s223, 256, %s225, [#allocation14], 64, 64, 4
    $region81: #{ddsp_decoder_forward.3} parent=1 // pred_fallthru
      _
    // Predicated region
    $region82: #{ddsp_decoder_forward.3} parent=1 // pred_check
      _
    $region83: #{ddsp_decoder_forward.3} parent=1 // pred_check_branch
      %232 = sbr.rel (0) target = $region85
    $region84: #{ddsp_decoder_forward.3} parent=1 // pred_region
      %234 = vsyncadd [#allocation17], 0
      %s236 = sshll.u32 %s41, 4
      %s237 = int_to_ptr.hbm [resolvable:$true] %s236
      %s238 = sshll.u32 [#allocation16], 4
      %s239 = int_to_ptr.vmem [resolvable:$true] %s238
      %241 = dma.hbm_to_vmem [thread:$0]  %s237, 16, %s239, [#allocation17]
    $region85: #{ddsp_decoder_forward.3} parent=1 // pred_fallthru
      _
    // Predicated region
    $region86: #{ddsp_decoder_forward.3} parent=1 // pred_check
      _
    $region87: #{ddsp_decoder_forward.3} parent=1 // pred_check_branch
      %243 = sbr.rel (0) target = $region89
    $region88: #{ddsp_decoder_forward.3} parent=1 // pred_region
      _
    $region89: #{ddsp_decoder_forward.3} parent=1 // pred_fallthru
      _
    // Predicated region
    $region90: #{ddsp_decoder_forward.3} parent=1 // pred_check
      _
    $region91: #{ddsp_decoder_forward.3} parent=1 // pred_check_branch
      %245 = sbr.rel (0) target = $region93
    $region92: #{ddsp_decoder_forward.3} parent=1 // pred_region
      _
    $region93: #{ddsp_decoder_forward.3} parent=1 // pred_fallthru
      _
    // Predicated region
    $region94: #{ddsp_decoder_forward.3} parent=1 // pred_check
      _
    $region95: #{ddsp_decoder_forward.3} parent=1 // pred_check_branch
      %247 = sbr.rel (0) target = $region97
    $region96: #{ddsp_decoder_forward.3} parent=1 // pred_region
      %249 = vsyncadd [#allocation17], 0
      %s250 = sshll.u32 %s47, 4
      %s251 = int_to_ptr.hbm [resolvable:$true] %s250
      %s252 = sshll.u32 [#allocation18], 4
      %s253 = int_to_ptr.vmem [resolvable:$true] %s252
      %258 = dma.hbm_to_vmem [thread:$0]  %s251, 256, %s253, [#allocation17], 64, 64, 4
    $region97: #{ddsp_decoder_forward.3} parent=1 // pred_fallthru
      _
    // Predicated region
    $region98: #{ddsp_decoder_forward.3} parent=1 // pred_check
      _
    $region99: #{ddsp_decoder_forward.3} parent=1 // pred_check_branch
      %260 = sbr.rel (0) target = $region101
    $region100: #{ddsp_decoder_forward.3} parent=1 // pred_region
      %262 = vsyncadd [#allocation20], 0
      %s264 = sshll.u32 %s49, 4
      %s265 = int_to_ptr.hbm [resolvable:$true] %s264
      %s266 = sshll.u32 [#allocation19], 4
      %s267 = int_to_ptr.vmem [resolvable:$true] %s266
      %269 = dma.hbm_to_vmem [thread:$0]  %s265, 16, %s267, [#allocation20]
    $region101: #{ddsp_decoder_forward.3} parent=1 // pred_fallthru
      _
    // Predicated region
    $region102: #{ddsp_decoder_forward.3} parent=1 // pred_check
      _
    $region103: #{ddsp_decoder_forward.3} parent=1 // pred_check_branch
      %271 = sbr.rel (0) target = $region105
    $region104: #{ddsp_decoder_forward.3} parent=1 // pred_region
      _
    $region105: #{ddsp_decoder_forward.3} parent=1 // pred_fallthru
      _
    // Predicated region
    $region106: #{ddsp_decoder_forward.3} parent=1 // pred_check
      _
    $region107: #{ddsp_decoder_forward.3} parent=1 // pred_check_branch
      %273 = sbr.rel (0) target = $region109
    $region108: #{ddsp_decoder_forward.3} parent=1 // pred_region
      _
    $region109: #{ddsp_decoder_forward.3} parent=1 // pred_fallthru
      _
    // Predicated region
    $region110: #{ddsp_decoder_forward.3} parent=1 // pred_check
      _
    $region111: #{ddsp_decoder_forward.3} parent=1 // pred_check_branch
      %275 = sbr.rel (0) target = $region113
    $region112: #{ddsp_decoder_forward.3} parent=1 // pred_region
      _
    $region113: #{ddsp_decoder_forward.3} parent=1 // pred_fallthru
      _
    // Predicated region
    $region114: #{ddsp_decoder_forward.3} parent=1 // pred_check
      _
    $region115: #{ddsp_decoder_forward.3} parent=1 // pred_check_branch
      %277 = sbr.rel (0) target = $region117
    $region116: #{ddsp_decoder_forward.3} parent=1 // pred_region
      %279 = vsyncadd [#allocation20], 0
      %s281 = sshll.u32 %s57, 4
      %s282 = int_to_ptr.hbm [resolvable:$true] %s281
      %s283 = sshll.u32 [#allocation21], 4
      %s284 = int_to_ptr.vmem [resolvable:$true] %s283
      %286 = dma.hbm_to_vmem [thread:$0]  %s282, 16, %s284, [#allocation20]
    $region117: #{ddsp_decoder_forward.3} parent=1 // pred_fallthru
      _
    // Predicated region
    $region118: #{ddsp_decoder_forward.3} parent=1 // pred_check
      _
    $region119: #{ddsp_decoder_forward.3} parent=1 // pred_check_branch
      %288 = sbr.rel (0) target = $region121
    $region120: #{ddsp_decoder_forward.3} parent=1 // pred_region
      _
    $region121: #{ddsp_decoder_forward.3} parent=1 // pred_fallthru
      _
    // Predicated region
    $region122: #{ddsp_decoder_forward.3} parent=1 // pred_check
      _
    $region123: #{ddsp_decoder_forward.3} parent=1 // pred_check_branch
      %290 = sbr.rel (0) target = $region125
    $region124: #{ddsp_decoder_forward.3} parent=1 // pred_region
      _
    $region125: #{ddsp_decoder_forward.3} parent=1 // pred_fallthru
      _
    // Predicated region
    $region126: #{ddsp_decoder_forward.3} parent=1 // pred_check
      _
    $region127: #{ddsp_decoder_forward.3} parent=1 // pred_check_branch
      %292 = sbr.rel (0) target = $region129
    $region128: #{ddsp_decoder_forward.3} parent=1 // pred_region
      %294 = vsyncadd [#allocation23], 0
      %s295 = sshll.u32 %s63, 4
      %s296 = int_to_ptr.hbm [resolvable:$true] %s295
      %s297 = sshll.u32 [#allocation22], 4
      %s298 = int_to_ptr.vmem [resolvable:$true] %s297
      %303 = dma.hbm_to_vmem [thread:$0]  %s296, 256, %s298, [#allocation23], 64, 64, 4
    $region129: #{ddsp_decoder_forward.3} parent=1 // pred_fallthru
      _
    // Predicated region
    $region130: #{ddsp_decoder_forward.3} parent=1 // pred_check
      _
    $region131: #{ddsp_decoder_forward.3} parent=1 // pred_check_branch
      %305 = sbr.rel (0) target = $region133
    $region132: #{ddsp_decoder_forward.3} parent=1 // pred_region
      %307 = vsyncadd [#allocation23], 0
      %s309 = sshll.u32 %s65, 4
      %s310 = int_to_ptr.hbm [resolvable:$true] %s309
      %s311 = sshll.u32 [#allocation24], 4
      %s312 = int_to_ptr.vmem [resolvable:$true] %s311
      %314 = dma.hbm_to_vmem [thread:$0]  %s310, 16, %s312, [#allocation23]
    $region133: #{ddsp_decoder_forward.3} parent=1 // pred_fallthru
      _
    // Predicated region
    $region134: #{ddsp_decoder_forward.3} parent=1 // pred_check
      _
    $region135: #{ddsp_decoder_forward.3} parent=1 // pred_check_branch
      %316 = sbr.rel (0) target = $region137
    $region136: #{ddsp_decoder_forward.3} parent=1 // pred_region
      _
    $region137: #{ddsp_decoder_forward.3} parent=1 // pred_fallthru
      _
    // Predicated region
    $region138: #{ddsp_decoder_forward.3} parent=1 // pred_check
      _
    $region139: #{ddsp_decoder_forward.3} parent=1 // pred_check_branch
      %318 = sbr.rel (0) target = $region141
    $region140: #{ddsp_decoder_forward.3} parent=1 // pred_region
      _
    $region141: #{ddsp_decoder_forward.3} parent=1 // pred_fallthru
      _
    // Predicated region
    $region142: #{ddsp_decoder_forward.3} parent=1 // pred_check
      _
    $region143: #{ddsp_decoder_forward.3} parent=1 // pred_check_branch
      %320 = sbr.rel (0) target = $region145
    $region144: #{ddsp_decoder_forward.3} parent=1 // pred_region
      _
    $region145: #{ddsp_decoder_forward.3} parent=1 // pred_fallthru
      _
    // Predicated region
    $region146: #{ddsp_decoder_forward.3} parent=1 // pred_check
      _
    $region147: #{ddsp_decoder_forward.3} parent=1 // pred_check_branch
      %322 = sbr.rel (0) target = $region149
    $region148: #{ddsp_decoder_forward.3} parent=1 // pred_region
      _
    $region149: #{ddsp_decoder_forward.3} parent=1 // pred_fallthru
      _
    // Predicated region
    $region150: #{ddsp_decoder_forward.3} parent=1 // pred_check
      _
    $region151: #{ddsp_decoder_forward.3} parent=1 // pred_check_branch
      %324 = sbr.rel (0) target = $region153
    $region152: #{ddsp_decoder_forward.3} parent=1 // pred_region
      _
    $region153: #{ddsp_decoder_forward.3} parent=1 // pred_fallthru
      _
    // Predicated region
    $region154: #{ddsp_decoder_forward.3} parent=1 // pred_check
      _
    $region155: #{ddsp_decoder_forward.3} parent=1 // pred_check_branch
      %326 = sbr.rel (0) target = $region157
    $region156: #{ddsp_decoder_forward.3} parent=1 // pred_region
      _
    $region157: #{ddsp_decoder_forward.3} parent=1 // pred_fallthru
      _
    // Predicated region
    $region158: #{ddsp_decoder_forward.3} parent=1 // pred_check
      _
    $region159: #{ddsp_decoder_forward.3} parent=1 // pred_check_branch
      %328 = sbr.rel (0) target = $region161
    $region160: #{ddsp_decoder_forward.3} parent=1 // pred_region
      %330 = vsyncadd [#allocation26], 0
      %s331 = sshll.u32 %s79, 4
      %s332 = int_to_ptr.hbm [resolvable:$true] %s331
      %s333 = sshll.u32 [#allocation25], 4
      %s334 = int_to_ptr.vmem [resolvable:$true] %s333
      %339 = dma.hbm_to_vmem [thread:$0]  %s332, 2304, %s334, [#allocation26], 64, 64, 4
    $region161: #{ddsp_decoder_forward.3} parent=1 // pred_fallthru
      _
    // Predicated region
    $region162: #{ddsp_decoder_forward.3} parent=1 // pred_check
      _
    $region163: #{ddsp_decoder_forward.3} parent=1 // pred_check_branch
      %341 = sbr.rel (0) target = $region165
    $region164: #{ddsp_decoder_forward.3} parent=1 // pred_region
      _
    $region165: #{ddsp_decoder_forward.3} parent=1 // pred_fallthru
      _
    // Predicated region
    $region166: #{ddsp_decoder_forward.3} parent=1 // pred_check
      _
    $region167: #{ddsp_decoder_forward.3} parent=1 // pred_check_branch
      %343 = sbr.rel (0) target = $region169
    $region168: #{ddsp_decoder_forward.3} parent=1 // pred_region
      %345 = dma.done [#allocation3], 16
    $region169: #{ddsp_decoder_forward.3} parent=1 // pred_fallthru
      _
    // Predicated region
    $region170: #{ddsp_decoder_forward.3} parent=1 // pred_check
      _
    $region171: #{ddsp_decoder_forward.3} parent=1 // pred_check_branch
      %347 = sbr.rel (0) target = $region173
    $region172: #{ddsp_decoder_forward.3} parent=1 // pred_region
      %349 = dma.done [#allocation5], 16
    $region173: #{ddsp_decoder_forward.3} parent=1 // pred_fallthru
      _
    // Predicated region
    $region174: #{ddsp_decoder_forward.3} parent=1 // pred_check
      _
    $region175: #{ddsp_decoder_forward.3} parent=1 // pred_check_branch
      %351 = sbr.rel (0) target = $region177
    $region176: #{ddsp_decoder_forward.3} parent=1 // pred_region
      %353 = dma.done [#allocation5], 256
    $region177: #{ddsp_decoder_forward.3} parent=1 // pred_fallthru
      _
    // Predicated region
    $region178: #{ddsp_decoder_forward.3} parent=1 // pred_check
      _
    $region179: #{ddsp_decoder_forward.3} parent=1 // pred_check_branch
      %355 = sbr.rel (0) target = $region181
    $region180: #{ddsp_decoder_forward.3} parent=1 // pred_region
      %357 = dma.done [#allocation8], 16
    $region181: #{ddsp_decoder_forward.3} parent=1 // pred_fallthru
      _
    // Predicated region
    $region182: #{ddsp_decoder_forward.3} parent=1 // pred_check
      _
    $region183: #{ddsp_decoder_forward.3} parent=1 // pred_check_branch
      %359 = sbr.rel (0) target = $region185
    $region184: #{ddsp_decoder_forward.3} parent=1 // pred_region
      %361 = dma.done [#allocation8], 256
    $region185: #{ddsp_decoder_forward.3} parent=1 // pred_fallthru
      _
    // Predicated region
    $region186: #{ddsp_decoder_forward.3} parent=1 // pred_check
      _
    $region187: #{ddsp_decoder_forward.3} parent=1 // pred_check_branch
      %363 = sbr.rel (0) target = $region189
    $region188: #{ddsp_decoder_forward.3} parent=1 // pred_region
      %365 = dma.done [#allocation11], 16
    $region189: #{ddsp_decoder_forward.3} parent=1 // pred_fallthru
      _
    // Predicated region
    $region190: #{ddsp_decoder_forward.3} parent=1 // pred_check
      _
    $region191: #{ddsp_decoder_forward.3} parent=1 // pred_check_branch
      %367 = sbr.rel (0) target = $region193
    $region192: #{ddsp_decoder_forward.3} parent=1 // pred_region
      %369 = dma.done [#allocation11], 16
    $region193: #{ddsp_decoder_forward.3} parent=1 // pred_fallthru
      _
    // Predicated region
    $region194: #{ddsp_decoder_forward.3} parent=1 // pred_check
      _
    $region195: #{ddsp_decoder_forward.3} parent=1 // pred_check_branch
      %371 = sbr.rel (0) target = $region197
    $region196: #{ddsp_decoder_forward.3} parent=1 // pred_region
      %373 = dma.done [#allocation14], 16
    $region197: #{ddsp_decoder_forward.3} parent=1 // pred_fallthru
      _
    // Predicated region
    $region198: #{ddsp_decoder_forward.3} parent=1 // pred_check
      _
    $region199: #{ddsp_decoder_forward.3} parent=1 // pred_check_branch
      %375 = sbr.rel (0) target = $region201
    $region200: #{ddsp_decoder_forward.3} parent=1 // pred_region
      %377 = dma.done [#allocation14], 256
    $region201: #{ddsp_decoder_forward.3} parent=1 // pred_fallthru
      _
    // Predicated region
    $region202: #{ddsp_decoder_forward.3} parent=1 // pred_check
      _
    $region203: #{ddsp_decoder_forward.3} parent=1 // pred_check_branch
      %379 = sbr.rel (0) target = $region205
    $region204: #{ddsp_decoder_forward.3} parent=1 // pred_region
      %381 = dma.done [#allocation17], 16
    $region205: #{ddsp_decoder_forward.3} parent=1 // pred_fallthru
      _
    // Predicated region
    $region206: #{ddsp_decoder_forward.3} parent=1 // pred_check
      _
    $region207: #{ddsp_decoder_forward.3} parent=1 // pred_check_branch
      %383 = sbr.rel (0) target = $region209
    $region208: #{ddsp_decoder_forward.3} parent=1 // pred_region
      %385 = dma.done [#allocation17], 256
    $region209: #{ddsp_decoder_forward.3} parent=1 // pred_fallthru
      _
    // Predicated region
    $region210: #{ddsp_decoder_forward.3} parent=1 // pred_check
      _
    $region211: #{ddsp_decoder_forward.3} parent=1 // pred_check_branch
      %387 = sbr.rel (0) target = $region213
    $region212: #{ddsp_decoder_forward.3} parent=1 // pred_region
      %389 = dma.done [#allocation20], 16
    $region213: #{ddsp_decoder_forward.3} parent=1 // pred_fallthru
      _
    // Predicated region
    $region214: #{ddsp_decoder_forward.3} parent=1 // pred_check
      _
    $region215: #{ddsp_decoder_forward.3} parent=1 // pred_check_branch
      %391 = sbr.rel (0) target = $region217
    $region216: #{ddsp_decoder_forward.3} parent=1 // pred_region
      %393 = dma.done [#allocation20], 16
    $region217: #{ddsp_decoder_forward.3} parent=1 // pred_fallthru
      _
    // Predicated region
    $region218: #{ddsp_decoder_forward.3} parent=1 // pred_check
      _
    $region219: #{ddsp_decoder_forward.3} parent=1 // pred_check_branch
      %395 = sbr.rel (0) target = $region221
    $region220: #{ddsp_decoder_forward.3} parent=1 // pred_region
      %397 = dma.done [#allocation23], 256
    $region221: #{ddsp_decoder_forward.3} parent=1 // pred_fallthru
      _
    // Predicated region
    $region222: #{ddsp_decoder_forward.3} parent=1 // pred_check
      _
    $region223: #{ddsp_decoder_forward.3} parent=1 // pred_check_branch
      %399 = sbr.rel (0) target = $region225
    $region224: #{ddsp_decoder_forward.3} parent=1 // pred_region
      %401 = dma.done [#allocation23], 16
    $region225: #{ddsp_decoder_forward.3} parent=1 // pred_fallthru
      _
    // Predicated region
    $region226: #{ddsp_decoder_forward.3} parent=1 // pred_check
      _
    $region227: #{ddsp_decoder_forward.3} parent=1 // pred_check_branch
      %403 = sbr.rel (0) target = $region229
    $region228: #{ddsp_decoder_forward.3} parent=1 // pred_region
      %405 = dma.done [#allocation26], 2304
    $region229: #{ddsp_decoder_forward.3} parent=1 // pred_fallthru
      _
    %v407 = vld [vmem:[%s1] sm:$0xff]
    %v408 = vld [vmem:[%s1 + $0x8] sm:$0xff]
    %v409 = vld [vmem:[#allocation2] sm:$0x1]
    %v410 = vunpack.c.l.bf16 %v409
    %412 = vset.pattern.permute.xlu0 0
    %413 = vperm.xlu0 %412, %v407
    %v414 = vpop.permute.xlu0 %413
    %417 = vset.pattern.permute.xlu0 0
    %418 = vperm.xlu0 %417, %v408
    %v419 = vpop.permute.xlu0 %418
    %v421 = vperm.slane %v410, 0
    %v422 = vmul.f32 %v414, %v421
    %v423 = vmul.f32 %v419, %v421
    %v424 = vld [vmem:[#allocation4] sm:$0x1]
    %v426 = vperm.slane %v424, 0
    %v428 = vadd.f32 %v422, %v426
    %v429 = vadd.f32 %v423, %v426
    %vm430 = vcmask 261120
    %v431 = vsel %vm430, %v428, 0.0
    %432 = vadd.xlane.f32.xlu0 %v431
    %v433 = vpop.xlane.xlu0 %432
    %v434 = vsel %vm430, %v429, 0.0
    %435 = vadd.xlane.f32.xlu0 %v434
    %v436 = vpop.xlane.xlu0 %435
    %v437 = vrcp.pop 32.0
    %v438 = vmul.f32 32.0, %v437
    %v439 = vsub.f32 1.0, %v438
    %v440 = vmul.f32 %v437, %v439
    %v441 = vadd.f32 %v437, %v440
    %vm442 = vweird.f32 %v437
    %v443 = vsel %vm442, %v437, %v441
    %v444 = vmul.f32 %v433, %v443
    %v445 = vmul.f32 %v436, %v443
    %v446 = vmul.f32 %v428, %v428
    %v447 = vmul.f32 %v429, %v429
    %v448 = vsel %vm430, %v446, 0.0
    %449 = vadd.xlane.f32.xlu0 %v448
    %v450 = vpop.xlane.xlu0 %449
    %v451 = vsel %vm430, %v447, 0.0
    %452 = vadd.xlane.f32.xlu0 %v451
    %v453 = vpop.xlane.xlu0 %452
    %v454 = vmul.f32 %v450, %v443
    %v455 = vmul.f32 %v453, %v443
    %v456 = vmul.f32 %v444, %v444
    %v457 = vmul.f32 %v445, %v445
    %v458 = vsub.f32 %v454, %v456
    %v459 = vsub.f32 %v455, %v457
    %v460 = vmax.f32 %v458, 0.0
    %v461 = vmax.f32 %v459, 0.0
    %v462 = vsub.f32 %v428, %v444
    %v463 = vsub.f32 %v429, %v445
    %v464 = vadd.f32 %v460, 1e-05
    %v465 = vadd.f32 %v461, 1e-05
    %v466 = vrsqrt.pop %v464
    %v467 = vmul.f32 %v466, %v464
    %v468 = vmul.f32 %v467, %v466
    %v469 = vmul.f32 0.5, %v468
    %v470 = vsub.f32 1.5, %v469
    %v471 = vmul.f32 %v466, %v470
    %vm472 = vweird.f32 %v464
    %vm473 = vweird.f32 %v466
    %vm474 = vmor %vm472, %vm473
    %v475 = vsel %vm474, %v466, %v471
    %v476 = vrsqrt.pop %v465
    %v477 = vmul.f32 %v476, %v465
    %v478 = vmul.f32 %v477, %v476
    %v479 = vmul.f32 0.5, %v478
    %v480 = vsub.f32 1.5, %v479
    %v481 = vmul.f32 %v476, %v480
    %vm482 = vweird.f32 %v465
    %vm483 = vweird.f32 %v476
    %vm484 = vmor %vm482, %vm483
    %v485 = vsel %vm484, %v476, %v481
    %v486 = vmul.f32 %v462, %v475
    %v487 = vmul.f32 %v463, %v485
    %v488 = vld [vmem:[%s11] sm:$0x1]
    %v490 = vperm.slane %v488, 0
    %v492 = vmul.f32 %v486, %v490
    %v493 = vmul.f32 %v487, %v490
    %v494 = vld [vmem:[%s13] sm:$0x1]
    %v496 = vperm.slane %v494, 0
    %v498 = vadd.f32 %v492, %v496
    %v499 = vadd.f32 %v493, %v496
    %v500 = vmax.f32 %v498, 0.0
    %v501 = vmax.f32 %v499, 0.0
    %v502 = vld [vmem:[#allocation6] sm:$0xf]
    %v503 = vld [vmem:[#allocation6 + $0x4] sm:$0xf]
    %v504 = vld [vmem:[#allocation6 + $0x8] sm:$0xf]
    %v505 = vld [vmem:[#allocation6 + $0xc] sm:$0xf]
    %v506 = vpack.c.bf16 %v501, %v500
    %v507 = vld [vmem:[#allocation7] sm:$0x1]
    %v509 = vperm.slane %v507, 0
    %v515 = vunpack.c.l.b16 %v502
    %v516 = vunpack.c.l.b16 %v503
    %v517 = vunpack.c.l.b16 %v504
    %v518 = vunpack.c.l.b16 %v505
    %v519 = vpack.c.b16 %v516, %v515
    %v520 = vpack.c.b16 %v518, %v517
    %v524 = vsel %vm430, %v506, 0
    %526 = vmatpush.bf16.msra.mxu0 0
    %527 = vmatpush.bf16.msra.mxu0 0
    %528 = vmatpush.bf16.msra.mxu0 0
    %529 = vmatpush.bf16.msra.mxu0 0
    %530 = vmatpush.bf16.msra.mxu0 0
    %531 = vmatpush.bf16.msra.mxu0 0
    %532 = vmatpush.bf16.msra.mxu0 %v520
    %533 = vmatpush.bf16.msra.mxu0 %v519
    %534 = vmatmul.bf16.gmra.mxu0 %v524
    %v535 = vpop.f32.mrf.mxu0
    %v536 = vadd.f32 %v509, %v535
    %v537 = vpop.f32.mrf.mxu0
    %v538 = vadd.f32 %v509, %v537
    %539 = vdwg.mxu0
    %v540 = vsel %vm430, %v536, 0.0
    %541 = vadd.xlane.f32.xlu0 %v540
    %v542 = vpop.xlane.xlu0 %541
    %v543 = vsel %vm430, %v538, 0.0
    %544 = vadd.xlane.f32.xlu0 %v543
    %v545 = vpop.xlane.xlu0 %544
    %v546 = vmul.f32 %v542, %v443
    %v547 = vmul.f32 %v545, %v443
    %v548 = vmul.f32 %v536, %v536
    %v549 = vmul.f32 %v538, %v538
    %v550 = vsel %vm430, %v548, 0.0
    %551 = vadd.xlane.f32.xlu0 %v550
    %v552 = vpop.xlane.xlu0 %551
    %v553 = vsel %vm430, %v549, 0.0
    %554 = vadd.xlane.f32.xlu0 %v553
    %v555 = vpop.xlane.xlu0 %554
    %v556 = vmul.f32 %v552, %v443
    %v557 = vmul.f32 %v555, %v443
    %v558 = vmul.f32 %v546, %v546
    %v559 = vmul.f32 %v547, %v547
    %v560 = vsub.f32 %v556, %v558
    %v561 = vsub.f32 %v557, %v559
    %v562 = vmax.f32 %v560, 0.0
    %v563 = vmax.f32 %v561, 0.0
    %v564 = vsub.f32 %v536, %v546
    %v565 = vsub.f32 %v538, %v547
    %v566 = vadd.f32 %v562, 1e-05
    %v567 = vadd.f32 %v563, 1e-05
    %v568 = vrsqrt.pop %v566
    %v569 = vmul.f32 %v568, %v566
    %v570 = vmul.f32 %v569, %v568
    %v571 = vmul.f32 0.5, %v570
    %v572 = vsub.f32 1.5, %v571
    %v573 = vmul.f32 %v568, %v572
    %vm574 = vweird.f32 %v566
    %vm575 = vweird.f32 %v568
    %vm576 = vmor %vm574, %vm575
    %v577 = vsel %vm576, %v568, %v573
    %v578 = vrsqrt.pop %v567
    %v579 = vmul.f32 %v578, %v567
    %v580 = vmul.f32 %v579, %v578
    %v581 = vmul.f32 0.5, %v580
    %v582 = vsub.f32 1.5, %v581
    %v583 = vmul.f32 %v578, %v582
    %vm584 = vweird.f32 %v567
    %vm585 = vweird.f32 %v578
    %vm586 = vmor %vm584, %vm585
    %v587 = vsel %vm586, %v578, %v583
    %v588 = vmul.f32 %v564, %v577
    %v589 = vmul.f32 %v565, %v587
    %v590 = vld [vmem:[%s19] sm:$0x1]
    %v592 = vperm.slane %v590, 0
    %v594 = vmul.f32 %v588, %v592
    %v595 = vmul.f32 %v589, %v592
    %v596 = vld [vmem:[%s21] sm:$0x1]
    %v598 = vperm.slane %v596, 0
    %v600 = vadd.f32 %v594, %v598
    %v601 = vadd.f32 %v595, %v598
    %v602 = vmax.f32 %v600, 0.0
    %v603 = vmax.f32 %v601, 0.0
    %v604 = vld [vmem:[#allocation9] sm:$0xf]
    %v605 = vld [vmem:[#allocation9 + $0x4] sm:$0xf]
    %v606 = vld [vmem:[#allocation9 + $0x8] sm:$0xf]
    %v607 = vld [vmem:[#allocation9 + $0xc] sm:$0xf]
    %v608 = vpack.c.bf16 %v603, %v602
    %v609 = vld [vmem:[#allocation10] sm:$0x1]
    %v611 = vperm.slane %v609, 0
    %v617 = vunpack.c.l.b16 %v604
    %v618 = vunpack.c.l.b16 %v605
    %v619 = vunpack.c.l.b16 %v606
    %v620 = vunpack.c.l.b16 %v607
    %v621 = vpack.c.b16 %v618, %v617
    %v622 = vpack.c.b16 %v620, %v619
    %v626 = vsel %vm430, %v608, 0
    %628 = vmatpush.bf16.msra.mxu0 0
    %629 = vmatpush.bf16.msra.mxu0 0
    %630 = vmatpush.bf16.msra.mxu0 0
    %631 = vmatpush.bf16.msra.mxu0 0
    %632 = vmatpush.bf16.msra.mxu0 0
    %633 = vmatpush.bf16.msra.mxu0 0
    %634 = vmatpush.bf16.msra.mxu0 %v622
    %635 = vmatpush.bf16.msra.mxu0 %v621
    %636 = vmatmul.bf16.gmra.mxu0 %v626
    %v637 = vpop.f32.mrf.mxu0
    %v638 = vadd.f32 %v611, %v637
    %v639 = vpop.f32.mrf.mxu0
    %v640 = vadd.f32 %v611, %v639
    %641 = vdwg.mxu0
    %v642 = vsel %vm430, %v638, 0.0
    %643 = vadd.xlane.f32.xlu0 %v642
    %v644 = vpop.xlane.xlu0 %643
    %v645 = vsel %vm430, %v640, 0.0
    %646 = vadd.xlane.f32.xlu0 %v645
    %v647 = vpop.xlane.xlu0 %646
    %v648 = vmul.f32 %v644, %v443
    %v649 = vmul.f32 %v647, %v443
    %v650 = vmul.f32 %v638, %v638
    %v651 = vmul.f32 %v640, %v640
    %v652 = vsel %vm430, %v650, 0.0
    %653 = vadd.xlane.f32.xlu0 %v652
    %v654 = vpop.xlane.xlu0 %653
    %v655 = vsel %vm430, %v651, 0.0
    %656 = vadd.xlane.f32.xlu0 %v655
    %v657 = vpop.xlane.xlu0 %656
    %v658 = vmul.f32 %v654, %v443
    %v659 = vmul.f32 %v657, %v443
    %v660 = vmul.f32 %v648, %v648
    %v661 = vmul.f32 %v649, %v649
    %v662 = vsub.f32 %v658, %v660
    %v663 = vsub.f32 %v659, %v661
    %v664 = vmax.f32 %v662, 0.0
    %v665 = vmax.f32 %v663, 0.0
    %v666 = vsub.f32 %v638, %v648
    %v667 = vsub.f32 %v640, %v649
    %v668 = vadd.f32 %v664, 1e-05
    %v669 = vadd.f32 %v665, 1e-05
    %v670 = vrsqrt.pop %v668
    %v671 = vmul.f32 %v670, %v668
    %v672 = vmul.f32 %v671, %v670
    %v673 = vmul.f32 0.5, %v672
    %v674 = vsub.f32 1.5, %v673
    %v675 = vmul.f32 %v670, %v674
    %vm676 = vweird.f32 %v668
    %vm677 = vweird.f32 %v670
    %vm678 = vmor %vm676, %vm677
    %v679 = vsel %vm678, %v670, %v675
    %v680 = vrsqrt.pop %v669
    %v681 = vmul.f32 %v680, %v669
    %v682 = vmul.f32 %v681, %v680
    %v683 = vmul.f32 0.5, %v682
    %v684 = vsub.f32 1.5, %v683
    %v685 = vmul.f32 %v680, %v684
    %vm686 = vweird.f32 %v669
    %vm687 = vweird.f32 %v680
    %vm688 = vmor %vm686, %vm687
    %v689 = vsel %vm688, %v680, %v685
    %v690 = vmul.f32 %v666, %v679
    %v691 = vmul.f32 %v667, %v689
    %v692 = vld [vmem:[%s27] sm:$0x1]
    %v694 = vperm.slane %v692, 0
    %v696 = vmul.f32 %v690, %v694
    %v697 = vmul.f32 %v691, %v694
    %v698 = vld [vmem:[%s29] sm:$0x1]
    %v700 = vperm.slane %v698, 0
    %v702 = vadd.f32 %v696, %v700
    %v703 = vadd.f32 %v697, %v700
    %v704 = vmax.f32 %v702, 0.0
    %v705 = vmax.f32 %v703, 0.0
    %v706 = vld [vmem:[%s3] sm:$0xff]
    %v707 = vld [vmem:[%s3 + $0x8] sm:$0xff]
    %v708 = vld [vmem:[#allocation12] sm:$0x1]
    %v709 = vunpack.c.l.bf16 %v708
    %711 = vset.pattern.permute.xlu0 0
    %712 = vperm.xlu0 %711, %v706
    %v713 = vpop.permute.xlu0 %712
    %716 = vset.pattern.permute.xlu0 0
    %717 = vperm.xlu0 %716, %v707
    %v718 = vpop.permute.xlu0 %717
    %v720 = vperm.slane %v709, 0
    %v721 = vmul.f32 %v713, %v720
    %v722 = vmul.f32 %v718, %v720
    %v723 = vld [vmem:[#allocation13] sm:$0x1]
    %v725 = vperm.slane %v723, 0
    %v727 = vadd.f32 %v721, %v725
    %v728 = vadd.f32 %v722, %v725
    %v729 = vsel %vm430, %v727, 0.0
    %730 = vadd.xlane.f32.xlu0 %v729
    %v731 = vpop.xlane.xlu0 %730
    %v732 = vsel %vm430, %v728, 0.0
    %733 = vadd.xlane.f32.xlu0 %v732
    %v734 = vpop.xlane.xlu0 %733
    %v735 = vmul.f32 %v731, %v443
    %v736 = vmul.f32 %v734, %v443
    %v737 = vmul.f32 %v727, %v727
    %v738 = vmul.f32 %v728, %v728
    %v739 = vsel %vm430, %v737, 0.0
    %740 = vadd.xlane.f32.xlu0 %v739
    %v741 = vpop.xlane.xlu0 %740
    %v742 = vsel %vm430, %v738, 0.0
    %743 = vadd.xlane.f32.xlu0 %v742
    %v744 = vpop.xlane.xlu0 %743
    %v745 = vmul.f32 %v741, %v443
    %v746 = vmul.f32 %v744, %v443
    %v747 = vmul.f32 %v735, %v735
    %v748 = vmul.f32 %v736, %v736
    %v749 = vsub.f32 %v745, %v747
    %v750 = vsub.f32 %v746, %v748
    %v751 = vmax.f32 %v749, 0.0
    %v752 = vmax.f32 %v750, 0.0
    %v753 = vsub.f32 %v727, %v735
    %v754 = vsub.f32 %v728, %v736
    %v755 = vadd.f32 %v751, 1e-05
    %v756 = vadd.f32 %v752, 1e-05
    %v757 = vrsqrt.pop %v755
    %v758 = vmul.f32 %v757, %v755
    %v759 = vmul.f32 %v758, %v757
    %v760 = vmul.f32 0.5, %v759
    %v761 = vsub.f32 1.5, %v760
    %v762 = vmul.f32 %v757, %v761
    %vm763 = vweird.f32 %v755
    %vm764 = vweird.f32 %v757
    %vm765 = vmor %vm763, %vm764
    %v766 = vsel %vm765, %v757, %v762
    %v767 = vrsqrt.pop %v756
    %v768 = vmul.f32 %v767, %v756
    %v769 = vmul.f32 %v768, %v767
    %v770 = vmul.f32 0.5, %v769
    %v771 = vsub.f32 1.5, %v770
    %v772 = vmul.f32 %v767, %v771
    %vm773 = vweird.f32 %v756
    %vm774 = vweird.f32 %v767
    %vm775 = vmor %vm773, %vm774
    %v776 = vsel %vm775, %v767, %v772
    %v777 = vmul.f32 %v753, %v766
    %v778 = vmul.f32 %v754, %v776
    %v779 = vld [vmem:[%s35] sm:$0x1]
    %v781 = vperm.slane %v779, 0
    %v783 = vmul.f32 %v777, %v781
    %v784 = vmul.f32 %v778, %v781
    %v785 = vld [vmem:[%s37] sm:$0x1]
    %v787 = vperm.slane %v785, 0
    %v789 = vadd.f32 %v783, %v787
    %v790 = vadd.f32 %v784, %v787
    %v791 = vmax.f32 %v789, 0.0
    %v792 = vmax.f32 %v790, 0.0
    %v793 = vld [vmem:[#allocation15] sm:$0xf]
    %v794 = vld [vmem:[#allocation15 + $0x4] sm:$0xf]
    %v795 = vld [vmem:[#allocation15 + $0x8] sm:$0xf]
    %v796 = vld [vmem:[#allocation15 + $0xc] sm:$0xf]
    %v797 = vpack.c.bf16 %v792, %v791
    %v798 = vld [vmem:[#allocation16] sm:$0x1]
    %v800 = vperm.slane %v798, 0
    %v806 = vunpack.c.l.b16 %v793
    %v807 = vunpack.c.l.b16 %v794
    %v808 = vunpack.c.l.b16 %v795
    %v809 = vunpack.c.l.b16 %v796
    %v810 = vpack.c.b16 %v807, %v806
    %v811 = vpack.c.b16 %v809, %v808
    %v815 = vsel %vm430, %v797, 0
    %817 = vmatpush.bf16.msra.mxu0 0
    %818 = vmatpush.bf16.msra.mxu0 0
    %819 = vmatpush.bf16.msra.mxu0 0
    %820 = vmatpush.bf16.msra.mxu0 0
    %821 = vmatpush.bf16.msra.mxu0 0
    %822 = vmatpush.bf16.msra.mxu0 0
    %823 = vmatpush.bf16.msra.mxu0 %v811
    %824 = vmatpush.bf16.msra.mxu0 %v810
    %825 = vmatmul.bf16.gmra.mxu0 %v815
    %v826 = vpop.f32.mrf.mxu0
    %v827 = vadd.f32 %v800, %v826
    %v828 = vpop.f32.mrf.mxu0
    %v829 = vadd.f32 %v800, %v828
    %830 = vdwg.mxu0
    %v831 = vsel %vm430, %v827, 0.0
    %832 = vadd.xlane.f32.xlu0 %v831
    %v833 = vpop.xlane.xlu0 %832
    %v834 = vsel %vm430, %v829, 0.0
    %835 = vadd.xlane.f32.xlu0 %v834
    %v836 = vpop.xlane.xlu0 %835
    %v837 = vmul.f32 %v833, %v443
    %v838 = vmul.f32 %v836, %v443
    %v839 = vmul.f32 %v827, %v827
    %v840 = vmul.f32 %v829, %v829
    %v841 = vsel %vm430, %v839, 0.0
    %842 = vadd.xlane.f32.xlu0 %v841
    %v843 = vpop.xlane.xlu0 %842
    %v844 = vsel %vm430, %v840, 0.0
    %845 = vadd.xlane.f32.xlu0 %v844
    %v846 = vpop.xlane.xlu0 %845
    %v847 = vmul.f32 %v843, %v443
    %v848 = vmul.f32 %v846, %v443
    %v849 = vmul.f32 %v837, %v837
    %v850 = vmul.f32 %v838, %v838
    %v851 = vsub.f32 %v847, %v849
    %v852 = vsub.f32 %v848, %v850
    %v853 = vmax.f32 %v851, 0.0
    %v854 = vmax.f32 %v852, 0.0
    %v855 = vsub.f32 %v827, %v837
    %v856 = vsub.f32 %v829, %v838
    %v857 = vadd.f32 %v853, 1e-05
    %v858 = vadd.f32 %v854, 1e-05
    %v859 = vrsqrt.pop %v857
    %v860 = vmul.f32 %v859, %v857
    %v861 = vmul.f32 %v860, %v859
    %v862 = vmul.f32 0.5, %v861
    %v863 = vsub.f32 1.5, %v862
    %v864 = vmul.f32 %v859, %v863
    %vm865 = vweird.f32 %v857
    %vm866 = vweird.f32 %v859
    %vm867 = vmor %vm865, %vm866
    %v868 = vsel %vm867, %v859, %v864
    %v869 = vrsqrt.pop %v858
    %v870 = vmul.f32 %v869, %v858
    %v871 = vmul.f32 %v870, %v869
    %v872 = vmul.f32 0.5, %v871
    %v873 = vsub.f32 1.5, %v872
    %v874 = vmul.f32 %v869, %v873
    %vm875 = vweird.f32 %v858
    %vm876 = vweird.f32 %v869
    %vm877 = vmor %vm875, %vm876
    %v878 = vsel %vm877, %v869, %v874
    %v879 = vmul.f32 %v855, %v868
    %v880 = vmul.f32 %v856, %v878
    %v881 = vld [vmem:[%s43] sm:$0x1]
    %v883 = vperm.slane %v881, 0
    %v885 = vmul.f32 %v879, %v883
    %v886 = vmul.f32 %v880, %v883
    %v887 = vld [vmem:[%s45] sm:$0x1]
    %v889 = vperm.slane %v887, 0
    %v891 = vadd.f32 %v885, %v889
    %v892 = vadd.f32 %v886, %v889
    %v893 = vmax.f32 %v891, 0.0
    %v894 = vmax.f32 %v892, 0.0
    %v895 = vld [vmem:[#allocation18] sm:$0xf]
    %v896 = vld [vmem:[#allocation18 + $0x4] sm:$0xf]
    %v897 = vld [vmem:[#allocation18 + $0x8] sm:$0xf]
    %v898 = vld [vmem:[#allocation18 + $0xc] sm:$0xf]
    %v899 = vpack.c.bf16 %v894, %v893
    %v900 = vld [vmem:[#allocation19] sm:$0x1]
    %v902 = vperm.slane %v900, 0
    %v908 = vunpack.c.l.b16 %v895
    %v909 = vunpack.c.l.b16 %v896
    %v910 = vunpack.c.l.b16 %v897
    %v911 = vunpack.c.l.b16 %v898
    %v912 = vpack.c.b16 %v909, %v908
    %v913 = vpack.c.b16 %v911, %v910
    %v917 = vsel %vm430, %v899, 0
    %919 = vmatpush.bf16.msra.mxu0 0
    %920 = vmatpush.bf16.msra.mxu0 0
    %921 = vmatpush.bf16.msra.mxu0 0
    %922 = vmatpush.bf16.msra.mxu0 0
    %923 = vmatpush.bf16.msra.mxu0 0
    %924 = vmatpush.bf16.msra.mxu0 0
    %925 = vmatpush.bf16.msra.mxu0 %v913
    %926 = vmatpush.bf16.msra.mxu0 %v912
    %927 = vmatmul.bf16.gmra.mxu0 %v917
    %v928 = vpop.f32.mrf.mxu0
    %v929 = vadd.f32 %v902, %v928
    %v930 = vpop.f32.mrf.mxu0
    %v931 = vadd.f32 %v902, %v930
    %932 = vdwg.mxu0
    %v933 = vsel %vm430, %v929, 0.0
    %934 = vadd.xlane.f32.xlu0 %v933
    %v935 = vpop.xlane.xlu0 %934
    %v936 = vsel %vm430, %v931, 0.0
    %937 = vadd.xlane.f32.xlu0 %v936
    %v938 = vpop.xlane.xlu0 %937
    %v939 = vmul.f32 %v935, %v443
    %v940 = vmul.f32 %v938, %v443
    %v941 = vmul.f32 %v929, %v929
    %v942 = vmul.f32 %v931, %v931
    %v943 = vsel %vm430, %v941, 0.0
    %944 = vadd.xlane.f32.xlu0 %v943
    %v945 = vpop.xlane.xlu0 %944
    %v946 = vsel %vm430, %v942, 0.0
    %947 = vadd.xlane.f32.xlu0 %v946
    %v948 = vpop.xlane.xlu0 %947
    %v949 = vmul.f32 %v945, %v443
    %v950 = vmul.f32 %v948, %v443
    %v951 = vmul.f32 %v939, %v939
    %v952 = vmul.f32 %v940, %v940
    %v953 = vsub.f32 %v949, %v951
    %v954 = vsub.f32 %v950, %v952
    %v955 = vmax.f32 %v953, 0.0
    %v956 = vmax.f32 %v954, 0.0
    %v957 = vsub.f32 %v929, %v939
    %v958 = vsub.f32 %v931, %v940
    %v959 = vadd.f32 %v955, 1e-05
    %v960 = vadd.f32 %v956, 1e-05
    %v961 = vrsqrt.pop %v959
    %v962 = vmul.f32 %v961, %v959
    %v963 = vmul.f32 %v962, %v961
    %v964 = vmul.f32 0.5, %v963
    %v965 = vsub.f32 1.5, %v964
    %v966 = vmul.f32 %v961, %v965
    %vm967 = vweird.f32 %v959
    %vm968 = vweird.f32 %v961
    %vm969 = vmor %vm967, %vm968
    %v970 = vsel %vm969, %v961, %v966
    %v971 = vrsqrt.pop %v960
    %v972 = vmul.f32 %v971, %v960
    %v973 = vmul.f32 %v972, %v971
    %v974 = vmul.f32 0.5, %v973
    %v975 = vsub.f32 1.5, %v974
    %v976 = vmul.f32 %v971, %v975
    %vm977 = vweird.f32 %v960
    %vm978 = vweird.f32 %v971
    %vm979 = vmor %vm977, %vm978
    %v980 = vsel %vm979, %v971, %v976
    %v981 = vmul.f32 %v957, %v970
    %v982 = vmul.f32 %v958, %v980
    %v983 = vld [vmem:[%s51] sm:$0x1]
    %v985 = vperm.slane %v983, 0
    %v987 = vmul.f32 %v981, %v985
    %v988 = vmul.f32 %v982, %v985
    %v989 = vld [vmem:[%s53] sm:$0x1]
    %v991 = vperm.slane %v989, 0
    %v993 = vadd.f32 %v987, %v991
    %v994 = vadd.f32 %v988, %v991
    %v995 = vmax.f32 %v993, 0.0
    %v996 = vmax.f32 %v994, 0.0
    %v997 = vld [vmem:[%s5] sm:$0xff]
    %v998 = vld [vmem:[%s5 + $0x8] sm:$0xff]
    %v999 = vld [vmem:[%s55] sm:$0xf]
    %v1000 = vld [vmem:[%s55 + $0x4] sm:$0xf]
    %v1001 = vpack.c.bf16 %v998, %v997
    %v1002 = vld [vmem:[#allocation21] sm:$0x1]
    %v1004 = vperm.slane %v1002, 0
    %v1008 = vunpack.c.l.b16 %v999
    %v1009 = vunpack.c.l.b16 %v1000
    %v1010 = vpack.c.b16 %v1009, %v1008
    %vm1012 = vcmask 130048
    %v1014 = vsel %vm1012, %v1001, 0
    %1016 = vmatpush.bf16.msra.mxu0 0
    %1017 = vmatpush.bf16.msra.mxu0 0
    %1018 = vmatpush.bf16.msra.mxu0 0
    %1019 = vmatpush.bf16.msra.mxu0 0
    %1020 = vmatpush.bf16.msra.mxu0 0
    %1021 = vmatpush.bf16.msra.mxu0 0
    %1022 = vmatpush.bf16.msra.mxu0 0
    %1023 = vmatpush.bf16.msra.mxu0 %v1010
    %1024 = vmatmul.bf16.gmra.mxu0 %v1014
    %v1025 = vpop.f32.mrf.mxu0
    %v1026 = vadd.f32 %v1004, %v1025
    %v1027 = vpop.f32.mrf.mxu0
    %v1028 = vadd.f32 %v1004, %v1027
    %1029 = vdwg.mxu0
    %v1030 = vsel %vm430, %v1026, 0.0
    %1031 = vadd.xlane.f32.xlu0 %v1030
    %v1032 = vpop.xlane.xlu0 %1031
    %v1033 = vsel %vm430, %v1028, 0.0
    %1034 = vadd.xlane.f32.xlu0 %v1033
    %v1035 = vpop.xlane.xlu0 %1034
    %v1036 = vmul.f32 %v1032, %v443
    %v1037 = vmul.f32 %v1035, %v443
    %v1038 = vmul.f32 %v1026, %v1026
    %v1039 = vmul.f32 %v1028, %v1028
    %v1040 = vsel %vm430, %v1038, 0.0
    %1041 = vadd.xlane.f32.xlu0 %v1040
    %v1042 = vpop.xlane.xlu0 %1041
    %v1043 = vsel %vm430, %v1039, 0.0
    %1044 = vadd.xlane.f32.xlu0 %v1043
    %v1045 = vpop.xlane.xlu0 %1044
    %v1046 = vmul.f32 %v1042, %v443
    %v1047 = vmul.f32 %v1045, %v443
    %v1048 = vmul.f32 %v1036, %v1036
    %v1049 = vmul.f32 %v1037, %v1037
    %v1050 = vsub.f32 %v1046, %v1048
    %v1051 = vsub.f32 %v1047, %v1049
    %v1052 = vmax.f32 %v1050, 0.0
    %v1053 = vmax.f32 %v1051, 0.0
    %v1054 = vsub.f32 %v1026, %v1036
    %v1055 = vsub.f32 %v1028, %v1037
    %v1056 = vadd.f32 %v1052, 1e-05
    %v1057 = vadd.f32 %v1053, 1e-05
    %v1058 = vrsqrt.pop %v1056
    %v1059 = vmul.f32 %v1058, %v1056
    %v1060 = vmul.f32 %v1059, %v1058
    %v1061 = vmul.f32 0.5, %v1060
    %v1062 = vsub.f32 1.5, %v1061
    %v1063 = vmul.f32 %v1058, %v1062
    %vm1064 = vweird.f32 %v1056
    %vm1065 = vweird.f32 %v1058
    %vm1066 = vmor %vm1064, %vm1065
    %v1067 = vsel %vm1066, %v1058, %v1063
    %v1068 = vrsqrt.pop %v1057
    %v1069 = vmul.f32 %v1068, %v1057
    %v1070 = vmul.f32 %v1069, %v1068
    %v1071 = vmul.f32 0.5, %v1070
    %v1072 = vsub.f32 1.5, %v1071
    %v1073 = vmul.f32 %v1068, %v1072
    %vm1074 = vweird.f32 %v1057
    %vm1075 = vweird.f32 %v1068
    %vm1076 = vmor %vm1074, %vm1075
    %v1077 = vsel %vm1076, %v1068, %v1073
    %v1078 = vmul.f32 %v1054, %v1067
    %v1079 = vmul.f32 %v1055, %v1077
    %v1080 = vld [vmem:[%s59] sm:$0x1]
    %v1082 = vperm.slane %v1080, 0
    %v1084 = vmul.f32 %v1078, %v1082
    %v1085 = vmul.f32 %v1079, %v1082
    %v1086 = vld [vmem:[%s61] sm:$0x1]
    %v1088 = vperm.slane %v1086, 0
    %v1090 = vadd.f32 %v1084, %v1088
    %v1091 = vadd.f32 %v1085, %v1088
    %v1092 = vmax.f32 %v1090, 0.0
    %v1093 = vmax.f32 %v1091, 0.0
    %v1094 = vld [vmem:[#allocation22] sm:$0xf]
    %v1095 = vld [vmem:[#allocation22 + $0x4] sm:$0xf]
    %v1096 = vld [vmem:[#allocation22 + $0x8] sm:$0xf]
    %v1097 = vld [vmem:[#allocation22 + $0xc] sm:$0xf]
    %v1098 = vpack.c.bf16 %v1093, %v1092
    %v1099 = vld [vmem:[#allocation24] sm:$0x1]
    %v1101 = vperm.slane %v1099, 0
    %v1107 = vunpack.c.l.b16 %v1094
    %v1108 = vunpack.c.l.b16 %v1095
    %v1109 = vunpack.c.l.b16 %v1096
    %v1110 = vunpack.c.l.b16 %v1097
    %v1111 = vpack.c.b16 %v1108, %v1107
    %v1112 = vpack.c.b16 %v1110, %v1109
    %v1116 = vsel %vm430, %v1098, 0
    %1118 = vmatpush.bf16.msra.mxu0 0
    %1119 = vmatpush.bf16.msra.mxu0 0
    %1120 = vmatpush.bf16.msra.mxu0 0
    %1121 = vmatpush.bf16.msra.mxu0 0
    %1122 = vmatpush.bf16.msra.mxu0 0
    %1123 = vmatpush.bf16.msra.mxu0 0
    %1124 = vmatpush.bf16.msra.mxu0 %v1112
    %1125 = vmatpush.bf16.msra.mxu0 %v1111
    %1126 = vmatmul.bf16.gmra.mxu0 %v1116
    %v1127 = vpop.f32.mrf.mxu0
    %v1128 = vadd.f32 %v1101, %v1127
    %v1129 = vpop.f32.mrf.mxu0
    %v1130 = vadd.f32 %v1101, %v1129
    %1131 = vdwg.mxu0
    %v1132 = vsel %vm430, %v1128, 0.0
    %1133 = vadd.xlane.f32.xlu0 %v1132
    %v1134 = vpop.xlane.xlu0 %1133
    %v1135 = vsel %vm430, %v1130, 0.0
    %1136 = vadd.xlane.f32.xlu0 %v1135
    %v1137 = vpop.xlane.xlu0 %1136
    %v1138 = vmul.f32 %v1134, %v443
    %v1139 = vmul.f32 %v1137, %v443
    %v1140 = vmul.f32 %v1128, %v1128
    %v1141 = vmul.f32 %v1130, %v1130
    %v1142 = vsel %vm430, %v1140, 0.0
    %1143 = vadd.xlane.f32.xlu0 %v1142
    %v1144 = vpop.xlane.xlu0 %1143
    %v1145 = vsel %vm430, %v1141, 0.0
    %1146 = vadd.xlane.f32.xlu0 %v1145
    %v1147 = vpop.xlane.xlu0 %1146
    %v1148 = vmul.f32 %v1144, %v443
    %v1149 = vmul.f32 %v1147, %v443
    %v1150 = vmul.f32 %v1138, %v1138
    %v1151 = vmul.f32 %v1139, %v1139
    %v1152 = vsub.f32 %v1148, %v1150
    %v1153 = vsub.f32 %v1149, %v1151
    %v1154 = vmax.f32 %v1152, 0.0
    %v1155 = vmax.f32 %v1153, 0.0
    %v1156 = vsub.f32 %v1128, %v1138
    %v1157 = vsub.f32 %v1130, %v1139
    %v1158 = vadd.f32 %v1154, 1e-05
    %v1159 = vadd.f32 %v1155, 1e-05
    %v1160 = vrsqrt.pop %v1158
    %v1161 = vmul.f32 %v1160, %v1158
    %v1162 = vmul.f32 %v1161, %v1160
    %v1163 = vmul.f32 0.5, %v1162
    %v1164 = vsub.f32 1.5, %v1163
    %v1165 = vmul.f32 %v1160, %v1164
    %vm1166 = vweird.f32 %v1158
    %vm1167 = vweird.f32 %v1160
    %vm1168 = vmor %vm1166, %vm1167
    %v1169 = vsel %vm1168, %v1160, %v1165
    %v1170 = vrsqrt.pop %v1159
    %v1171 = vmul.f32 %v1170, %v1159
    %v1172 = vmul.f32 %v1171, %v1170
    %v1173 = vmul.f32 0.5, %v1172
    %v1174 = vsub.f32 1.5, %v1173
    %v1175 = vmul.f32 %v1170, %v1174
    %vm1176 = vweird.f32 %v1159
    %vm1177 = vweird.f32 %v1170
    %vm1178 = vmor %vm1176, %vm1177
    %v1179 = vsel %vm1178, %v1170, %v1175
    %v1180 = vmul.f32 %v1156, %v1169
    %v1181 = vmul.f32 %v1157, %v1179
    %v1182 = vld [vmem:[%s67] sm:$0x1]
    %v1184 = vperm.slane %v1182, 0
    %v1186 = vmul.f32 %v1180, %v1184
    %v1187 = vmul.f32 %v1181, %v1184
    %v1188 = vld [vmem:[%s69] sm:$0x1]
    %v1190 = vperm.slane %v1188, 0
    %v1192 = vadd.f32 %v1186, %v1190
    %v1193 = vadd.f32 %v1187, %v1190
    %v1194 = vmax.f32 %v1192, 0.0
    %v1195 = vmax.f32 %v1193, 0.0
    %v1196 = vld [vmem:[%s71] sm:$0xf]
    %v1197 = vld [vmem:[%s71 + $0x4] sm:$0xf]
    %v1198 = vld [vmem:[%s71 + $0x8] sm:$0xf]
    %v1199 = vld [vmem:[%s71 + $0xc] sm:$0xf]
    %v1200 = vpack.c.bf16 %v1195, %v1194
    %v1201 = vld [vmem:[%s73] sm:$0x1]
    %v1203 = vperm.slane %v1201, 0
    %v1209 = vunpack.c.l.b16 %v1196
    %v1210 = vunpack.c.l.b16 %v1197
    %v1211 = vunpack.c.l.b16 %v1198
    %v1212 = vunpack.c.l.b16 %v1199
    %v1213 = vpack.c.b16 %v1210, %v1209
    %v1214 = vpack.c.b16 %v1212, %v1211
    %v1218 = vsel %vm430, %v1200, 0
    %1220 = vmatpush.bf16.msra.mxu0 0
    %1221 = vmatpush.bf16.msra.mxu0 0
    %1222 = vmatpush.bf16.msra.mxu0 0
    %1223 = vmatpush.bf16.msra.mxu0 0
    %1224 = vmatpush.bf16.msra.mxu0 0
    %1225 = vmatpush.bf16.msra.mxu0 0
    %1226 = vmatpush.bf16.msra.mxu0 %v1214
    %1227 = vmatpush.bf16.msra.mxu0 %v1213
    %1228 = vmatmul.bf16.gmra.mxu0 %v1218
    %v1229 = vpop.f32.mrf.mxu0
    %v1230 = vadd.f32 %v1203, %v1229
    %v1231 = vpop.f32.mrf.mxu0
    %v1232 = vadd.f32 %v1203, %v1231
    %1233 = vdwg.mxu0
    %v1234 = vsel %vm430, %v1230, 0.0
    %1235 = vadd.xlane.f32.xlu0 %v1234
    %v1236 = vpop.xlane.xlu0 %1235
    %v1237 = vsel %vm430, %v1232, 0.0
    %1238 = vadd.xlane.f32.xlu0 %v1237
    %v1239 = vpop.xlane.xlu0 %1238
    %v1240 = vmul.f32 %v1236, %v443
    %v1241 = vmul.f32 %v1239, %v443
    %v1242 = vmul.f32 %v1230, %v1230
    %v1243 = vmul.f32 %v1232, %v1232
    %v1244 = vsel %vm430, %v1242, 0.0
    %1245 = vadd.xlane.f32.xlu0 %v1244
    %v1246 = vpop.xlane.xlu0 %1245
    %v1247 = vsel %vm430, %v1243, 0.0
    %1248 = vadd.xlane.f32.xlu0 %v1247
    %v1249 = vpop.xlane.xlu0 %1248
    %v1250 = vmul.f32 %v1246, %v443
    %v1251 = vmul.f32 %v1249, %v443
    %v1252 = vmul.f32 %v1240, %v1240
    %v1253 = vmul.f32 %v1241, %v1241
    %v1254 = vsub.f32 %v1250, %v1252
    %v1255 = vsub.f32 %v1251, %v1253
    %v1256 = vmax.f32 %v1254, 0.0
    %v1257 = vmax.f32 %v1255, 0.0
    %v1258 = vsub.f32 %v1230, %v1240
    %v1259 = vsub.f32 %v1232, %v1241
    %v1260 = vadd.f32 %v1256, 1e-05
    %v1261 = vadd.f32 %v1257, 1e-05
    %v1262 = vrsqrt.pop %v1260
    %v1263 = vmul.f32 %v1262, %v1260
    %v1264 = vmul.f32 %v1263, %v1262
    %v1265 = vmul.f32 0.5, %v1264
    %v1266 = vsub.f32 1.5, %v1265
    %v1267 = vmul.f32 %v1262, %v1266
    %vm1268 = vweird.f32 %v1260
    %vm1269 = vweird.f32 %v1262
    %vm1270 = vmor %vm1268, %vm1269
    %v1271 = vsel %vm1270, %v1262, %v1267
    %v1272 = vrsqrt.pop %v1261
    %v1273 = vmul.f32 %v1272, %v1261
    %v1274 = vmul.f32 %v1273, %v1272
    %v1275 = vmul.f32 0.5, %v1274
    %v1276 = vsub.f32 1.5, %v1275
    %v1277 = vmul.f32 %v1272, %v1276
    %vm1278 = vweird.f32 %v1261
    %vm1279 = vweird.f32 %v1272
    %vm1280 = vmor %vm1278, %vm1279
    %v1281 = vsel %vm1280, %v1272, %v1277
    %v1282 = vmul.f32 %v1258, %v1271
    %v1283 = vmul.f32 %v1259, %v1281
    %v1284 = vld [vmem:[%s75] sm:$0x1]
    %v1286 = vperm.slane %v1284, 0
    %v1288 = vmul.f32 %v1282, %v1286
    %v1289 = vmul.f32 %v1283, %v1286
    %v1290 = vld [vmem:[%s77] sm:$0x1]
    %v1292 = vperm.slane %v1290, 0
    %v1294 = vadd.f32 %v1288, %v1292
    %v1295 = vadd.f32 %v1289, %v1292
    %v1296 = vmax.f32 %v1294, 0.0
    %v1297 = vmax.f32 %v1295, 0.0
    %v1298 = vpack.c.bf16 %v704, %v704
    %v1299 = vpack.c.bf16 %v705, %v705
    %v1300 = vpack.c.bf16 %v995, %v995
    %v1301 = vpack.c.bf16 %v996, %v996
    %v1302 = vpack.c.bf16 %v1297, %v1296
    %vm1303 = vcmask 257024
    %1304 = vst.msk [vmem:[%s89] sm:$0xf] %vm1303, %v1298
    %1305 = vst.msk [vmem:[%s89 + $0x4] sm:$0xf] %vm1303, %v1299
    %s1306 = scalar_lea.vmem %s89, 8
    %1307 = vst.msk [vmem:[%s1306] sm:$0xf] %vm1303, %v1300
    %1308 = vst.msk [vmem:[%s1306 + $0x4] sm:$0xf] %vm1303, %v1301
    %v1309 = vld [vmem:[%s81] sm:$0x1]
    %v1310 = vld [vmem:[#allocation25] sm:$0xf]
    %v1311 = vld [vmem:[#allocation25 + $0x4] sm:$0xf]
    %v1312 = vld [vmem:[#allocation25 + $0x8] sm:$0xf]
    %v1313 = vld [vmem:[#allocation25 + $0xc] sm:$0xf]
    %v1316 = vunpack.c.l.b16 %v1298
    %v1317 = vunpack.c.l.b16 %v1299
    %v1318 = vpack.c.b16 %v1317, %v1316
    %v1323 = vunpack.c.l.b16 %v1310
    %v1324 = vunpack.c.l.b16 %v1311
    %v1325 = vunpack.c.l.b16 %v1312
    %v1326 = vunpack.c.l.b16 %v1313
    %v1327 = vpack.c.b16 %v1324, %v1323
    %v1328 = vpack.c.b16 %v1326, %v1325
    %v1332 = vsel %vm430, %v1318, 0
    %1334 = vmatpush.bf16.msra.mxu0 0
    %1335 = vmatpush.bf16.msra.mxu0 0
    %1336 = vmatpush.bf16.msra.mxu0 0
    %1337 = vmatpush.bf16.msra.mxu0 0
    %1338 = vmatpush.bf16.msra.mxu0 0
    %1339 = vmatpush.bf16.msra.mxu0 0
    %1340 = vmatpush.bf16.msra.mxu0 %v1328
    %1341 = vmatpush.bf16.msra.mxu0 %v1327
    %1342 = vmatmul.bf16.gmra.mxu0 %v1332
    %v1343 = vpop.f32.mrf.mxu0
    %v1344 = vadd.f32 0.0, %v1343
    %v1345 = vpop.f32.mrf.mxu0
    %v1346 = vadd.f32 0.0, %v1345
    %1347 = vdwg.mxu0
    %v1349 = vperm.slane %v1309, 0
    %v1351 = vadd.f32 %v1349, %v1344
    %v1352 = vadd.f32 %v1349, %v1346
    %s1353 = scalar_lea.vmem [#allocation25], 16
    %v1354 = vld [vmem:[%s1353] sm:$0xf]
    %v1355 = vld [vmem:[%s1353 + $0x4] sm:$0xf]
    %v1356 = vld [vmem:[%s1353 + $0x8] sm:$0xf]
    %v1357 = vld [vmem:[%s1353 + $0xc] sm:$0xf]
    %v1360 = vunpack.c.l.b16 %v1300
    %v1361 = vunpack.c.l.b16 %v1301
    %v1362 = vpack.c.b16 %v1361, %v1360
    %v1367 = vunpack.c.l.b16 %v1354
    %v1368 = vunpack.c.l.b16 %v1355
    %v1369 = vunpack.c.l.b16 %v1356
    %v1370 = vunpack.c.l.b16 %v1357
    %v1371 = vpack.c.b16 %v1368, %v1367
    %v1372 = vpack.c.b16 %v1370, %v1369
    %v1376 = vsel %vm430, %v1362, 0
    %1378 = vmatpush.bf16.msra.mxu0 0
    %1379 = vmatpush.bf16.msra.mxu0 0
    %1380 = vmatpush.bf16.msra.mxu0 0
    %1381 = vmatpush.bf16.msra.mxu0 0
    %1382 = vmatpush.bf16.msra.mxu0 0
    %1383 = vmatpush.bf16.msra.mxu0 0
    %1384 = vmatpush.bf16.msra.mxu0 %v1372
    %1385 = vmatpush.bf16.msra.mxu0 %v1371
    %1386 = vmatmul.bf16.gmra.mxu0 %v1376
    %v1387 = vpop.f32.mrf.mxu0
    %v1388 = vadd.f32 0.0, %v1387
    %v1389 = vpop.f32.mrf.mxu0
    %v1390 = vadd.f32 0.0, %v1389
    %1391 = vdwg.mxu0
    %v1392 = vadd.f32 %v1351, %v1388
    %v1393 = vadd.f32 %v1352, %v1390
    %s1394 = scalar_lea.vmem [#allocation25], 32
    %v1395 = vld [vmem:[%s1394] sm:$0xf]
    %v1396 = vld [vmem:[%s1394 + $0x4] sm:$0xf]
    %v1397 = vld [vmem:[%s1394 + $0x8] sm:$0xf]
    %v1398 = vld [vmem:[%s1394 + $0xc] sm:$0xf]
    %v1403 = vunpack.c.l.b16 %v1395
    %v1404 = vunpack.c.l.b16 %v1396
    %v1405 = vunpack.c.l.b16 %v1397
    %v1406 = vunpack.c.l.b16 %v1398
    %v1407 = vpack.c.b16 %v1404, %v1403
    %v1408 = vpack.c.b16 %v1406, %v1405
    %v1412 = vsel %vm430, %v1302, 0
    %1414 = vmatpush.bf16.msra.mxu0 0
    %1415 = vmatpush.bf16.msra.mxu0 0
    %1416 = vmatpush.bf16.msra.mxu0 0
    %1417 = vmatpush.bf16.msra.mxu0 0
    %1418 = vmatpush.bf16.msra.mxu0 0
    %1419 = vmatpush.bf16.msra.mxu0 0
    %1420 = vmatpush.bf16.msra.mxu0 %v1408
    %1421 = vmatpush.bf16.msra.mxu0 %v1407
    %1422 = vmatmul.bf16.gmra.mxu0 %v1412
    %v1423 = vpop.f32.mrf.mxu0
    %v1424 = vadd.f32 0.0, %v1423
    %v1425 = vpop.f32.mrf.mxu0
    %v1426 = vadd.f32 0.0, %v1425
    %1427 = vdwg.mxu0
    %v1428 = vadd.f32 %v1392, %v1424
    %v1429 = vadd.f32 %v1393, %v1426
    %1430 = vst.msk [vmem:[%s83] sm:$0xff] %vm430, %v1428
    %1431 = vst.msk [vmem:[%s83 + $0x8] sm:$0xff] %vm430, %v1429
    %s1432 = scalar_lea.vmem %s81, 1
    %v1433 = vld [vmem:[%s1432] sm:$0x1]
    %s1434 = scalar_lea.vmem [#allocation25], 48
    %v1435 = vld [vmem:[%s1434] sm:$0xf]
    %v1436 = vld [vmem:[%s1434 + $0x4] sm:$0xf]
    %v1437 = vld [vmem:[%s1434 + $0x8] sm:$0xf]
    %v1438 = vld [vmem:[%s1434 + $0xc] sm:$0xf]
    %v1443 = vunpack.c.l.b16 %v1435
    %v1444 = vunpack.c.l.b16 %v1436
    %v1445 = vunpack.c.l.b16 %v1437
    %v1446 = vunpack.c.l.b16 %v1438
    %v1447 = vpack.c.b16 %v1444, %v1443
    %v1448 = vpack.c.b16 %v1446, %v1445
    %1451 = vmatpush.bf16.msra.mxu0 0
    %1452 = vmatpush.bf16.msra.mxu0 0
    %1453 = vmatpush.bf16.msra.mxu0 0
    %1454 = vmatpush.bf16.msra.mxu0 0
    %1455 = vmatpush.bf16.msra.mxu0 0
    %1456 = vmatpush.bf16.msra.mxu0 0
    %1457 = vmatpush.bf16.msra.mxu0 %v1448
    %1458 = vmatpush.bf16.msra.mxu0 %v1447
    %1459 = vmatmul.bf16.gmra.mxu0 %v1332
    %v1460 = vpop.f32.mrf.mxu0
    %v1461 = vadd.f32 0.0, %v1460
    %v1462 = vpop.f32.mrf.mxu0
    %v1463 = vadd.f32 0.0, %v1462
    %1464 = vdwg.mxu0
    %v1466 = vperm.slane %v1433, 0
    %v1468 = vadd.f32 %v1466, %v1461
    %v1469 = vadd.f32 %v1466, %v1463
    %s1470 = scalar_lea.vmem [#allocation25], 64
    %v1471 = vld [vmem:[%s1470] sm:$0xf]
    %v1472 = vld [vmem:[%s1470 + $0x4] sm:$0xf]
    %v1473 = vld [vmem:[%s1470 + $0x8] sm:$0xf]
    %v1474 = vld [vmem:[%s1470 + $0xc] sm:$0xf]
    %v1479 = vunpack.c.l.b16 %v1471
    %v1480 = vunpack.c.l.b16 %v1472
    %v1481 = vunpack.c.l.b16 %v1473
    %v1482 = vunpack.c.l.b16 %v1474
    %v1483 = vpack.c.b16 %v1480, %v1479
    %v1484 = vpack.c.b16 %v1482, %v1481
    %1487 = vmatpush.bf16.msra.mxu0 0
    %1488 = vmatpush.bf16.msra.mxu0 0
    %1489 = vmatpush.bf16.msra.mxu0 0
    %1490 = vmatpush.bf16.msra.mxu0 0
    %1491 = vmatpush.bf16.msra.mxu0 0
    %1492 = vmatpush.bf16.msra.mxu0 0
    %1493 = vmatpush.bf16.msra.mxu0 %v1484
    %1494 = vmatpush.bf16.msra.mxu0 %v1483
    %1495 = vmatmul.bf16.gmra.mxu0 %v1376
    %v1496 = vpop.f32.mrf.mxu0
    %v1497 = vadd.f32 0.0, %v1496
    %v1498 = vpop.f32.mrf.mxu0
    %v1499 = vadd.f32 0.0, %v1498
    %1500 = vdwg.mxu0
    %v1501 = vadd.f32 %v1468, %v1497
    %v1502 = vadd.f32 %v1469, %v1499
    %s1503 = scalar_lea.vmem [#allocation25], 80
    %v1504 = vld [vmem:[%s1503] sm:$0xf]
    %v1505 = vld [vmem:[%s1503 + $0x4] sm:$0xf]
    %v1506 = vld [vmem:[%s1503 + $0x8] sm:$0xf]
    %v1507 = vld [vmem:[%s1503 + $0xc] sm:$0xf]
    %v1512 = vunpack.c.l.b16 %v1504
    %v1513 = vunpack.c.l.b16 %v1505
    %v1514 = vunpack.c.l.b16 %v1506
    %v1515 = vunpack.c.l.b16 %v1507
    %v1516 = vpack.c.b16 %v1513, %v1512
    %v1517 = vpack.c.b16 %v1515, %v1514
    %1520 = vmatpush.bf16.msra.mxu0 0
    %1521 = vmatpush.bf16.msra.mxu0 0
    %1522 = vmatpush.bf16.msra.mxu0 0
    %1523 = vmatpush.bf16.msra.mxu0 0
    %1524 = vmatpush.bf16.msra.mxu0 0
    %1525 = vmatpush.bf16.msra.mxu0 0
    %1526 = vmatpush.bf16.msra.mxu0 %v1517
    %1527 = vmatpush.bf16.msra.mxu0 %v1516
    %1528 = vmatmul.bf16.gmra.mxu0 %v1412
    %v1529 = vpop.f32.mrf.mxu0
    %v1530 = vadd.f32 0.0, %v1529
    %v1531 = vpop.f32.mrf.mxu0
    %v1532 = vadd.f32 0.0, %v1531
    %1533 = vdwg.mxu0
    %v1534 = vadd.f32 %v1501, %v1530
    %v1535 = vadd.f32 %v1502, %v1532
    %1536 = vst.msk [vmem:[%s85] sm:$0xff] %vm430, %v1534
    %1537 = vst.msk [vmem:[%s85 + $0x8] sm:$0xff] %vm430, %v1535
    %s1538 = scalar_lea.vmem %s81, 2
    %v1539 = vld [vmem:[%s1538] sm:$0x1]
    %s1540 = scalar_lea.vmem [#allocation25], 96
    %v1541 = vld [vmem:[%s1540] sm:$0xf]
    %v1542 = vld [vmem:[%s1540 + $0x4] sm:$0xf]
    %v1543 = vld [vmem:[%s1540 + $0x8] sm:$0xf]
    %v1544 = vld [vmem:[%s1540 + $0xc] sm:$0xf]
    %v1549 = vunpack.c.l.b16 %v1541
    %v1550 = vunpack.c.l.b16 %v1542
    %v1551 = vunpack.c.l.b16 %v1543
    %v1552 = vunpack.c.l.b16 %v1544
    %v1553 = vpack.c.b16 %v1550, %v1549
    %v1554 = vpack.c.b16 %v1552, %v1551
    %1557 = vmatpush.bf16.msra.mxu0 0
    %1558 = vmatpush.bf16.msra.mxu0 0
    %1559 = vmatpush.bf16.msra.mxu0 0
    %1560 = vmatpush.bf16.msra.mxu0 0
    %1561 = vmatpush.bf16.msra.mxu0 0
    %1562 = vmatpush.bf16.msra.mxu0 0
    %1563 = vmatpush.bf16.msra.mxu0 %v1554
    %1564 = vmatpush.bf16.msra.mxu0 %v1553
    %1565 = vmatmul.bf16.gmra.mxu0 %v1332
    %v1566 = vpop.f32.mrf.mxu0
    %v1567 = vadd.f32 0.0, %v1566
    %v1568 = vpop.f32.mrf.mxu0
    %v1569 = vadd.f32 0.0, %v1568
    %1570 = vdwg.mxu0
    %v1572 = vperm.slane %v1539, 0
    %v1574 = vadd.f32 %v1572, %v1567
    %v1575 = vadd.f32 %v1572, %v1569
    %s1576 = scalar_lea.vmem [#allocation25], 112
    %v1577 = vld [vmem:[%s1576] sm:$0xf]
    %v1578 = vld [vmem:[%s1576 + $0x4] sm:$0xf]
    %v1579 = vld [vmem:[%s1576 + $0x8] sm:$0xf]
    %v1580 = vld [vmem:[%s1576 + $0xc] sm:$0xf]
    %v1585 = vunpack.c.l.b16 %v1577
    %v1586 = vunpack.c.l.b16 %v1578
    %v1587 = vunpack.c.l.b16 %v1579
    %v1588 = vunpack.c.l.b16 %v1580
    %v1589 = vpack.c.b16 %v1586, %v1585
    %v1590 = vpack.c.b16 %v1588, %v1587
    %1593 = vmatpush.bf16.msra.mxu0 0
    %1594 = vmatpush.bf16.msra.mxu0 0
    %1595 = vmatpush.bf16.msra.mxu0 0
    %1596 = vmatpush.bf16.msra.mxu0 0
    %1597 = vmatpush.bf16.msra.mxu0 0
    %1598 = vmatpush.bf16.msra.mxu0 0
    %1599 = vmatpush.bf16.msra.mxu0 %v1590
    %1600 = vmatpush.bf16.msra.mxu0 %v1589
    %1601 = vmatmul.bf16.gmra.mxu0 %v1376
    %v1602 = vpop.f32.mrf.mxu0
    %v1603 = vadd.f32 0.0, %v1602
    %v1604 = vpop.f32.mrf.mxu0
    %v1605 = vadd.f32 0.0, %v1604
    %1606 = vdwg.mxu0
    %v1607 = vadd.f32 %v1574, %v1603
    %v1608 = vadd.f32 %v1575, %v1605
    %s1609 = scalar_lea.vmem [#allocation25], 128
    %v1610 = vld [vmem:[%s1609] sm:$0xf]
    %v1611 = vld [vmem:[%s1609 + $0x4] sm:$0xf]
    %v1612 = vld [vmem:[%s1609 + $0x8] sm:$0xf]
    %v1613 = vld [vmem:[%s1609 + $0xc] sm:$0xf]
    %v1618 = vunpack.c.l.b16 %v1610
    %v1619 = vunpack.c.l.b16 %v1611
    %v1620 = vunpack.c.l.b16 %v1612
    %v1621 = vunpack.c.l.b16 %v1613
    %v1622 = vpack.c.b16 %v1619, %v1618
    %v1623 = vpack.c.b16 %v1621, %v1620
    %1626 = vmatpush.bf16.msra.mxu0 0
    %1627 = vmatpush.bf16.msra.mxu0 0
    %1628 = vmatpush.bf16.msra.mxu0 0
    %1629 = vmatpush.bf16.msra.mxu0 0
    %1630 = vmatpush.bf16.msra.mxu0 0
    %1631 = vmatpush.bf16.msra.mxu0 0
    %1632 = vmatpush.bf16.msra.mxu0 %v1623
    %1633 = vmatpush.bf16.msra.mxu0 %v1622
    %1634 = vmatmul.bf16.gmra.mxu0 %v1412
    %v1635 = vpop.f32.mrf.mxu0
    %v1636 = vadd.f32 0.0, %v1635
    %v1637 = vpop.f32.mrf.mxu0
    %v1638 = vadd.f32 0.0, %v1637
    %1639 = vdwg.mxu0
    %v1640 = vadd.f32 %v1607, %v1636
    %v1641 = vadd.f32 %v1608, %v1638
    %1642 = vst.msk [vmem:[%s87] sm:$0xff] %vm430, %v1640
    %1643 = vst.msk [vmem:[%s87 + $0x8] sm:$0xff] %vm430, %v1641
    // Predicated region
    $region230: #{ddsp_decoder_forward.3} parent=1 // pred_check
      _
    $region231: #{ddsp_decoder_forward.3} parent=1 // pred_check_branch
      %1645 = sbr.rel (0) target = $region233
    $region232: #{ddsp_decoder_forward.3} parent=1 // pred_region
      _
    $region233: #{ddsp_decoder_forward.3} parent=1 // pred_fallthru
      _
    // Predicated region
    $region234: #{ddsp_decoder_forward.3} parent=1 // pred_check
      _
    $region235: #{ddsp_decoder_forward.3} parent=1 // pred_check_branch
      %1647 = sbr.rel (0) target = $region237
    $region236: #{ddsp_decoder_forward.3} parent=1 // pred_region
      _
    $region237: #{ddsp_decoder_forward.3} parent=1 // pred_fallthru
      _
    // Predicated region
    $region238: #{ddsp_decoder_forward.3} parent=1 // pred_check
      _
    $region239: #{ddsp_decoder_forward.3} parent=1 // pred_check_branch
      %1649 = sbr.rel (0) target = $region241
    $region240: #{ddsp_decoder_forward.3} parent=1 // pred_region
      _
    $region241: #{ddsp_decoder_forward.3} parent=1 // pred_fallthru
      _
    // Predicated region
    $region242: #{ddsp_decoder_forward.3} parent=1 // pred_check
      _
    $region243: #{ddsp_decoder_forward.3} parent=1 // pred_check_branch
      %1651 = sbr.rel (0) target = $region245
    $region244: #{ddsp_decoder_forward.3} parent=1 // pred_region
      _
    $region245: #{ddsp_decoder_forward.3} parent=1 // pred_fallthru
      _
    // Predicated region
    $region246: #{ddsp_decoder_forward.3} parent=1 // pred_check
      _
    $region247: #{ddsp_decoder_forward.3} parent=1 // pred_check_branch
      %1653 = sbr.rel (0) target = $region249
    $region248: #{ddsp_decoder_forward.3} parent=1 // pred_region
      _
    $region249: #{ddsp_decoder_forward.3} parent=1 // pred_fallthru
      _
    // Predicated region
    $region250: #{ddsp_decoder_forward.3} parent=1 // pred_check
      _
    $region251: #{ddsp_decoder_forward.3} parent=1 // pred_check_branch
      %1655 = sbr.rel (0) target = $region253
    $region252: #{ddsp_decoder_forward.3} parent=1 // pred_region
      _
    $region253: #{ddsp_decoder_forward.3} parent=1 // pred_fallthru
      _
    // Predicated region
    $region254: #{ddsp_decoder_forward.3} parent=1 // pred_check
      _
    $region255: #{ddsp_decoder_forward.3} parent=1 // pred_check_branch
      %1657 = sbr.rel (0) target = $region257
    $region256: #{ddsp_decoder_forward.3} parent=1 // pred_region
      _
    $region257: #{ddsp_decoder_forward.3} parent=1 // pred_fallthru
      _
    // Predicated region
    $region258: #{ddsp_decoder_forward.3} parent=1 // pred_check
      _
    $region259: #{ddsp_decoder_forward.3} parent=1 // pred_check_branch
      %1659 = sbr.rel (0) target = $region261
    $region260: #{ddsp_decoder_forward.3} parent=1 // pred_region
      _
    $region261: #{ddsp_decoder_forward.3} parent=1 // pred_fallthru
      _
    %1660 = vsyncpa [#allocation3], 1
    %1661 = vsyncpa [#allocation5], 1
    %1662 = vsyncpa [#allocation8], 1
    %1663 = vsyncpa [#allocation11], 1
    %1664 = vsyncpa [#allocation14], 1
    %1665 = vsyncpa [#allocation17], 1
    %1666 = vsyncpa [#allocation20], 1
    %1667 = vsyncpa [#allocation23], 1
    %1668 = vsyncpa [#allocation26], 1

</llo_original>
